<compile_context>
chip_gen: v7x
topology: tpu7x:2x2x1
jax: 0.10.0
libtpu: 0.0.40
codegen_flags: <defaults>
</compile_context>

<pallas_src>
import jax
import jax.numpy as jnp
from jax.experimental import pallas as pl
from jax.experimental.pallas import tpu as pltpu


_VMEM_LIMIT = 32 * 1024 * 1024
_NEG_SLOPE = 0.2


# ----------------------------------------------------------------------------
# Fused Pallas kernel (whole discriminator, one image per grid step)
# ----------------------------------------------------------------------------
def _disc_kernel(x_ref, *refs):
    """Whole-discriminator forward for one image.

    x_ref        : (1, H, Cin*W)        bf16  input, row-major (h, (c, w))
    per layer L  : s_ref (4, HoL, HiL)  bf16  stride-2/pad-1 row selectors
                   b_ref (4, CiL*WiL, CoL*WoL) bf16 banded conv(+BN) operator
                   c_ref (1, CoL*WoL)   f32   folded BN bias row
    b5_ref       : (4, C4*4)            f32   final 4x4 valid-conv weights
    o_ref        : (1, 1, 1)            f32   sigmoid(logit)
    """
    o_ref = refs[-1]
    b5_ref = refs[-2]
    layer_refs = refs[:-2]

    h_bf16 = x_ref[0]                                   # (H, Cin*W) bf16
    h_f32 = None
    for li in range(len(layer_refs) // 3):
        s_ref = layer_refs[3 * li + 0]
        b_ref = layer_refs[3 * li + 1]
        c_ref = layer_refs[3 * li + 2]
        acc = None
        for kh in range(4):
            # Exact 0/1 row gather (stride 2, pad 1, OOB rows -> zero).
            rows = jnp.dot(s_ref[kh], h_bf16,
                           preferred_element_type=jnp.float32)
            part = jnp.dot(rows.astype(jnp.bfloat16), b_ref[kh],
                           preferred_element_type=jnp.float32)
            acc = part if acc is None else acc + part
        y = acc + c_ref[...]                            # f32 epilogue
        h_f32 = jnp.where(y >= 0.0, y, _NEG_SLOPE * y)  # LeakyReLU(0.2)
        h_bf16 = h_f32.astype(jnp.bfloat16)

    # Final 4x4 valid conv (single output position) + EXACT sigmoid.
    prod = h_f32 * b5_ref[...]                          # (4, C4*4) f32
    logit = jnp.sum(jnp.sum(prod, axis=1, keepdims=True),
                    axis=0, keepdims=True)              # (1, 1)
    o_ref[0] = 1.0 / (1.0 + jnp.exp(-logit))


# ----------------------------------------------------------------------------
# Forward pass wrapper (single pallas_call)
# ----------------------------------------------------------------------------
@jax.jit
def discriminator_forward(x_nchw, kparams):
    n, cin, hgt, wid = x_nchw.shape
    assert hgt == 64 and wid == 64, "tail assumes a 64x64 input (4x4 final map)"
    # Row-major (h, (c, w)) layout: one cheap input-sized XLA transpose.
    xr = x_nchw.transpose(0, 2, 1, 3).reshape(n, hgt, cin * wid)
    xr = xr.astype(jnp.bfloat16)

    operands = [xr]
    in_specs = [pl.BlockSpec((1, hgt, cin * wid), lambda b: (b, 0, 0))]
    for lp in kparams["layers"]:
        sel, band, brow = lp["S"], lp["B"], lp["bias"]
        operands += [sel, band, brow]
        in_specs += [
            pl.BlockSpec(sel.shape, lambda b: (0, 0, 0)),
            pl.BlockSpec(band.shape, lambda b: (0, 0, 0)),
            pl.BlockSpec(brow.shape, lambda b: (0, 0)),
        ]
    b5 = kparams["B5"]
    operands.append(b5)
    in_specs.append(pl.BlockSpec(b5.shape, lambda b: (0, 0)))

    out = pl.pallas_call(
        _disc_kernel,
        out_shape=jax.ShapeDtypeStruct((n, 1, 1), jnp.float32),
        grid=(n,),
        in_specs=in_specs,
        out_specs=pl.BlockSpec((1, 1, 1), lambda b: (b, 0, 0)),
        compiler_params=pltpu.CompilerParams(
            dimension_semantics=("parallel",),
            vmem_limit_bytes=_VMEM_LIMIT),
    )(*operands)
    return out.reshape(-1)                              # (N,)


# ----------------------------------------------------------------------------
# One-time parameter preparation (BN folding + banded GEMM operators)
# ----------------------------------------------------------------------------
def prepare_kernel_params(layers, spatial):
    """Pre-build (once) the per-layer GEMM operators used by the fused kernel.

    For each stride-2 conv layer:
      S    (4, Ho, Hi)        bf16  0/1 selectors: S[kh, i, r] = [r == 2i+kh-1]
      B    (4, Ci*Wi, Co*Wo)  bf16  B[kh, c*Wi+w, o*Wo+j]
                                      = scale[o] * W[o, c, kh, w-2j+1]
                                    (zero outside the 4-tap band; BN folded)
      bias (1, Co*Wo)         f32   folded BN bias repeated over columns
    plus B5 (4, C4*4) f32 for the final 4x4 valid conv.
    """
    assert spatial == 64, "tail assumes 64x64 input -> 4x4 final feature map"
    hi = wi = spatial
    prepared = []
    for lyr in layers[:4]:
        wt = lyr["w"]                                   # (Co, Ci, 4, 4)
        co, ci, k0, k1 = wt.shape
        assert k0 == 4 and k1 == 4
        assert hi % 2 == 0 and wi % 2 == 0
        ho, wo = hi // 2, wi // 2

        # Row selectors (stride-2, pad-1 gather along H).
        rr = jnp.arange(hi)[None, None, :]
        ii = jnp.arange(ho)[None, :, None]
        kk = jnp.arange(4)[:, None, None]
        sel = (rr == (2 * ii + kk - 1)).astype(jnp.bfloat16)    # (4, Ho, Hi)

        # Banded W-direction operator, BN scale folded in.
        wcol = jnp.arange(wi)[:, None]
        jcol = jnp.arange(wo)[None, :]
        kw = wcol - 2 * jcol + 1                                # (Wi, Wo)
        valid = (kw >= 0) & (kw < 4)
        kw_c = jnp.clip(kw, 0, 3)
        wt_s = wt * lyr["scale"][:, None, None, None]
        g = wt_s[:, :, :, kw_c]                                 # (Co,Ci,4,Wi,Wo)
        g = jnp.where(valid[None, None, None, :, :], g, 0.0)
        g = g.transpose(2, 1, 3, 0, 4)                          # (kh,Ci,Wi,Co,Wo)
        band = g.reshape(4, ci * wi, co * wo).astype(jnp.bfloat16)

        brow = jnp.repeat(lyr["bias"].astype(jnp.float32), wo)[None, :]
        prepared.append(dict(S=sel, B=band, bias=brow))
        hi, wi = ho, wo

    assert hi == 4 and wi == 4, "final feature map must be 4x4"
    # Final conv has bias=False and no BN by construction in the module.
    w5 = layers[4]["w"]                                         # (1, C4, 4, 4)
    c4 = w5.shape[1]
    b5 = jnp.transpose(w5[0], (1, 0, 2)).reshape(4, c4 * 4)
    return dict(layers=prepared, B5=b5.astype(jnp.float32))


# ----------------------------------------------------------------------------
# Deterministic parameter construction and a pure-JAX reference
# ----------------------------------------------------------------------------
def make_params(key, channels, hidden_dim):
    eps = 0.8
    dims = [(channels, hidden_dim, 2, 1, False, True, False),
            (hidden_dim, hidden_dim * 2, 2, 1, True, True, False),
            (hidden_dim * 2, hidden_dim * 4, 2, 1, True, True, False),
            (hidden_dim * 4, hidden_dim * 8, 2, 1, True, True, False),
            (hidden_dim * 8, 1, 1, 0, False, False, True)]
    layers = []
    for (cin, cout, stride, pad, has_bn, lrelu, sigmoid) in dims:
        key, kw_, kg, kb, km, kv = jax.random.split(key, 6)
        w = 0.05 * jax.random.normal(kw_, (cout, cin, 4, 4), jnp.float32)
        if has_bn:
            gamma = 1.0 + 0.1 * jax.random.normal(kg, (cout,), jnp.float32)
            beta = 0.1 * jax.random.normal(kb, (cout,), jnp.float32)
            rmean = 0.1 * jax.random.normal(km, (cout,), jnp.float32)
            rvar = 0.5 + jnp.abs(jax.random.normal(kv, (cout,), jnp.float32))
            scale = gamma / jnp.sqrt(rvar + eps)
            bias = beta - rmean * scale
        else:
            scale = jnp.ones((cout,), jnp.float32)
            bias = jnp.zeros((cout,), jnp.float32)
        layers.append(dict(w=w, scale=scale, bias=bias, stride=stride,
                           pad=pad, lrelu=lrelu, sigmoid=sigmoid))
    return layers


def reference_forward(x_nchw, layers):
    """Pure-JAX (lax.conv, f32) reference for the correctness check."""
    y = x_nchw
    for lyr in layers:
        y = jax.lax.conv_general_dilated(
            y, lyr["w"], (lyr["stride"], lyr["stride"]),
            [(lyr["pad"], lyr["pad"])] * 2,
            dimension_numbers=("NCHW", "OIHW", "NCHW"))
        y = y * lyr["scale"].reshape(1, -1, 1, 1) + lyr["bias"].reshape(1, -1, 1, 1)
        if lyr["lrelu"]:
            y = jnp.where(y >= 0.0, y, 0.2 * y)
        if lyr["sigmoid"]:
            y = jax.nn.sigmoid(y)
    return y.reshape(-1)


if __name__ == "__main__":
    batch, channels, hidden_dim, spatial = 2, 4, 8, 64   # 64x64 -> 1x1 output
    key = jax.random.PRNGKey(0)
    kx, kp = jax.random.split(key)
    x = jax.random.normal(kx, (batch, channels, spatial, spatial), jnp.float32)
    layers = make_params(kp, channels, hidden_dim)
    kparams = prepare_kernel_params(layers, spatial)

    out = jax.block_until_ready(discriminator_forward(x, kparams))
    ref = jax.block_until_ready(reference_forward(x, layers))

    assert out.shape == (batch,), out.shape
    # bf16 matmul operands (f32 accumulation, exact sigmoid) -> relaxed tol.
    assert jnp.allclose(out, ref, atol=2e-2, rtol=2e-2), (out, ref)
    print("KERNEL_OK")
</pallas_src>

<mosaic_0001>
module attributes {stable_mosaic.version = 11 : i64} {
  func.func @_disc_kernel(%arg0: i32, %arg1: memref<1x64x256xbf16, #tpu.memory_space<vmem>>, %arg2: memref<4x32x64xbf16, #tpu.memory_space<vmem>>, %arg3: memref<4x256x256xbf16, #tpu.memory_space<vmem>>, %arg4: memref<1x256xf32, #tpu.memory_space<vmem>>, %arg5: memref<4x16x32xbf16, #tpu.memory_space<vmem>>, %arg6: memref<4x256x256xbf16, #tpu.memory_space<vmem>>, %arg7: memref<1x256xf32, #tpu.memory_space<vmem>>, %arg8: memref<4x8x16xbf16, #tpu.memory_space<vmem>>, %arg9: memref<4x256x256xbf16, #tpu.memory_space<vmem>>, %arg10: memref<1x256xf32, #tpu.memory_space<vmem>>, %arg11: memref<4x4x8xbf16, #tpu.memory_space<vmem>>, %arg12: memref<4x256x256xbf16, #tpu.memory_space<vmem>>, %arg13: memref<1x256xf32, #tpu.memory_space<vmem>>, %arg14: memref<4x256xf32, #tpu.memory_space<vmem>>, %arg15: memref<1x1x1xf32, #tpu.memory_space<vmem>>) attributes {dimension_semantics = [#tpu.dimension_semantics<parallel>], iteration_bounds = array<i64: 2>, scalar_prefetch = 0 : i64, scratch_operands = 0 : i64, tpu.core_type = #tpu.core_type<tc>, window_params = [{transform_indices = @transform_0, window_bounds = array<i64: 1, 64, 256>}, {pipeline_mode = #tpu.pipeline_mode<synchronous>, transform_indices = @transform_1, window_bounds = array<i64: 4, 32, 64>}, {pipeline_mode = #tpu.pipeline_mode<synchronous>, transform_indices = @transform_2, window_bounds = array<i64: 4, 256, 256>}, {pipeline_mode = #tpu.pipeline_mode<synchronous>, transform_indices = @transform_3, window_bounds = array<i64: 1, 256>}, {pipeline_mode = #tpu.pipeline_mode<synchronous>, transform_indices = @transform_4, window_bounds = array<i64: 4, 16, 32>}, {pipeline_mode = #tpu.pipeline_mode<synchronous>, transform_indices = @transform_5, window_bounds = array<i64: 4, 256, 256>}, {pipeline_mode = #tpu.pipeline_mode<synchronous>, transform_indices = @transform_6, window_bounds = array<i64: 1, 256>}, {pipeline_mode = #tpu.pipeline_mode<synchronous>, transform_indices = @transform_7, window_bounds = array<i64: 4, 8, 16>}, {pipeline_mode = #tpu.pipeline_mode<synchronous>, transform_indices = @transform_8, window_bounds = array<i64: 4, 256, 256>}, {pipeline_mode = #tpu.pipeline_mode<synchronous>, transform_indices = @transform_9, window_bounds = array<i64: 1, 256>}, {pipeline_mode = #tpu.pipeline_mode<synchronous>, transform_indices = @transform_10, window_bounds = array<i64: 4, 4, 8>}, {pipeline_mode = #tpu.pipeline_mode<synchronous>, transform_indices = @transform_11, window_bounds = array<i64: 4, 256, 256>}, {pipeline_mode = #tpu.pipeline_mode<synchronous>, transform_indices = @transform_12, window_bounds = array<i64: 1, 256>}, {pipeline_mode = #tpu.pipeline_mode<synchronous>, transform_indices = @transform_13, window_bounds = array<i64: 4, 256>}, {transform_indices = @transform_14, window_bounds = array<i64: 1, 1, 1>}]} {
    %c0 = arith.constant 0 : index
    %c0_0 = arith.constant 0 : index
    %c0_1 = arith.constant 0 : index
    %0 = vector.load %arg1[%c0, %c0_0, %c0_1] : memref<1x64x256xbf16, #tpu.memory_space<vmem>>, vector<1x64x256xbf16>
    %1 = vector.shape_cast %0 : vector<1x64x256xbf16> to vector<64x256xbf16>
    %c0_2 = arith.constant 0 : index
    %c0_3 = arith.constant 0 : index
    %c0_4 = arith.constant 0 : index
    %2 = vector.load %arg2[%c0_2, %c0_3, %c0_4] : memref<4x32x64xbf16, #tpu.memory_space<vmem>>, vector<1x32x64xbf16>
    %3 = vector.shape_cast %2 : vector<1x32x64xbf16> to vector<32x64xbf16>
    %cst = arith.constant dense<0.000000e+00> : vector<32x256xf32>
    %4 = tpu.matmul %3, %1, %cst {dimension_numbers = #tpu.dot_dimension_numbers<[1], [0], [0], [1], [0, 0, 1, 1], [], []>} : vector<32x64xbf16>, vector<64x256xbf16>, vector<32x256xf32> -> vector<32x256xf32>
    %5 = arith.truncf %4 : vector<32x256xf32> to vector<32x256xbf16>
    %c0_5 = arith.constant 0 : index
    %c0_6 = arith.constant 0 : index
    %c0_7 = arith.constant 0 : index
    %6 = vector.load %arg3[%c0_5, %c0_6, %c0_7] : memref<4x256x256xbf16, #tpu.memory_space<vmem>>, vector<1x256x256xbf16>
    %7 = vector.shape_cast %6 : vector<1x256x256xbf16> to vector<256x256xbf16>
    %cst_8 = arith.constant dense<0.000000e+00> : vector<32x256xf32>
    %8 = tpu.matmul %5, %7, %cst_8 {dimension_numbers = #tpu.dot_dimension_numbers<[1], [0], [0], [1], [0, 0, 1, 1], [], []>} : vector<32x256xbf16>, vector<256x256xbf16>, vector<32x256xf32> -> vector<32x256xf32>
    %c1 = arith.constant 1 : index
    %c0_9 = arith.constant 0 : index
    %c0_10 = arith.constant 0 : index
    %9 = vector.load %arg2[%c1, %c0_9, %c0_10] : memref<4x32x64xbf16, #tpu.memory_space<vmem>>, vector<1x32x64xbf16>
    %10 = vector.shape_cast %9 : vector<1x32x64xbf16> to vector<32x64xbf16>
    %cst_11 = arith.constant dense<0.000000e+00> : vector<32x256xf32>
    %11 = tpu.matmul %10, %1, %cst_11 {dimension_numbers = #tpu.dot_dimension_numbers<[1], [0], [0], [1], [0, 0, 1, 1], [], []>} : vector<32x64xbf16>, vector<64x256xbf16>, vector<32x256xf32> -> vector<32x256xf32>
    %12 = arith.truncf %11 : vector<32x256xf32> to vector<32x256xbf16>
    %c1_12 = arith.constant 1 : index
    %c0_13 = arith.constant 0 : index
    %c0_14 = arith.constant 0 : index
    %13 = vector.load %arg3[%c1_12, %c0_13, %c0_14] : memref<4x256x256xbf16, #tpu.memory_space<vmem>>, vector<1x256x256xbf16>
    %14 = vector.shape_cast %13 : vector<1x256x256xbf16> to vector<256x256xbf16>
    %cst_15 = arith.constant dense<0.000000e+00> : vector<32x256xf32>
    %15 = tpu.matmul %12, %14, %cst_15 {dimension_numbers = #tpu.dot_dimension_numbers<[1], [0], [0], [1], [0, 0, 1, 1], [], []>} : vector<32x256xbf16>, vector<256x256xbf16>, vector<32x256xf32> -> vector<32x256xf32>
    %16 = arith.addf %8, %15 : vector<32x256xf32>
    %c2 = arith.constant 2 : index
    %c0_16 = arith.constant 0 : index
    %c0_17 = arith.constant 0 : index
    %17 = vector.load %arg2[%c2, %c0_16, %c0_17] : memref<4x32x64xbf16, #tpu.memory_space<vmem>>, vector<1x32x64xbf16>
    %18 = vector.shape_cast %17 : vector<1x32x64xbf16> to vector<32x64xbf16>
    %cst_18 = arith.constant dense<0.000000e+00> : vector<32x256xf32>
    %19 = tpu.matmul %18, %1, %cst_18 {dimension_numbers = #tpu.dot_dimension_numbers<[1], [0], [0], [1], [0, 0, 1, 1], [], []>} : vector<32x64xbf16>, vector<64x256xbf16>, vector<32x256xf32> -> vector<32x256xf32>
    %20 = arith.truncf %19 : vector<32x256xf32> to vector<32x256xbf16>
    %c2_19 = arith.constant 2 : index
    %c0_20 = arith.constant 0 : index
    %c0_21 = arith.constant 0 : index
    %21 = vector.load %arg3[%c2_19, %c0_20, %c0_21] : memref<4x256x256xbf16, #tpu.memory_space<vmem>>, vector<1x256x256xbf16>
    %22 = vector.shape_cast %21 : vector<1x256x256xbf16> to vector<256x256xbf16>
    %cst_22 = arith.constant dense<0.000000e+00> : vector<32x256xf32>
    %23 = tpu.matmul %20, %22, %cst_22 {dimension_numbers = #tpu.dot_dimension_numbers<[1], [0], [0], [1], [0, 0, 1, 1], [], []>} : vector<32x256xbf16>, vector<256x256xbf16>, vector<32x256xf32> -> vector<32x256xf32>
    %24 = arith.addf %16, %23 : vector<32x256xf32>
    %c3 = arith.constant 3 : index
    %c0_23 = arith.constant 0 : index
    %c0_24 = arith.constant 0 : index
    %25 = vector.load %arg2[%c3, %c0_23, %c0_24] : memref<4x32x64xbf16, #tpu.memory_space<vmem>>, vector<1x32x64xbf16>
    %26 = vector.shape_cast %25 : vector<1x32x64xbf16> to vector<32x64xbf16>
    %cst_25 = arith.constant dense<0.000000e+00> : vector<32x256xf32>
    %27 = tpu.matmul %26, %1, %cst_25 {dimension_numbers = #tpu.dot_dimension_numbers<[1], [0], [0], [1], [0, 0, 1, 1], [], []>} : vector<32x64xbf16>, vector<64x256xbf16>, vector<32x256xf32> -> vector<32x256xf32>
    %28 = arith.truncf %27 : vector<32x256xf32> to vector<32x256xbf16>
    %c3_26 = arith.constant 3 : index
    %c0_27 = arith.constant 0 : index
    %c0_28 = arith.constant 0 : index
    %29 = vector.load %arg3[%c3_26, %c0_27, %c0_28] : memref<4x256x256xbf16, #tpu.memory_space<vmem>>, vector<1x256x256xbf16>
    %30 = vector.shape_cast %29 : vector<1x256x256xbf16> to vector<256x256xbf16>
    %cst_29 = arith.constant dense<0.000000e+00> : vector<32x256xf32>
    %31 = tpu.matmul %28, %30, %cst_29 {dimension_numbers = #tpu.dot_dimension_numbers<[1], [0], [0], [1], [0, 0, 1, 1], [], []>} : vector<32x256xbf16>, vector<256x256xbf16>, vector<32x256xf32> -> vector<32x256xf32>
    %32 = arith.addf %24, %31 : vector<32x256xf32>
    %c0_30 = arith.constant 0 : index
    %c0_31 = arith.constant 0 : index
    %33 = vector.load %arg4[%c0_30, %c0_31] : memref<1x256xf32, #tpu.memory_space<vmem>>, vector<1x256xf32>
    %34 = vector.broadcast %33 : vector<1x256xf32> to vector<32x256xf32>
    %35 = arith.addf %32, %34 : vector<32x256xf32>
    %cst_32 = arith.constant 0.000000e+00 : f32
    %36 = vector.broadcast %cst_32 : f32 to vector<32x256xf32>
    %37 = arith.cmpf oge, %35, %36 : vector<32x256xf32>
    %cst_33 = arith.constant 2.000000e-01 : f32
    %38 = vector.broadcast %cst_33 : f32 to vector<32x256xf32>
    %39 = arith.mulf %38, %35 : vector<32x256xf32>
    %40 = arith.select %37, %35, %39 : vector<32x256xi1>, vector<32x256xf32>
    %41 = arith.truncf %40 : vector<32x256xf32> to vector<32x256xbf16>
    %c0_34 = arith.constant 0 : index
    %c0_35 = arith.constant 0 : index
    %c0_36 = arith.constant 0 : index
    %42 = vector.load %arg5[%c0_34, %c0_35, %c0_36] : memref<4x16x32xbf16, #tpu.memory_space<vmem>>, vector<1x16x32xbf16>
    %43 = vector.shape_cast %42 : vector<1x16x32xbf16> to vector<16x32xbf16>
    %cst_37 = arith.constant dense<0.000000e+00> : vector<16x256xf32>
    %44 = tpu.matmul %43, %41, %cst_37 {dimension_numbers = #tpu.dot_dimension_numbers<[1], [0], [0], [1], [0, 0, 1, 1], [], []>} : vector<16x32xbf16>, vector<32x256xbf16>, vector<16x256xf32> -> vector<16x256xf32>
    %45 = arith.truncf %44 : vector<16x256xf32> to vector<16x256xbf16>
    %c0_38 = arith.constant 0 : index
    %c0_39 = arith.constant 0 : index
    %c0_40 = arith.constant 0 : index
    %46 = vector.load %arg6[%c0_38, %c0_39, %c0_40] : memref<4x256x256xbf16, #tpu.memory_space<vmem>>, vector<1x256x256xbf16>
    %47 = vector.shape_cast %46 : vector<1x256x256xbf16> to vector<256x256xbf16>
    %cst_41 = arith.constant dense<0.000000e+00> : vector<16x256xf32>
    %48 = tpu.matmul %45, %47, %cst_41 {dimension_numbers = #tpu.dot_dimension_numbers<[1], [0], [0], [1], [0, 0, 1, 1], [], []>} : vector<16x256xbf16>, vector<256x256xbf16>, vector<16x256xf32> -> vector<16x256xf32>
    %c1_42 = arith.constant 1 : index
    %c0_43 = arith.constant 0 : index
    %c0_44 = arith.constant 0 : index
    %49 = vector.load %arg5[%c1_42, %c0_43, %c0_44] : memref<4x16x32xbf16, #tpu.memory_space<vmem>>, vector<1x16x32xbf16>
    %50 = vector.shape_cast %49 : vector<1x16x32xbf16> to vector<16x32xbf16>
    %cst_45 = arith.constant dense<0.000000e+00> : vector<16x256xf32>
    %51 = tpu.matmul %50, %41, %cst_45 {dimension_numbers = #tpu.dot_dimension_numbers<[1], [0], [0], [1], [0, 0, 1, 1], [], []>} : vector<16x32xbf16>, vector<32x256xbf16>, vector<16x256xf32> -> vector<16x256xf32>
    %52 = arith.truncf %51 : vector<16x256xf32> to vector<16x256xbf16>
    %c1_46 = arith.constant 1 : index
    %c0_47 = arith.constant 0 : index
    %c0_48 = arith.constant 0 : index
    %53 = vector.load %arg6[%c1_46, %c0_47, %c0_48] : memref<4x256x256xbf16, #tpu.memory_space<vmem>>, vector<1x256x256xbf16>
    %54 = vector.shape_cast %53 : vector<1x256x256xbf16> to vector<256x256xbf16>
    %cst_49 = arith.constant dense<0.000000e+00> : vector<16x256xf32>
    %55 = tpu.matmul %52, %54, %cst_49 {dimension_numbers = #tpu.dot_dimension_numbers<[1], [0], [0], [1], [0, 0, 1, 1], [], []>} : vector<16x256xbf16>, vector<256x256xbf16>, vector<16x256xf32> -> vector<16x256xf32>
    %56 = arith.addf %48, %55 : vector<16x256xf32>
    %c2_50 = arith.constant 2 : index
    %c0_51 = arith.constant 0 : index
    %c0_52 = arith.constant 0 : index
    %57 = vector.load %arg5[%c2_50, %c0_51, %c0_52] : memref<4x16x32xbf16, #tpu.memory_space<vmem>>, vector<1x16x32xbf16>
    %58 = vector.shape_cast %57 : vector<1x16x32xbf16> to vector<16x32xbf16>
    %cst_53 = arith.constant dense<0.000000e+00> : vector<16x256xf32>
    %59 = tpu.matmul %58, %41, %cst_53 {dimension_numbers = #tpu.dot_dimension_numbers<[1], [0], [0], [1], [0, 0, 1, 1], [], []>} : vector<16x32xbf16>, vector<32x256xbf16>, vector<16x256xf32> -> vector<16x256xf32>
    %60 = arith.truncf %59 : vector<16x256xf32> to vector<16x256xbf16>
    %c2_54 = arith.constant 2 : index
    %c0_55 = arith.constant 0 : index
    %c0_56 = arith.constant 0 : index
    %61 = vector.load %arg6[%c2_54, %c0_55, %c0_56] : memref<4x256x256xbf16, #tpu.memory_space<vmem>>, vector<1x256x256xbf16>
    %62 = vector.shape_cast %61 : vector<1x256x256xbf16> to vector<256x256xbf16>
    %cst_57 = arith.constant dense<0.000000e+00> : vector<16x256xf32>
    %63 = tpu.matmul %60, %62, %cst_57 {dimension_numbers = #tpu.dot_dimension_numbers<[1], [0], [0], [1], [0, 0, 1, 1], [], []>} : vector<16x256xbf16>, vector<256x256xbf16>, vector<16x256xf32> -> vector<16x256xf32>
    %64 = arith.addf %56, %63 : vector<16x256xf32>
    %c3_58 = arith.constant 3 : index
    %c0_59 = arith.constant 0 : index
    %c0_60 = arith.constant 0 : index
    %65 = vector.load %arg5[%c3_58, %c0_59, %c0_60] : memref<4x16x32xbf16, #tpu.memory_space<vmem>>, vector<1x16x32xbf16>
    %66 = vector.shape_cast %65 : vector<1x16x32xbf16> to vector<16x32xbf16>
    %cst_61 = arith.constant dense<0.000000e+00> : vector<16x256xf32>
    %67 = tpu.matmul %66, %41, %cst_61 {dimension_numbers = #tpu.dot_dimension_numbers<[1], [0], [0], [1], [0, 0, 1, 1], [], []>} : vector<16x32xbf16>, vector<32x256xbf16>, vector<16x256xf32> -> vector<16x256xf32>
    %68 = arith.truncf %67 : vector<16x256xf32> to vector<16x256xbf16>
    %c3_62 = arith.constant 3 : index
    %c0_63 = arith.constant 0 : index
    %c0_64 = arith.constant 0 : index
    %69 = vector.load %arg6[%c3_62, %c0_63, %c0_64] : memref<4x256x256xbf16, #tpu.memory_space<vmem>>, vector<1x256x256xbf16>
    %70 = vector.shape_cast %69 : vector<1x256x256xbf16> to vector<256x256xbf16>
    %cst_65 = arith.constant dense<0.000000e+00> : vector<16x256xf32>
    %71 = tpu.matmul %68, %70, %cst_65 {dimension_numbers = #tpu.dot_dimension_numbers<[1], [0], [0], [1], [0, 0, 1, 1], [], []>} : vector<16x256xbf16>, vector<256x256xbf16>, vector<16x256xf32> -> vector<16x256xf32>
    %72 = arith.addf %64, %71 : vector<16x256xf32>
    %c0_66 = arith.constant 0 : index
    %c0_67 = arith.constant 0 : index
    %73 = vector.load %arg7[%c0_66, %c0_67] : memref<1x256xf32, #tpu.memory_space<vmem>>, vector<1x256xf32>
    %74 = vector.broadcast %73 : vector<1x256xf32> to vector<16x256xf32>
    %75 = arith.addf %72, %74 : vector<16x256xf32>
    %cst_68 = arith.constant 0.000000e+00 : f32
    %76 = vector.broadcast %cst_68 : f32 to vector<16x256xf32>
    %77 = arith.cmpf oge, %75, %76 : vector<16x256xf32>
    %cst_69 = arith.constant 2.000000e-01 : f32
    %78 = vector.broadcast %cst_69 : f32 to vector<16x256xf32>
    %79 = arith.mulf %78, %75 : vector<16x256xf32>
    %80 = arith.select %77, %75, %79 : vector<16x256xi1>, vector<16x256xf32>
    %81 = arith.truncf %80 : vector<16x256xf32> to vector<16x256xbf16>
    %c0_70 = arith.constant 0 : index
    %c0_71 = arith.constant 0 : index
    %c0_72 = arith.constant 0 : index
    %82 = vector.load %arg8[%c0_70, %c0_71, %c0_72] : memref<4x8x16xbf16, #tpu.memory_space<vmem>>, vector<1x8x16xbf16>
    %83 = vector.shape_cast %82 : vector<1x8x16xbf16> to vector<8x16xbf16>
    %cst_73 = arith.constant dense<0.000000e+00> : vector<8x256xf32>
    %84 = tpu.matmul %83, %81, %cst_73 {dimension_numbers = #tpu.dot_dimension_numbers<[1], [0], [0], [1], [0, 0, 1, 1], [], []>} : vector<8x16xbf16>, vector<16x256xbf16>, vector<8x256xf32> -> vector<8x256xf32>
    %85 = arith.truncf %84 : vector<8x256xf32> to vector<8x256xbf16>
    %c0_74 = arith.constant 0 : index
    %c0_75 = arith.constant 0 : index
    %c0_76 = arith.constant 0 : index
    %86 = vector.load %arg9[%c0_74, %c0_75, %c0_76] : memref<4x256x256xbf16, #tpu.memory_space<vmem>>, vector<1x256x256xbf16>
    %87 = vector.shape_cast %86 : vector<1x256x256xbf16> to vector<256x256xbf16>
    %cst_77 = arith.constant dense<0.000000e+00> : vector<8x256xf32>
    %88 = tpu.matmul %85, %87, %cst_77 {dimension_numbers = #tpu.dot_dimension_numbers<[1], [0], [0], [1], [0, 0, 1, 1], [], []>} : vector<8x256xbf16>, vector<256x256xbf16>, vector<8x256xf32> -> vector<8x256xf32>
    %c1_78 = arith.constant 1 : index
    %c0_79 = arith.constant 0 : index
    %c0_80 = arith.constant 0 : index
    %89 = vector.load %arg8[%c1_78, %c0_79, %c0_80] : memref<4x8x16xbf16, #tpu.memory_space<vmem>>, vector<1x8x16xbf16>
    %90 = vector.shape_cast %89 : vector<1x8x16xbf16> to vector<8x16xbf16>
    %cst_81 = arith.constant dense<0.000000e+00> : vector<8x256xf32>
    %91 = tpu.matmul %90, %81, %cst_81 {dimension_numbers = #tpu.dot_dimension_numbers<[1], [0], [0], [1], [0, 0, 1, 1], [], []>} : vector<8x16xbf16>, vector<16x256xbf16>, vector<8x256xf32> -> vector<8x256xf32>
    %92 = arith.truncf %91 : vector<8x256xf32> to vector<8x256xbf16>
    %c1_82 = arith.constant 1 : index
    %c0_83 = arith.constant 0 : index
    %c0_84 = arith.constant 0 : index
    %93 = vector.load %arg9[%c1_82, %c0_83, %c0_84] : memref<4x256x256xbf16, #tpu.memory_space<vmem>>, vector<1x256x256xbf16>
    %94 = vector.shape_cast %93 : vector<1x256x256xbf16> to vector<256x256xbf16>
    %cst_85 = arith.constant dense<0.000000e+00> : vector<8x256xf32>
    %95 = tpu.matmul %92, %94, %cst_85 {dimension_numbers = #tpu.dot_dimension_numbers<[1], [0], [0], [1], [0, 0, 1, 1], [], []>} : vector<8x256xbf16>, vector<256x256xbf16>, vector<8x256xf32> -> vector<8x256xf32>
    %96 = arith.addf %88, %95 : vector<8x256xf32>
    %c2_86 = arith.constant 2 : index
    %c0_87 = arith.constant 0 : index
    %c0_88 = arith.constant 0 : index
    %97 = vector.load %arg8[%c2_86, %c0_87, %c0_88] : memref<4x8x16xbf16, #tpu.memory_space<vmem>>, vector<1x8x16xbf16>
    %98 = vector.shape_cast %97 : vector<1x8x16xbf16> to vector<8x16xbf16>
    %cst_89 = arith.constant dense<0.000000e+00> : vector<8x256xf32>
    %99 = tpu.matmul %98, %81, %cst_89 {dimension_numbers = #tpu.dot_dimension_numbers<[1], [0], [0], [1], [0, 0, 1, 1], [], []>} : vector<8x16xbf16>, vector<16x256xbf16>, vector<8x256xf32> -> vector<8x256xf32>
    %100 = arith.truncf %99 : vector<8x256xf32> to vector<8x256xbf16>
    %c2_90 = arith.constant 2 : index
    %c0_91 = arith.constant 0 : index
    %c0_92 = arith.constant 0 : index
    %101 = vector.load %arg9[%c2_90, %c0_91, %c0_92] : memref<4x256x256xbf16, #tpu.memory_space<vmem>>, vector<1x256x256xbf16>
    %102 = vector.shape_cast %101 : vector<1x256x256xbf16> to vector<256x256xbf16>
    %cst_93 = arith.constant dense<0.000000e+00> : vector<8x256xf32>
    %103 = tpu.matmul %100, %102, %cst_93 {dimension_numbers = #tpu.dot_dimension_numbers<[1], [0], [0], [1], [0, 0, 1, 1], [], []>} : vector<8x256xbf16>, vector<256x256xbf16>, vector<8x256xf32> -> vector<8x256xf32>
    %104 = arith.addf %96, %103 : vector<8x256xf32>
    %c3_94 = arith.constant 3 : index
    %c0_95 = arith.constant 0 : index
    %c0_96 = arith.constant 0 : index
    %105 = vector.load %arg8[%c3_94, %c0_95, %c0_96] : memref<4x8x16xbf16, #tpu.memory_space<vmem>>, vector<1x8x16xbf16>
    %106 = vector.shape_cast %105 : vector<1x8x16xbf16> to vector<8x16xbf16>
    %cst_97 = arith.constant dense<0.000000e+00> : vector<8x256xf32>
    %107 = tpu.matmul %106, %81, %cst_97 {dimension_numbers = #tpu.dot_dimension_numbers<[1], [0], [0], [1], [0, 0, 1, 1], [], []>} : vector<8x16xbf16>, vector<16x256xbf16>, vector<8x256xf32> -> vector<8x256xf32>
    %108 = arith.truncf %107 : vector<8x256xf32> to vector<8x256xbf16>
    %c3_98 = arith.constant 3 : index
    %c0_99 = arith.constant 0 : index
    %c0_100 = arith.constant 0 : index
    %109 = vector.load %arg9[%c3_98, %c0_99, %c0_100] : memref<4x256x256xbf16, #tpu.memory_space<vmem>>, vector<1x256x256xbf16>
    %110 = vector.shape_cast %109 : vector<1x256x256xbf16> to vector<256x256xbf16>
    %cst_101 = arith.constant dense<0.000000e+00> : vector<8x256xf32>
    %111 = tpu.matmul %108, %110, %cst_101 {dimension_numbers = #tpu.dot_dimension_numbers<[1], [0], [0], [1], [0, 0, 1, 1], [], []>} : vector<8x256xbf16>, vector<256x256xbf16>, vector<8x256xf32> -> vector<8x256xf32>
    %112 = arith.addf %104, %111 : vector<8x256xf32>
    %c0_102 = arith.constant 0 : index
    %c0_103 = arith.constant 0 : index
    %113 = vector.load %arg10[%c0_102, %c0_103] : memref<1x256xf32, #tpu.memory_space<vmem>>, vector<1x256xf32>
    %114 = vector.broadcast %113 : vector<1x256xf32> to vector<8x256xf32>
    %115 = arith.addf %112, %114 : vector<8x256xf32>
    %cst_104 = arith.constant 0.000000e+00 : f32
    %116 = vector.broadcast %cst_104 : f32 to vector<8x256xf32>
    %117 = arith.cmpf oge, %115, %116 : vector<8x256xf32>
    %cst_105 = arith.constant 2.000000e-01 : f32
    %118 = vector.broadcast %cst_105 : f32 to vector<8x256xf32>
    %119 = arith.mulf %118, %115 : vector<8x256xf32>
    %120 = arith.select %117, %115, %119 : vector<8x256xi1>, vector<8x256xf32>
    %121 = arith.truncf %120 : vector<8x256xf32> to vector<8x256xbf16>
    %c0_106 = arith.constant 0 : index
    %c0_107 = arith.constant 0 : index
    %c0_108 = arith.constant 0 : index
    %122 = vector.load %arg11[%c0_106, %c0_107, %c0_108] : memref<4x4x8xbf16, #tpu.memory_space<vmem>>, vector<1x4x8xbf16>
    %123 = vector.shape_cast %122 : vector<1x4x8xbf16> to vector<4x8xbf16>
    %cst_109 = arith.constant dense<0.000000e+00> : vector<4x256xf32>
    %124 = tpu.matmul %123, %121, %cst_109 {dimension_numbers = #tpu.dot_dimension_numbers<[1], [0], [0], [1], [0, 0, 1, 1], [], []>} : vector<4x8xbf16>, vector<8x256xbf16>, vector<4x256xf32> -> vector<4x256xf32>
    %125 = arith.truncf %124 : vector<4x256xf32> to vector<4x256xbf16>
    %c0_110 = arith.constant 0 : index
    %c0_111 = arith.constant 0 : index
    %c0_112 = arith.constant 0 : index
    %126 = vector.load %arg12[%c0_110, %c0_111, %c0_112] : memref<4x256x256xbf16, #tpu.memory_space<vmem>>, vector<1x256x256xbf16>
    %127 = vector.shape_cast %126 : vector<1x256x256xbf16> to vector<256x256xbf16>
    %cst_113 = arith.constant dense<0.000000e+00> : vector<4x256xf32>
    %128 = tpu.matmul %125, %127, %cst_113 {dimension_numbers = #tpu.dot_dimension_numbers<[1], [0], [0], [1], [0, 0, 1, 1], [], []>} : vector<4x256xbf16>, vector<256x256xbf16>, vector<4x256xf32> -> vector<4x256xf32>
    %c1_114 = arith.constant 1 : index
    %c0_115 = arith.constant 0 : index
    %c0_116 = arith.constant 0 : index
    %129 = vector.load %arg11[%c1_114, %c0_115, %c0_116] : memref<4x4x8xbf16, #tpu.memory_space<vmem>>, vector<1x4x8xbf16>
    %130 = vector.shape_cast %129 : vector<1x4x8xbf16> to vector<4x8xbf16>
    %cst_117 = arith.constant dense<0.000000e+00> : vector<4x256xf32>
    %131 = tpu.matmul %130, %121, %cst_117 {dimension_numbers = #tpu.dot_dimension_numbers<[1], [0], [0], [1], [0, 0, 1, 1], [], []>} : vector<4x8xbf16>, vector<8x256xbf16>, vector<4x256xf32> -> vector<4x256xf32>
    %132 = arith.truncf %131 : vector<4x256xf32> to vector<4x256xbf16>
    %c1_118 = arith.constant 1 : index
    %c0_119 = arith.constant 0 : index
    %c0_120 = arith.constant 0 : index
    %133 = vector.load %arg12[%c1_118, %c0_119, %c0_120] : memref<4x256x256xbf16, #tpu.memory_space<vmem>>, vector<1x256x256xbf16>
    %134 = vector.shape_cast %133 : vector<1x256x256xbf16> to vector<256x256xbf16>
    %cst_121 = arith.constant dense<0.000000e+00> : vector<4x256xf32>
    %135 = tpu.matmul %132, %134, %cst_121 {dimension_numbers = #tpu.dot_dimension_numbers<[1], [0], [0], [1], [0, 0, 1, 1], [], []>} : vector<4x256xbf16>, vector<256x256xbf16>, vector<4x256xf32> -> vector<4x256xf32>
    %136 = arith.addf %128, %135 : vector<4x256xf32>
    %c2_122 = arith.constant 2 : index
    %c0_123 = arith.constant 0 : index
    %c0_124 = arith.constant 0 : index
    %137 = vector.load %arg11[%c2_122, %c0_123, %c0_124] : memref<4x4x8xbf16, #tpu.memory_space<vmem>>, vector<1x4x8xbf16>
    %138 = vector.shape_cast %137 : vector<1x4x8xbf16> to vector<4x8xbf16>
    %cst_125 = arith.constant dense<0.000000e+00> : vector<4x256xf32>
    %139 = tpu.matmul %138, %121, %cst_125 {dimension_numbers = #tpu.dot_dimension_numbers<[1], [0], [0], [1], [0, 0, 1, 1], [], []>} : vector<4x8xbf16>, vector<8x256xbf16>, vector<4x256xf32> -> vector<4x256xf32>
    %140 = arith.truncf %139 : vector<4x256xf32> to vector<4x256xbf16>
    %c2_126 = arith.constant 2 : index
    %c0_127 = arith.constant 0 : index
    %c0_128 = arith.constant 0 : index
    %141 = vector.load %arg12[%c2_126, %c0_127, %c0_128] : memref<4x256x256xbf16, #tpu.memory_space<vmem>>, vector<1x256x256xbf16>
    %142 = vector.shape_cast %141 : vector<1x256x256xbf16> to vector<256x256xbf16>
    %cst_129 = arith.constant dense<0.000000e+00> : vector<4x256xf32>
    %143 = tpu.matmul %140, %142, %cst_129 {dimension_numbers = #tpu.dot_dimension_numbers<[1], [0], [0], [1], [0, 0, 1, 1], [], []>} : vector<4x256xbf16>, vector<256x256xbf16>, vector<4x256xf32> -> vector<4x256xf32>
    %144 = arith.addf %136, %143 : vector<4x256xf32>
    %c3_130 = arith.constant 3 : index
    %c0_131 = arith.constant 0 : index
    %c0_132 = arith.constant 0 : index
    %145 = vector.load %arg11[%c3_130, %c0_131, %c0_132] : memref<4x4x8xbf16, #tpu.memory_space<vmem>>, vector<1x4x8xbf16>
    %146 = vector.shape_cast %145 : vector<1x4x8xbf16> to vector<4x8xbf16>
    %cst_133 = arith.constant dense<0.000000e+00> : vector<4x256xf32>
    %147 = tpu.matmul %146, %121, %cst_133 {dimension_numbers = #tpu.dot_dimension_numbers<[1], [0], [0], [1], [0, 0, 1, 1], [], []>} : vector<4x8xbf16>, vector<8x256xbf16>, vector<4x256xf32> -> vector<4x256xf32>
    %148 = arith.truncf %147 : vector<4x256xf32> to vector<4x256xbf16>
    %c3_134 = arith.constant 3 : index
    %c0_135 = arith.constant 0 : index
    %c0_136 = arith.constant 0 : index
    %149 = vector.load %arg12[%c3_134, %c0_135, %c0_136] : memref<4x256x256xbf16, #tpu.memory_space<vmem>>, vector<1x256x256xbf16>
    %150 = vector.shape_cast %149 : vector<1x256x256xbf16> to vector<256x256xbf16>
    %cst_137 = arith.constant dense<0.000000e+00> : vector<4x256xf32>
    %151 = tpu.matmul %148, %150, %cst_137 {dimension_numbers = #tpu.dot_dimension_numbers<[1], [0], [0], [1], [0, 0, 1, 1], [], []>} : vector<4x256xbf16>, vector<256x256xbf16>, vector<4x256xf32> -> vector<4x256xf32>
    %152 = arith.addf %144, %151 : vector<4x256xf32>
    %c0_138 = arith.constant 0 : index
    %c0_139 = arith.constant 0 : index
    %153 = vector.load %arg13[%c0_138, %c0_139] : memref<1x256xf32, #tpu.memory_space<vmem>>, vector<1x256xf32>
    %154 = vector.broadcast %153 : vector<1x256xf32> to vector<4x256xf32>
    %155 = arith.addf %152, %154 : vector<4x256xf32>
    %cst_140 = arith.constant 0.000000e+00 : f32
    %156 = vector.broadcast %cst_140 : f32 to vector<4x256xf32>
    %157 = arith.cmpf oge, %155, %156 : vector<4x256xf32>
    %cst_141 = arith.constant 2.000000e-01 : f32
    %158 = vector.broadcast %cst_141 : f32 to vector<4x256xf32>
    %159 = arith.mulf %158, %155 : vector<4x256xf32>
    %160 = arith.select %157, %155, %159 : vector<4x256xi1>, vector<4x256xf32>
    %c0_142 = arith.constant 0 : index
    %c0_143 = arith.constant 0 : index
    %161 = vector.load %arg14[%c0_142, %c0_143] : memref<4x256xf32, #tpu.memory_space<vmem>>, vector<4x256xf32>
    %162 = arith.mulf %160, %161 : vector<4x256xf32>
    %cst_144 = arith.constant dense<0.000000e+00> : vector<4xf32>
    %163 = vector.multi_reduction <add>, %162, %cst_144 [1] : vector<4x256xf32> to vector<4xf32>
    %164 = vector.shape_cast %163 : vector<4xf32> to vector<4x1xf32>
    %cst_145 = arith.constant dense<0.000000e+00> : vector<1xf32>
    %165 = vector.multi_reduction <add>, %164, %cst_145 [0] : vector<4x1xf32> to vector<1xf32>
    %166 = vector.shape_cast %165 : vector<1xf32> to vector<1x1xf32>
    %cst_146 = arith.constant 0.000000e+00 : f32
    %167 = vector.broadcast %cst_146 : f32 to vector<1x1xf32>
    %168 = arith.subf %167, %166 : vector<1x1xf32>
    %169 = math.exp %168 : vector<1x1xf32>
    %cst_147 = arith.constant 1.000000e+00 : f32
    %170 = vector.broadcast %cst_147 : f32 to vector<1x1xf32>
    %171 = arith.addf %170, %169 : vector<1x1xf32>
    %cst_148 = arith.constant 1.000000e+00 : f32
    %172 = vector.broadcast %cst_148 : f32 to vector<1x1xf32>
    %173 = arith.divf %172, %171 : vector<1x1xf32>
    %c0_149 = arith.constant 0 : index
    %c0_150 = arith.constant 0 : index
    %c0_151 = arith.constant 0 : index
    %174 = vector.load %arg15[%c0_149, %c0_150, %c0_151] : memref<1x1x1xf32, #tpu.memory_space<vmem>>, vector<1x1x1xf32>
    %175 = vector.shape_cast %174 : vector<1x1x1xf32> to vector<1x1xf32>
    %176 = vector.shape_cast %173 : vector<1x1xf32> to vector<1x1x1xf32>
    tpu.vector_store %arg15[%c0_149, %c0_150, %c0_151], %176 {strides = array<i32>} : memref<1x1x1xf32, #tpu.memory_space<vmem>>, vector<1x1x1xf32>,
    return
  }
  func.func @transform_0(%arg0: i32) -> (i32, i32, i32) {
    %c0_i32 = arith.constant 0 : i32
    %c0_i32_0 = arith.constant 0 : i32
    %c0_i32_1 = arith.constant 0 : i32
    return %arg0, %c0_i32, %c0_i32_0 : i32, i32, i32
  }
  func.func @transform_1(%arg0: i32) -> (i32, i32, i32) {
    %c0_i32 = arith.constant 0 : i32
    %c0_i32_0 = arith.constant 0 : i32
    %c0_i32_1 = arith.constant 0 : i32
    %c0_i32_2 = arith.constant 0 : i32
    return %c0_i32, %c0_i32_0, %c0_i32_1 : i32, i32, i32
  }
  func.func @transform_2(%arg0: i32) -> (i32, i32, i32) {
    %c0_i32 = arith.constant 0 : i32
    %c0_i32_0 = arith.constant 0 : i32
    %c0_i32_1 = arith.constant 0 : i32
    %c0_i32_2 = arith.constant 0 : i32
    return %c0_i32, %c0_i32_0, %c0_i32_1 : i32, i32, i32
  }
  func.func @transform_3(%arg0: i32) -> (i32, i32) {
    %c0_i32 = arith.constant 0 : i32
    %c0_i32_0 = arith.constant 0 : i32
    %c0_i32_1 = arith.constant 0 : i32
    return %c0_i32, %c0_i32_0 : i32, i32
  }
  func.func @transform_4(%arg0: i32) -> (i32, i32, i32) {
    %c0_i32 = arith.constant 0 : i32
    %c0_i32_0 = arith.constant 0 : i32
    %c0_i32_1 = arith.constant 0 : i32
    %c0_i32_2 = arith.constant 0 : i32
    return %c0_i32, %c0_i32_0, %c0_i32_1 : i32, i32, i32
  }
  func.func @transform_5(%arg0: i32) -> (i32, i32, i32) {
    %c0_i32 = arith.constant 0 : i32
    %c0_i32_0 = arith.constant 0 : i32
    %c0_i32_1 = arith.constant 0 : i32
    %c0_i32_2 = arith.constant 0 : i32
    return %c0_i32, %c0_i32_0, %c0_i32_1 : i32, i32, i32
  }
  func.func @transform_6(%arg0: i32) -> (i32, i32) {
    %c0_i32 = arith.constant 0 : i32
    %c0_i32_0 = arith.constant 0 : i32
    %c0_i32_1 = arith.constant 0 : i32
    return %c0_i32, %c0_i32_0 : i32, i32
  }
  func.func @transform_7(%arg0: i32) -> (i32, i32, i32) {
    %c0_i32 = arith.constant 0 : i32
    %c0_i32_0 = arith.constant 0 : i32
    %c0_i32_1 = arith.constant 0 : i32
    %c0_i32_2 = arith.constant 0 : i32
    return %c0_i32, %c0_i32_0, %c0_i32_1 : i32, i32, i32
  }
  func.func @transform_8(%arg0: i32) -> (i32, i32, i32) {
    %c0_i32 = arith.constant 0 : i32
    %c0_i32_0 = arith.constant 0 : i32
    %c0_i32_1 = arith.constant 0 : i32
    %c0_i32_2 = arith.constant 0 : i32
    return %c0_i32, %c0_i32_0, %c0_i32_1 : i32, i32, i32
  }
  func.func @transform_9(%arg0: i32) -> (i32, i32) {
    %c0_i32 = arith.constant 0 : i32
    %c0_i32_0 = arith.constant 0 : i32
    %c0_i32_1 = arith.constant 0 : i32
    return %c0_i32, %c0_i32_0 : i32, i32
  }
  func.func @transform_10(%arg0: i32) -> (i32, i32, i32) {
    %c0_i32 = arith.constant 0 : i32
    %c0_i32_0 = arith.constant 0 : i32
    %c0_i32_1 = arith.constant 0 : i32
    %c0_i32_2 = arith.constant 0 : i32
    return %c0_i32, %c0_i32_0, %c0_i32_1 : i32, i32, i32
  }
  func.func @transform_11(%arg0: i32) -> (i32, i32, i32) {
    %c0_i32 = arith.constant 0 : i32
    %c0_i32_0 = arith.constant 0 : i32
    %c0_i32_1 = arith.constant 0 : i32
    %c0_i32_2 = arith.constant 0 : i32
    return %c0_i32, %c0_i32_0, %c0_i32_1 : i32, i32, i32
  }
  func.func @transform_12(%arg0: i32) -> (i32, i32) {
    %c0_i32 = arith.constant 0 : i32
    %c0_i32_0 = arith.constant 0 : i32
    %c0_i32_1 = arith.constant 0 : i32
    return %c0_i32, %c0_i32_0 : i32, i32
  }
  func.func @transform_13(%arg0: i32) -> (i32, i32) {
    %c0_i32 = arith.constant 0 : i32
    %c0_i32_0 = arith.constant 0 : i32
    %c0_i32_1 = arith.constant 0 : i32
    return %c0_i32, %c0_i32_0 : i32, i32
  }
  func.func @transform_14(%arg0: i32) -> (i32, i32, i32) {
    %c0_i32 = arith.constant 0 : i32
    %c0_i32_0 = arith.constant 0 : i32
    %c0_i32_1 = arith.constant 0 : i32
    return %arg0, %c0_i32, %c0_i32_0 : i32, i32, i32
  }
}

</mosaic_0001>

<llo_original>
// kernel: discriminator_forward.1
$region0: #{discriminator_forward.1}
  #allocation0 [shape = 'u32[]', space=smem, size = 0x4, offset = 0x4, fixed_abs, tag = 'smem constant byte address 0x4 - core index']
  #allocation1 [shape = 'u32[144,128]{1,0:T(1,128)}', space=vmem, size = 0x12000, scoped, tag = 'internal scratch']
  %s0 = inlined_call_operand.vmem [shape: bf16[2,64,256], index: 0, kind: input, shape index: {}]
  %s1 = inlined_call_operand.vmem [shape: bf16[4,32,64], index: 1, kind: input, shape index: {}]
  %s2 = inlined_call_operand.vmem [shape: bf16[4,256,256], index: 2, kind: input, shape index: {}]
  %s3 = inlined_call_operand.vmem [shape: f32[1,256], index: 3, kind: input, shape index: {}]
  %s4 = inlined_call_operand.vmem [shape: bf16[4,16,32], index: 4, kind: input, shape index: {}]
  %s5 = inlined_call_operand.hbm [shape: bf16[4,256,256], index: 5, kind: input, shape index: {}]
  %s6 = inlined_call_operand.vmem [shape: f32[1,256], index: 6, kind: input, shape index: {}]
  %s7 = inlined_call_operand.vmem [shape: bf16[4,8,16], index: 7, kind: input, shape index: {}]
  %s8 = inlined_call_operand.hbm [shape: bf16[4,256,256], index: 8, kind: input, shape index: {}]
  %s9 = inlined_call_operand.vmem [shape: f32[1,256], index: 9, kind: input, shape index: {}]
  %s10 = inlined_call_operand.vmem [shape: bf16[4,4,8], index: 10, kind: input, shape index: {}]
  %s11 = inlined_call_operand.hbm [shape: bf16[4,256,256], index: 11, kind: input, shape index: {}]
  %s12 = inlined_call_operand.vmem [shape: f32[1,256], index: 12, kind: input, shape index: {}]
  %s13 = inlined_call_operand.vmem [shape: f32[4,256], index: 13, kind: input, shape index: {}]
  %s14 = inlined_call_operand.vmem [shape: f32[2,1,1], index: 14, kind: output, shape index: {}]
  %s15 = sld [smem:[#allocation0]]
  $region101: #{discriminator_forward.1} parent=0
    _
  %s17 = ssub.s32 1, %s15
  %s18 = scalar_select 0, %s17, %s15
  $region1: #{discriminator_forward.1} parent=0
    #allocation2 [shape = 'u8[524288]{0}', space=vmem, size = 0x80000, scoped, tag = 'input window, operand 5, single buffered']
    #allocation3 [shape = 's32[2]{0}', space=sflag, size = 0x8, scoped, tag = 'scoped memory for discriminator_forward.1']
    #allocation4 [shape = 'u8[524288]{0}', space=vmem, size = 0x80000, scoped, tag = 'input window, operand 8, single buffered']
    #allocation5 [shape = 's32[1]{0}', space=sflag, size = 0x4, scoped, tag = 'scoped memory for discriminator_forward.1']
    #allocation6 [shape = 'u8[524288]{0}', space=vmem, size = 0x80000, scoped, tag = 'input window, operand 11, single buffered']
    %19 = vsyncpa [#allocation3], 0
    %20 = vsyncpa [#allocation5], 0
    loop: start=0, step=1, limit=4
    $region2: #{discriminator_forward.1} parent=1 // loop_pre_header
      _
    $region3: #{discriminator_forward.1} parent=1 // loop_header
      %s22 = sphi 0, %s26
      %p23 = scmp.ge.s32.totalorder %s22, 4
      %s32 = sphi 0, %s34
      %s35 = sphi 0, %s32
      %s36 = sphi 0, %s35
      %s52 = sphi 0, %s36
      %s56 = sphi 0, %s56
      %s58 = sphi 0, %s56
      %s59 = sphi 0, %s58
      %s73 = sphi 0, %s59
      %s77 = sphi 0, %s77
      %s79 = sphi 0, %s77
      %s80 = sphi 0, %s79
      %s94 = sphi 0, %s80
      %s98 = sphi 0, %s98
      %s100 = sphi 0, %s98
      %s101 = sphi 0, %s100
      %s115 = sphi 0, %s101
      %s119 = sphi 0, %s119
      %s121 = sphi 0, %s119
      %s122 = sphi 0, %s121
      %s136 = sphi 0, %s122
      %s140 = sphi 0, %s140
      %s142 = sphi 0, %s140
      %s143 = sphi 0, %s142
      %s157 = sphi 0, %s143
      %s161 = sphi 0, %s161
      %s163 = sphi 0, %s161
      %s164 = sphi 0, %s163
      %s178 = sphi 0, %s164
      %s182 = sphi 0, %s182
      %s184 = sphi 0, %s182
      %s185 = sphi 0, %s184
      %s199 = sphi 0, %s185
      %s203 = sphi 0, %s203
      %s205 = sphi 0, %s203
      %s206 = sphi 0, %s205
      %s220 = sphi 0, %s206
      %s224 = sphi 0, %s224
      %s226 = sphi 0, %s224
      %s227 = sphi 0, %s226
      %s241 = sphi 0, %s227
      %s245 = sphi 0, %s245
      %s247 = sphi 0, %s245
      %s248 = sphi 0, %s247
      %s262 = sphi 0, %s248
      %s266 = sphi 0, %s266
      %s268 = sphi 0, %s266
      %s269 = sphi 0, %s268
      %s283 = sphi 0, %s269
      %s287 = sphi 0, %s287
      %s289 = sphi 0, %s287
      %s290 = sphi 0, %s289
      %s304 = sphi 0, %s290
      %s308 = sphi 0, %s308
      %s310 = sphi 0, %s308
      %s311 = sphi 0, %s310
      %s325 = sphi 0, %s311
      %s331 = sphi 0, %s333
      %s334 = sphi 0, %s331
      %s335 = sphi 0, %s334
      %s351 = sphi 0, %s335
    $region4: #{discriminator_forward.1} parent=1 // loop_header_branch
      %25 = sbr.rel (%p23) target = $region8
    $region5: #{discriminator_forward.1} parent=1 // loop_body
      %s27 = ssub.s32 %s22, 1
      %s28 = ssub.s32 %s22, 2
      %s29 = sadd.s32 %s22, 1
      %s30 = ssub.s32 %s22, %s29
      %p31 = scmp.eq.s32.totalorder %s30, 0
      %s33 = sadd.s32 %s32, 1
      %s34 = scalar_select %p31, %s32, %s33
      %p37 = pneg %p31
      %p38 = scmp.eq.s32.totalorder %s22, 1
      %p39 = por %p37, %p38
      %p40 = scmp.ne.s32.totalorder %s32, %s35
      %p41 = scmp.eq.s32.totalorder %s22, 0
      %p42 = por %p40, %p41
      %p43 = scmp.ne.s32.totalorder %s32, %s35
      %p44 = scmp.eq.s32.totalorder %s27, 1
      %p45 = por %p43, %p44
      %p46 = scmp.ne.s32.totalorder %s35, %s36
      %p47 = scmp.eq.s32.totalorder %s27, 0
      %p48 = por %p46, %p47
      %p49 = scmp.ne.s32.totalorder %s35, %s36
      %p50 = scmp.eq.s32.totalorder %s28, 1
      %p51 = por %p49, %p50
      %p53 = scmp.ne.s32.totalorder %s36, %s52
      %p54 = scmp.eq.s32.totalorder %s28, 0
      %p55 = por %p53, %p54
      %s57 = sadd.s32 %s56, 1
      %p60 = scmp.eq.s32.totalorder %s22, 1
      %p61 = scmp.ne.s32.totalorder %s56, %s58
      %p62 = scmp.eq.s32.totalorder %s22, 0
      %p63 = por %p61, %p62
      %p64 = scmp.ne.s32.totalorder %s56, %s58
      %p65 = scmp.eq.s32.totalorder %s27, 1
      %p66 = por %p64, %p65
      %p67 = scmp.ne.s32.totalorder %s58, %s59
      %p68 = scmp.eq.s32.totalorder %s27, 0
      %p69 = por %p67, %p68
      %p70 = scmp.ne.s32.totalorder %s58, %s59
      %p71 = scmp.eq.s32.totalorder %s28, 1
      %p72 = por %p70, %p71
      %p74 = scmp.ne.s32.totalorder %s59, %s73
      %p75 = scmp.eq.s32.totalorder %s28, 0
      %p76 = por %p74, %p75
      %s78 = sadd.s32 %s77, 1
      %p81 = scmp.eq.s32.totalorder %s22, 1
      %p82 = scmp.ne.s32.totalorder %s77, %s79
      %p83 = scmp.eq.s32.totalorder %s22, 0
      %p84 = por %p82, %p83
      %p85 = scmp.ne.s32.totalorder %s77, %s79
      %p86 = scmp.eq.s32.totalorder %s27, 1
      %p87 = por %p85, %p86
      %p88 = scmp.ne.s32.totalorder %s79, %s80
      %p89 = scmp.eq.s32.totalorder %s27, 0
      %p90 = por %p88, %p89
      %p91 = scmp.ne.s32.totalorder %s79, %s80
      %p92 = scmp.eq.s32.totalorder %s28, 1
      %p93 = por %p91, %p92
      %p95 = scmp.ne.s32.totalorder %s80, %s94
      %p96 = scmp.eq.s32.totalorder %s28, 0
      %p97 = por %p95, %p96
      %s99 = sadd.s32 %s98, 1
      %p102 = scmp.eq.s32.totalorder %s22, 1
      %p103 = scmp.ne.s32.totalorder %s98, %s100
      %p104 = scmp.eq.s32.totalorder %s22, 0
      %p105 = por %p103, %p104
      %p106 = scmp.ne.s32.totalorder %s98, %s100
      %p107 = scmp.eq.s32.totalorder %s27, 1
      %p108 = por %p106, %p107
      %p109 = scmp.ne.s32.totalorder %s100, %s101
      %p110 = scmp.eq.s32.totalorder %s27, 0
      %p111 = por %p109, %p110
      %p112 = scmp.ne.s32.totalorder %s100, %s101
      %p113 = scmp.eq.s32.totalorder %s28, 1
      %p114 = por %p112, %p113
      %p116 = scmp.ne.s32.totalorder %s101, %s115
      %p117 = scmp.eq.s32.totalorder %s28, 0
      %p118 = por %p116, %p117
      %s120 = sadd.s32 %s119, 1
      %p123 = scmp.eq.s32.totalorder %s22, 1
      %p124 = scmp.ne.s32.totalorder %s119, %s121
      %p125 = scmp.eq.s32.totalorder %s22, 0
      %p126 = por %p124, %p125
      %p127 = scmp.ne.s32.totalorder %s119, %s121
      %p128 = scmp.eq.s32.totalorder %s27, 1
      %p129 = por %p127, %p128
      %p130 = scmp.ne.s32.totalorder %s121, %s122
      %p131 = scmp.eq.s32.totalorder %s27, 0
      %p132 = por %p130, %p131
      %p133 = scmp.ne.s32.totalorder %s121, %s122
      %p134 = scmp.eq.s32.totalorder %s28, 1
      %p135 = por %p133, %p134
      %p137 = scmp.ne.s32.totalorder %s122, %s136
      %p138 = scmp.eq.s32.totalorder %s28, 0
      %p139 = por %p137, %p138
      %s141 = sadd.s32 %s140, 1
      %p144 = scmp.eq.s32.totalorder %s22, 1
      %p145 = scmp.ne.s32.totalorder %s140, %s142
      %p146 = scmp.eq.s32.totalorder %s22, 0
      %p147 = por %p145, %p146
      %p148 = scmp.ne.s32.totalorder %s140, %s142
      %p149 = scmp.eq.s32.totalorder %s27, 1
      %p150 = por %p148, %p149
      %p151 = scmp.ne.s32.totalorder %s142, %s143
      %p152 = scmp.eq.s32.totalorder %s27, 0
      %p153 = por %p151, %p152
      %p154 = scmp.ne.s32.totalorder %s142, %s143
      %p155 = scmp.eq.s32.totalorder %s28, 1
      %p156 = por %p154, %p155
      %p158 = scmp.ne.s32.totalorder %s143, %s157
      %p159 = scmp.eq.s32.totalorder %s28, 0
      %p160 = por %p158, %p159
      %s162 = sadd.s32 %s161, 1
      %p165 = scmp.eq.s32.totalorder %s22, 1
      %p166 = scmp.ne.s32.totalorder %s161, %s163
      %p167 = scmp.eq.s32.totalorder %s22, 0
      %p168 = por %p166, %p167
      %p169 = scmp.ne.s32.totalorder %s161, %s163
      %p170 = scmp.eq.s32.totalorder %s27, 1
      %p171 = por %p169, %p170
      %p172 = scmp.ne.s32.totalorder %s163, %s164
      %p173 = scmp.eq.s32.totalorder %s27, 0
      %p174 = por %p172, %p173
      %p175 = scmp.ne.s32.totalorder %s163, %s164
      %p176 = scmp.eq.s32.totalorder %s28, 1
      %p177 = por %p175, %p176
      %p179 = scmp.ne.s32.totalorder %s164, %s178
      %p180 = scmp.eq.s32.totalorder %s28, 0
      %p181 = por %p179, %p180
      %s183 = sadd.s32 %s182, 1
      %p186 = scmp.eq.s32.totalorder %s22, 1
      %p187 = scmp.ne.s32.totalorder %s182, %s184
      %p188 = scmp.eq.s32.totalorder %s22, 0
      %p189 = por %p187, %p188
      %p190 = scmp.ne.s32.totalorder %s182, %s184
      %p191 = scmp.eq.s32.totalorder %s27, 1
      %p192 = por %p190, %p191
      %p193 = scmp.ne.s32.totalorder %s184, %s185
      %p194 = scmp.eq.s32.totalorder %s27, 0
      %p195 = por %p193, %p194
      %p196 = scmp.ne.s32.totalorder %s184, %s185
      %p197 = scmp.eq.s32.totalorder %s28, 1
      %p198 = por %p196, %p197
      %p200 = scmp.ne.s32.totalorder %s185, %s199
      %p201 = scmp.eq.s32.totalorder %s28, 0
      %p202 = por %p200, %p201
      %s204 = sadd.s32 %s203, 1
      %p207 = scmp.eq.s32.totalorder %s22, 1
      %p208 = scmp.ne.s32.totalorder %s203, %s205
      %p209 = scmp.eq.s32.totalorder %s22, 0
      %p210 = por %p208, %p209
      %p211 = scmp.ne.s32.totalorder %s203, %s205
      %p212 = scmp.eq.s32.totalorder %s27, 1
      %p213 = por %p211, %p212
      %p214 = scmp.ne.s32.totalorder %s205, %s206
      %p215 = scmp.eq.s32.totalorder %s27, 0
      %p216 = por %p214, %p215
      %p217 = scmp.ne.s32.totalorder %s205, %s206
      %p218 = scmp.eq.s32.totalorder %s28, 1
      %p219 = por %p217, %p218
      %p221 = scmp.ne.s32.totalorder %s206, %s220
      %p222 = scmp.eq.s32.totalorder %s28, 0
      %p223 = por %p221, %p222
      %s225 = sadd.s32 %s224, 1
      %p228 = scmp.eq.s32.totalorder %s22, 1
      %p229 = scmp.ne.s32.totalorder %s224, %s226
      %p230 = scmp.eq.s32.totalorder %s22, 0
      %p231 = por %p229, %p230
      %p232 = scmp.ne.s32.totalorder %s224, %s226
      %p233 = scmp.eq.s32.totalorder %s27, 1
      %p234 = por %p232, %p233
      %p235 = scmp.ne.s32.totalorder %s226, %s227
      %p236 = scmp.eq.s32.totalorder %s27, 0
      %p237 = por %p235, %p236
      %p238 = scmp.ne.s32.totalorder %s226, %s227
      %p239 = scmp.eq.s32.totalorder %s28, 1
      %p240 = por %p238, %p239
      %p242 = scmp.ne.s32.totalorder %s227, %s241
      %p243 = scmp.eq.s32.totalorder %s28, 0
      %p244 = por %p242, %p243
      %s246 = sadd.s32 %s245, 1
      %p249 = scmp.eq.s32.totalorder %s22, 1
      %p250 = scmp.ne.s32.totalorder %s245, %s247
      %p251 = scmp.eq.s32.totalorder %s22, 0
      %p252 = por %p250, %p251
      %p253 = scmp.ne.s32.totalorder %s245, %s247
      %p254 = scmp.eq.s32.totalorder %s27, 1
      %p255 = por %p253, %p254
      %p256 = scmp.ne.s32.totalorder %s247, %s248
      %p257 = scmp.eq.s32.totalorder %s27, 0
      %p258 = por %p256, %p257
      %p259 = scmp.ne.s32.totalorder %s247, %s248
      %p260 = scmp.eq.s32.totalorder %s28, 1
      %p261 = por %p259, %p260
      %p263 = scmp.ne.s32.totalorder %s248, %s262
      %p264 = scmp.eq.s32.totalorder %s28, 0
      %p265 = por %p263, %p264
      %s267 = sadd.s32 %s266, 1
      %p270 = scmp.eq.s32.totalorder %s22, 1
      %p271 = scmp.ne.s32.totalorder %s266, %s268
      %p272 = scmp.eq.s32.totalorder %s22, 0
      %p273 = por %p271, %p272
      %p274 = scmp.ne.s32.totalorder %s266, %s268
      %p275 = scmp.eq.s32.totalorder %s27, 1
      %p276 = por %p274, %p275
      %p277 = scmp.ne.s32.totalorder %s268, %s269
      %p278 = scmp.eq.s32.totalorder %s27, 0
      %p279 = por %p277, %p278
      %p280 = scmp.ne.s32.totalorder %s268, %s269
      %p281 = scmp.eq.s32.totalorder %s28, 1
      %p282 = por %p280, %p281
      %p284 = scmp.ne.s32.totalorder %s269, %s283
      %p285 = scmp.eq.s32.totalorder %s28, 0
      %p286 = por %p284, %p285
      %s288 = sadd.s32 %s287, 1
      %p291 = scmp.eq.s32.totalorder %s22, 1
      %p292 = scmp.ne.s32.totalorder %s287, %s289
      %p293 = scmp.eq.s32.totalorder %s22, 0
      %p294 = por %p292, %p293
      %p295 = scmp.ne.s32.totalorder %s287, %s289
      %p296 = scmp.eq.s32.totalorder %s27, 1
      %p297 = por %p295, %p296
      %p298 = scmp.ne.s32.totalorder %s289, %s290
      %p299 = scmp.eq.s32.totalorder %s27, 0
      %p300 = por %p298, %p299
      %p301 = scmp.ne.s32.totalorder %s289, %s290
      %p302 = scmp.eq.s32.totalorder %s28, 1
      %p303 = por %p301, %p302
      %p305 = scmp.ne.s32.totalorder %s290, %s304
      %p306 = scmp.eq.s32.totalorder %s28, 0
      %p307 = por %p305, %p306
      %s309 = sadd.s32 %s308, 1
      %p312 = scmp.eq.s32.totalorder %s22, 1
      %p313 = scmp.ne.s32.totalorder %s308, %s310
      %p314 = scmp.eq.s32.totalorder %s22, 0
      %p315 = por %p313, %p314
      %p316 = scmp.ne.s32.totalorder %s308, %s310
      %p317 = scmp.eq.s32.totalorder %s27, 1
      %p318 = por %p316, %p317
      %p319 = scmp.ne.s32.totalorder %s310, %s311
      %p320 = scmp.eq.s32.totalorder %s27, 0
      %p321 = por %p319, %p320
      %p322 = scmp.ne.s32.totalorder %s310, %s311
      %p323 = scmp.eq.s32.totalorder %s28, 1
      %p324 = por %p322, %p323
      %p326 = scmp.ne.s32.totalorder %s311, %s325
      %p327 = scmp.eq.s32.totalorder %s28, 0
      %p328 = por %p326, %p327
      %s329 = ssub.s32 %s22, %s29
      %p330 = scmp.eq.s32.totalorder %s329, 0
      %s332 = sadd.s32 %s331, 1
      %s333 = scalar_select %p330, %s331, %s332
      %p336 = pneg %p330
      %p337 = scmp.eq.s32.totalorder %s22, 1
      %p338 = por %p336, %p337
      %p339 = scmp.ne.s32.totalorder %s331, %s334
      %p340 = scmp.eq.s32.totalorder %s22, 0
      %p341 = por %p339, %p340
      %p342 = scmp.ne.s32.totalorder %s331, %s334
      %p343 = scmp.eq.s32.totalorder %s27, 1
      %p344 = por %p342, %p343
      %p345 = scmp.ne.s32.totalorder %s334, %s335
      %p346 = scmp.eq.s32.totalorder %s27, 0
      %p347 = por %p345, %p346
      %p348 = scmp.ne.s32.totalorder %s334, %s335
      %p349 = scmp.eq.s32.totalorder %s28, 1
      %p350 = por %p348, %p349
      %p352 = scmp.ne.s32.totalorder %s335, %s351
      %p353 = scmp.eq.s32.totalorder %s28, 0
      %p354 = por %p352, %p353
      %p355 = scmp.le.s32.totalorder 1, %s22
      %p356 = scmp.lt.s32.totalorder %s22, 3
      %p357 = pnand %p355, %p356
      %p358 = pneg %p357
      // Predicated region
      $region9: #{discriminator_forward.1} parent=5 // pred_check
        _
      $region10: #{discriminator_forward.1} parent=5 // pred_check_branch
        %360 = sbr.rel (%p357) target = $region12
      $region11: #{discriminator_forward.1} parent=5 // pred_region
        %s361 = ssub.s32 %s22, 1
        // Predicated region
        $region13: #{discriminator_forward.1} parent=11 // pred_check
          %p362 = pneg %p69
        $region14: #{discriminator_forward.1} parent=11 // pred_check_branch
          %364 = sbr.rel (%p362) target = $region16
        $region15: #{discriminator_forward.1} parent=11 // pred_region
          _
        $region16: #{discriminator_forward.1} parent=11 // pred_fallthru
          _
        // Predicated region
        $region17: #{discriminator_forward.1} parent=11 // pred_check
          %p365 = pneg %p90
        $region18: #{discriminator_forward.1} parent=11 // pred_check_branch
          %367 = sbr.rel (%p365) target = $region20
        $region19: #{discriminator_forward.1} parent=11 // pred_region
          _
        $region20: #{discriminator_forward.1} parent=11 // pred_fallthru
          _
        // Predicated region
        $region21: #{discriminator_forward.1} parent=11 // pred_check
          %p368 = pneg %p111
        $region22: #{discriminator_forward.1} parent=11 // pred_check_branch
          %370 = sbr.rel (%p368) target = $region24
        $region23: #{discriminator_forward.1} parent=11 // pred_region
          _
        $region24: #{discriminator_forward.1} parent=11 // pred_fallthru
          _
        // Predicated region
        $region25: #{discriminator_forward.1} parent=11 // pred_check
          %p371 = pneg %p132
        $region26: #{discriminator_forward.1} parent=11 // pred_check_branch
          %373 = sbr.rel (%p371) target = $region28
        $region27: #{discriminator_forward.1} parent=11 // pred_region
          _
        $region28: #{discriminator_forward.1} parent=11 // pred_fallthru
          _
        // Predicated region
        $region29: #{discriminator_forward.1} parent=11 // pred_check
          %p374 = pneg %p153
        $region30: #{discriminator_forward.1} parent=11 // pred_check_branch
          %376 = sbr.rel (%p374) target = $region32
        $region31: #{discriminator_forward.1} parent=11 // pred_region
          %s378 = ssub.s32 16384, 16384
          %379 = vsyncadd [#allocation3], %s378
          %s380 = sshll.u32 [#allocation2], 4
          %s381 = int_to_ptr.vmem [resolvable:$true] %s380
          %386 = dma.hbm_to_vmem [thread:$0]  %s5, 16384, %s381, [#allocation3], 128, 128, 8
        $region32: #{discriminator_forward.1} parent=11 // pred_fallthru
          _
        // Predicated region
        $region33: #{discriminator_forward.1} parent=11 // pred_check
          %p387 = pneg %p174
        $region34: #{discriminator_forward.1} parent=11 // pred_check_branch
          %389 = sbr.rel (%p387) target = $region36
        $region35: #{discriminator_forward.1} parent=11 // pred_region
          _
        $region36: #{discriminator_forward.1} parent=11 // pred_fallthru
          _
        // Predicated region
        $region37: #{discriminator_forward.1} parent=11 // pred_check
          %p390 = pneg %p195
        $region38: #{discriminator_forward.1} parent=11 // pred_check_branch
          %392 = sbr.rel (%p390) target = $region40
        $region39: #{discriminator_forward.1} parent=11 // pred_region
          _
        $region40: #{discriminator_forward.1} parent=11 // pred_fallthru
          _
        // Predicated region
        $region41: #{discriminator_forward.1} parent=11 // pred_check
          %p393 = pneg %p216
        $region42: #{discriminator_forward.1} parent=11 // pred_check_branch
          %395 = sbr.rel (%p393) target = $region44
        $region43: #{discriminator_forward.1} parent=11 // pred_region
          %s397 = ssub.s32 16384, 16384
          %398 = vsyncadd [#allocation5], %s397
          %s399 = sshll.u32 [#allocation4], 4
          %s400 = int_to_ptr.vmem [resolvable:$true] %s399
          %405 = dma.hbm_to_vmem [thread:$0]  %s8, 16384, %s400, [#allocation5], 128, 128, 8
        $region44: #{discriminator_forward.1} parent=11 // pred_fallthru
          _
        // Predicated region
        $region45: #{discriminator_forward.1} parent=11 // pred_check
          %p406 = pneg %p237
        $region46: #{discriminator_forward.1} parent=11 // pred_check_branch
          %408 = sbr.rel (%p406) target = $region48
        $region47: #{discriminator_forward.1} parent=11 // pred_region
          _
        $region48: #{discriminator_forward.1} parent=11 // pred_fallthru
          _
        // Predicated region
        $region49: #{discriminator_forward.1} parent=11 // pred_check
          %p409 = pneg %p258
        $region50: #{discriminator_forward.1} parent=11 // pred_check_branch
          %411 = sbr.rel (%p409) target = $region52
        $region51: #{discriminator_forward.1} parent=11 // pred_region
          _
        $region52: #{discriminator_forward.1} parent=11 // pred_fallthru
          _
        // Predicated region
        $region53: #{discriminator_forward.1} parent=11 // pred_check
          %p412 = pneg %p279
        $region54: #{discriminator_forward.1} parent=11 // pred_check_branch
          %414 = sbr.rel (%p412) target = $region56
        $region55: #{discriminator_forward.1} parent=11 // pred_region
          %s416 = ssub.s32 16384, 16384
          %417 = vsyncadd [#allocation5], %s416
          %s418 = sshll.u32 [#allocation6], 4
          %s419 = int_to_ptr.vmem [resolvable:$true] %s418
          %424 = dma.hbm_to_vmem [thread:$0]  %s11, 16384, %s419, [#allocation5], 128, 128, 8
        $region56: #{discriminator_forward.1} parent=11 // pred_fallthru
          _
        // Predicated region
        $region57: #{discriminator_forward.1} parent=11 // pred_check
          %p425 = pneg %p300
        $region58: #{discriminator_forward.1} parent=11 // pred_check_branch
          %427 = sbr.rel (%p425) target = $region60
        $region59: #{discriminator_forward.1} parent=11 // pred_region
          _
        $region60: #{discriminator_forward.1} parent=11 // pred_fallthru
          _
        // Predicated region
        $region61: #{discriminator_forward.1} parent=11 // pred_check
          %p428 = pneg %p321
        $region62: #{discriminator_forward.1} parent=11 // pred_check_branch
          %430 = sbr.rel (%p428) target = $region64
        $region63: #{discriminator_forward.1} parent=11 // pred_region
          _
        $region64: #{discriminator_forward.1} parent=11 // pred_fallthru
          _
      $region12: #{discriminator_forward.1} parent=5 // pred_fallthru
        _
      %p431 = scmp.lt.s32.totalorder %s22, 2
      // Predicated region
      $region65: #{discriminator_forward.1} parent=5 // pred_check
        %p432 = pneg %p431
      $region66: #{discriminator_forward.1} parent=5 // pred_check_branch
        %434 = sbr.rel (%p432) target = $region68
      $region67: #{discriminator_forward.1} parent=5 // pred_region
        // Predicated region
        $region69: #{discriminator_forward.1} parent=67 // pred_check
          %p435 = pneg %p42
        $region70: #{discriminator_forward.1} parent=67 // pred_check_branch
          %437 = sbr.rel (%p435) target = $region72
        $region71: #{discriminator_forward.1} parent=67 // pred_region
          %p438 = scmp.lt.s32.totalorder %s22, 1
          %s439 = scalar_select %p438, %s22, 1
          %s440 = smul.addr %s439, 16
          %s441 = smul.addr %s440, 4
          %s442 = scalar_lea.vmem %s0, %s441
        $region72: #{discriminator_forward.1} parent=67 // pred_fallthru
          _
      $region68: #{discriminator_forward.1} parent=5 // pred_fallthru
        _
      %p443 = scmp.le.s32.totalorder 1, %s22
      %p444 = scmp.lt.s32.totalorder %s22, 3
      %p445 = pnand %p443, %p444
      %p446 = pneg %p445
      // Predicated region
      $region73: #{discriminator_forward.1} parent=5 // pred_check
        _
      $region74: #{discriminator_forward.1} parent=5 // pred_check_branch
        %448 = sbr.rel (%p445) target = $region76
      $region75: #{discriminator_forward.1} parent=5 // pred_region
        %s449 = ssub.s32 %s22, 1
        // Predicated region
        $region77: #{discriminator_forward.1} parent=75 // pred_check
          %p450 = pneg %p153
        $region78: #{discriminator_forward.1} parent=75 // pred_check_branch
          %452 = sbr.rel (%p450) target = $region80
        $region79: #{discriminator_forward.1} parent=75 // pred_region
          %453 = dma.done [#allocation3], 16384
        $region80: #{discriminator_forward.1} parent=75 // pred_fallthru
          _
        // Predicated region
        $region81: #{discriminator_forward.1} parent=75 // pred_check
          %p454 = pneg %p216
        $region82: #{discriminator_forward.1} parent=75 // pred_check_branch
          %456 = sbr.rel (%p454) target = $region84
        $region83: #{discriminator_forward.1} parent=75 // pred_region
          %457 = dma.done [#allocation5], 16384
        $region84: #{discriminator_forward.1} parent=75 // pred_fallthru
          _
        // Predicated region
        $region85: #{discriminator_forward.1} parent=75 // pred_check
          %p458 = pneg %p279
        $region86: #{discriminator_forward.1} parent=75 // pred_check_branch
          %460 = sbr.rel (%p458) target = $region88
        $region87: #{discriminator_forward.1} parent=75 // pred_region
          %461 = dma.done [#allocation5], 16384
        $region88: #{discriminator_forward.1} parent=75 // pred_fallthru
          _
        %p462 = scmp.lt.s32.totalorder %s27, 1
        %s463 = scalar_select %p462, %s27, 1
        %s464 = smul.addr %s463, 16
        %s465 = smul.addr %s464, 4
        %s466 = scalar_lea.vmem %s0, %s465
        %p467 = pneg %p48
        %p468 = pneg %p45
        %p469 = pneg %p69
        %p470 = pneg %p66
        %p471 = pneg %p90
        %p472 = pneg %p87
        %p473 = pneg %p111
        %p474 = pneg %p108
        %p475 = pneg %p132
        %p476 = pneg %p129
        %p477 = pneg %p153
        %p478 = pneg %p150
        %p479 = pneg %p174
        %p480 = pneg %p171
        %p481 = pneg %p195
        %p482 = pneg %p192
        %p483 = pneg %p216
        %p484 = pneg %p213
        %p485 = pneg %p237
        %p486 = pneg %p234
        %p487 = pneg %p258
        %p488 = pneg %p255
        %p489 = pneg %p279
        %p490 = pneg %p276
        %p491 = pneg %p300
        %p492 = pneg %p297
        %p493 = pneg %p321
        %p494 = pneg %p318
        %p495 = pneg %p347
        %p496 = pneg %p344
        %p497 = scmp.lt.s32.totalorder %s27, 1
        %s498 = scalar_select %p497, %s27, 1
        %s499 = scalar_lea.vmem %s14, %s498
        %p500 = scmp.lt.s32.totalorder %s27, 1
        %s501 = scalar_select %p500, %s27, 1
        %s502 = smul.addr %s501, 16
        %s503 = smul.addr %s502, 4
        %s504 = scalar_lea.vmem %s0, %s503
        %p505 = scmp.lt.s32.totalorder %s27, 1
        %s506 = scalar_select %p505, %s27, 1
        %s507 = scalar_lea.vmem %s14, %s506
        %v509 = vld [vmem:[%s504] sm:$0xff]
        %v510 = vld [vmem:[%s504 + $0x8] sm:$0xff]
        %v511 = vld [vmem:[%s504 + $0x10] sm:$0xff]
        %v512 = vld [vmem:[%s504 + $0x18] sm:$0xff]
        %v513 = vld [vmem:[%s504 + $0x20] sm:$0xff]
        %v514 = vld [vmem:[%s504 + $0x28] sm:$0xff]
        %v515 = vld [vmem:[%s504 + $0x30] sm:$0xff]
        %v516 = vld [vmem:[%s504 + $0x38] sm:$0xff]
        %v517 = vld [vmem:[%s1] sm:$0xf]
        %v518 = vld [vmem:[%s1 + $0x4] sm:$0xf]
        %v519 = vld [vmem:[%s1 + $0x8] sm:$0xf]
        %v520 = vld [vmem:[%s1 + $0xc] sm:$0xf]
        %v525 = vunpack.c.l.b16 %v517
        %v526 = vunpack.c.l.b16 %v518
        %v527 = vunpack.c.l.b16 %v519
        %v528 = vunpack.c.l.b16 %v520
        %v529 = vpack.c.b16 %v526, %v525
        %v530 = vpack.c.b16 %v528, %v527
        %v539 = vunpack.c.l.b16 %v509
        %v540 = vunpack.c.h.b16 %v509
        %v541 = vunpack.c.l.b16 %v510
        %v542 = vunpack.c.h.b16 %v510
        %v543 = vunpack.c.l.b16 %v511
        %v544 = vunpack.c.h.b16 %v511
        %v545 = vunpack.c.l.b16 %v512
        %v546 = vunpack.c.h.b16 %v512
        %v547 = vunpack.c.l.b16 %v513
        %v548 = vunpack.c.h.b16 %v513
        %v549 = vunpack.c.l.b16 %v514
        %v550 = vunpack.c.h.b16 %v514
        %v551 = vunpack.c.l.b16 %v515
        %v552 = vunpack.c.h.b16 %v515
        %v553 = vunpack.c.l.b16 %v516
        %v554 = vunpack.c.h.b16 %v516
        %v555 = vpack.c.b16 %v541, %v539
        %v556 = vpack.c.b16 %v542, %v540
        %v557 = vpack.c.b16 %v545, %v543
        %v558 = vpack.c.b16 %v546, %v544
        %v559 = vpack.c.b16 %v549, %v547
        %v560 = vpack.c.b16 %v550, %v548
        %v561 = vpack.c.b16 %v553, %v551
        %v562 = vpack.c.b16 %v554, %v552
        %vm571 = vcmask 523264
        %v573 = vsel %vm571, %v529, 0
        %v576 = vsel %vm571, %v530, 0
        %578 = vmatprep.subr.bf16.mxu0 %v556
        %579 = vmatpush1.bf16.msra.mxu0 %v555
        %580 = vmatprep.subr.bf16.mxu0 %v558
        %581 = vmatpush1.bf16.msra.mxu0 %v557
        %582 = vmatprep.subr.bf16.mxu0 %v560
        %583 = vmatpush1.bf16.msra.mxu0 %v559
        %584 = vmatprep.subr.bf16.mxu0 %v562
        %585 = vmatpush1.bf16.msra.mxu0 %v561
        %586 = vmatprep.subr.bf16.mxu0 0
        %587 = vmatpush1.bf16.msra.mxu0 0
        %588 = vmatprep.subr.bf16.mxu0 0
        %589 = vmatpush1.bf16.msra.mxu0 0
        %590 = vmatprep.subr.bf16.mxu0 0
        %591 = vmatpush1.bf16.msra.mxu0 0
        %592 = vmatprep.subr.bf16.mxu0 0
        %593 = vmatpush1.bf16.msra.mxu0 0
        %594 = vmatprep.subr.bf16.mxu0 0
        %595 = vmatpush1.bf16.msra.mxu0 0
        %596 = vmatprep.subr.bf16.mxu0 0
        %597 = vmatpush1.bf16.msra.mxu0 0
        %598 = vmatprep.subr.bf16.mxu0 0
        %599 = vmatpush1.bf16.msra.mxu0 0
        %600 = vmatprep.subr.bf16.mxu0 0
        %601 = vmatpush1.bf16.msra.mxu0 0
        %602 = vmatprep.subr.bf16.mxu0 0
        %603 = vmatpush1.bf16.msra.mxu0 0
        %604 = vmatprep.subr.bf16.mxu0 0
        %605 = vmatpush1.bf16.msra.mxu0 0
        %606 = vmatprep.subr.bf16.mxu0 0
        %607 = vmatpush1.bf16.msra.mxu0 0
        %608 = vmatprep.subr.bf16.mxu0 0
        %609 = vmatpush1.bf16.msra.mxu0 0
        %610 = vmatprep.mubr.bf16.mxu0 0
        %611 = vmatmul.mubr.bf16.gmra.mrb[0].mxu0 %v573
        %v612 = vpop.f32.mrb[0].mxu0
        %v613 = vadd.f32 0.0, %v612
        %v614 = vpop.f32.mrb[0].mxu0
        %v615 = vadd.f32 0.0, %v614
        %v616 = vpop.f32.mrb[0].mxu0
        %v617 = vadd.f32 0.0, %v616
        %v618 = vpop.f32.mrb[0].mxu0
        %v619 = vadd.f32 0.0, %v618
        %620 = vmatprep.mubr.bf16.mxu0 0
        %621 = vmatmul.mubr.bf16.gmra.mrb[0].mxu0 %v576
        %v622 = vpop.f32.mrb[0].mxu0
        %v623 = vadd.f32 0.0, %v622
        %v624 = vpop.f32.mrb[0].mxu0
        %v625 = vadd.f32 0.0, %v624
        %v626 = vpop.f32.mrb[0].mxu0
        %v627 = vadd.f32 0.0, %v626
        %v628 = vpop.f32.mrb[0].mxu0
        %v629 = vadd.f32 0.0, %v628
        %630 = vdwg.mxu0
        %v631 = vpack.c.bf16 %v617, %v613
        %v632 = vpack.c.bf16 %v619, %v615
        %v633 = vpack.c.bf16 %v627, %v623
        %v634 = vpack.c.bf16 %v629, %v625
        %v635 = vld [vmem:[%s2] sm:$0xff]
        %v636 = vld [vmem:[%s2 + $0x8] sm:$0xff]
        %v637 = vld [vmem:[%s2 + $0x10] sm:$0xff]
        %v638 = vld [vmem:[%s2 + $0x18] sm:$0xff]
        %v639 = vld [vmem:[%s2 + $0x20] sm:$0xff]
        %v640 = vld [vmem:[%s2 + $0x28] sm:$0xff]
        %v641 = vld [vmem:[%s2 + $0x30] sm:$0xff]
        %v642 = vld [vmem:[%s2 + $0x38] sm:$0xff]
        %v643 = vld [vmem:[%s2 + $0x40] sm:$0xff]
        %v644 = vld [vmem:[%s2 + $0x48] sm:$0xff]
        %v645 = vld [vmem:[%s2 + $0x50] sm:$0xff]
        %v646 = vld [vmem:[%s2 + $0x58] sm:$0xff]
        %v647 = vld [vmem:[%s2 + $0x60] sm:$0xff]
        %v648 = vld [vmem:[%s2 + $0x68] sm:$0xff]
        %v649 = vld [vmem:[%s2 + $0x70] sm:$0xff]
        %v650 = vld [vmem:[%s2 + $0x78] sm:$0xff]
        %v651 = vld [vmem:[%s2 + $0x80] sm:$0xff]
        %v652 = vld [vmem:[%s2 + $0x88] sm:$0xff]
        %v653 = vld [vmem:[%s2 + $0x90] sm:$0xff]
        %v654 = vld [vmem:[%s2 + $0x98] sm:$0xff]
        %v655 = vld [vmem:[%s2 + $0xa0] sm:$0xff]
        %v656 = vld [vmem:[%s2 + $0xa8] sm:$0xff]
        %v657 = vld [vmem:[%s2 + $0xb0] sm:$0xff]
        %v658 = vld [vmem:[%s2 + $0xb8] sm:$0xff]
        %v659 = vld [vmem:[%s2 + $0xc0] sm:$0xff]
        %v660 = vld [vmem:[%s2 + $0xc8] sm:$0xff]
        %v661 = vld [vmem:[%s2 + $0xd0] sm:$0xff]
        %v662 = vld [vmem:[%s2 + $0xd8] sm:$0xff]
        %v663 = vld [vmem:[%s2 + $0xe0] sm:$0xff]
        %v664 = vld [vmem:[%s2 + $0xe8] sm:$0xff]
        %v665 = vld [vmem:[%s2 + $0xf0] sm:$0xff]
        %v666 = vld [vmem:[%s2 + $0xf8] sm:$0xff]
        %s667 = scalar_lea.vmem %s1, 16
        %v668 = vld [vmem:[%s667] sm:$0xf]
        %v669 = vld [vmem:[%s667 + $0x4] sm:$0xf]
        %v670 = vld [vmem:[%s667 + $0x8] sm:$0xf]
        %v671 = vld [vmem:[%s667 + $0xc] sm:$0xf]
        %v676 = vunpack.c.l.b16 %v668
        %v677 = vunpack.c.l.b16 %v669
        %v678 = vunpack.c.l.b16 %v670
        %v679 = vunpack.c.l.b16 %v671
        %v680 = vpack.c.b16 %v677, %v676
        %v681 = vpack.c.b16 %v679, %v678
        %v683 = vsel %vm571, %v680, 0
        %v686 = vsel %vm571, %v681, 0
        %688 = vmatprep.subr.bf16.mxu0 %v556
        %689 = vmatpush1.bf16.msra.mxu0 %v555
        %690 = vmatprep.subr.bf16.mxu0 %v558
        %691 = vmatpush1.bf16.msra.mxu0 %v557
        %692 = vmatprep.subr.bf16.mxu0 %v560
        %693 = vmatpush1.bf16.msra.mxu0 %v559
        %694 = vmatprep.subr.bf16.mxu0 %v562
        %695 = vmatpush1.bf16.msra.mxu0 %v561
        %696 = vmatprep.subr.bf16.mxu0 0
        %697 = vmatpush1.bf16.msra.mxu0 0
        %698 = vmatprep.subr.bf16.mxu0 0
        %699 = vmatpush1.bf16.msra.mxu0 0
        %700 = vmatprep.subr.bf16.mxu0 0
        %701 = vmatpush1.bf16.msra.mxu0 0
        %702 = vmatprep.subr.bf16.mxu0 0
        %703 = vmatpush1.bf16.msra.mxu0 0
        %704 = vmatprep.subr.bf16.mxu0 0
        %705 = vmatpush1.bf16.msra.mxu0 0
        %706 = vmatprep.subr.bf16.mxu0 0
        %707 = vmatpush1.bf16.msra.mxu0 0
        %708 = vmatprep.subr.bf16.mxu0 0
        %709 = vmatpush1.bf16.msra.mxu0 0
        %710 = vmatprep.subr.bf16.mxu0 0
        %711 = vmatpush1.bf16.msra.mxu0 0
        %712 = vmatprep.subr.bf16.mxu0 0
        %713 = vmatpush1.bf16.msra.mxu0 0
        %714 = vmatprep.subr.bf16.mxu0 0
        %715 = vmatpush1.bf16.msra.mxu0 0
        %716 = vmatprep.subr.bf16.mxu0 0
        %717 = vmatpush1.bf16.msra.mxu0 0
        %718 = vmatprep.subr.bf16.mxu0 0
        %719 = vmatpush1.bf16.msra.mxu0 0
        %720 = vmatprep.mubr.bf16.mxu0 0
        %721 = vmatmul.mubr.bf16.gmra.mrb[0].mxu0 %v683
        %v722 = vpop.f32.mrb[0].mxu0
        %v723 = vadd.f32 0.0, %v722
        %v724 = vpop.f32.mrb[0].mxu0
        %v725 = vadd.f32 0.0, %v724
        %v726 = vpop.f32.mrb[0].mxu0
        %v727 = vadd.f32 0.0, %v726
        %v728 = vpop.f32.mrb[0].mxu0
        %v729 = vadd.f32 0.0, %v728
        %730 = vmatprep.mubr.bf16.mxu0 0
        %731 = vmatmul.mubr.bf16.gmra.mrb[0].mxu0 %v686
        %v732 = vpop.f32.mrb[0].mxu0
        %v733 = vadd.f32 0.0, %v732
        %v734 = vpop.f32.mrb[0].mxu0
        %v735 = vadd.f32 0.0, %v734
        %v736 = vpop.f32.mrb[0].mxu0
        %v737 = vadd.f32 0.0, %v736
        %v738 = vpop.f32.mrb[0].mxu0
        %v739 = vadd.f32 0.0, %v738
        %740 = vdwg.mxu0
        %v741 = vpack.c.bf16 %v727, %v723
        %v742 = vpack.c.bf16 %v729, %v725
        %v743 = vpack.c.bf16 %v737, %v733
        %v744 = vpack.c.bf16 %v739, %v735
        %s745 = scalar_lea.vmem %s2, 256
        %v746 = vld [vmem:[%s745] sm:$0xff]
        %v747 = vld [vmem:[%s745 + $0x8] sm:$0xff]
        %v748 = vld [vmem:[%s745 + $0x10] sm:$0xff]
        %v749 = vld [vmem:[%s745 + $0x18] sm:$0xff]
        %v750 = vld [vmem:[%s745 + $0x20] sm:$0xff]
        %v751 = vld [vmem:[%s745 + $0x28] sm:$0xff]
        %v752 = vld [vmem:[%s745 + $0x30] sm:$0xff]
        %v753 = vld [vmem:[%s745 + $0x38] sm:$0xff]
        %v754 = vld [vmem:[%s745 + $0x40] sm:$0xff]
        %v755 = vld [vmem:[%s745 + $0x48] sm:$0xff]
        %v756 = vld [vmem:[%s745 + $0x50] sm:$0xff]
        %v757 = vld [vmem:[%s745 + $0x58] sm:$0xff]
        %v758 = vld [vmem:[%s745 + $0x60] sm:$0xff]
        %v759 = vld [vmem:[%s745 + $0x68] sm:$0xff]
        %v760 = vld [vmem:[%s745 + $0x70] sm:$0xff]
        %v761 = vld [vmem:[%s745 + $0x78] sm:$0xff]
        %v762 = vld [vmem:[%s745 + $0x80] sm:$0xff]
        %v763 = vld [vmem:[%s745 + $0x88] sm:$0xff]
        %v764 = vld [vmem:[%s745 + $0x90] sm:$0xff]
        %v765 = vld [vmem:[%s745 + $0x98] sm:$0xff]
        %v766 = vld [vmem:[%s745 + $0xa0] sm:$0xff]
        %v767 = vld [vmem:[%s745 + $0xa8] sm:$0xff]
        %v768 = vld [vmem:[%s745 + $0xb0] sm:$0xff]
        %v769 = vld [vmem:[%s745 + $0xb8] sm:$0xff]
        %v770 = vld [vmem:[%s745 + $0xc0] sm:$0xff]
        %v771 = vld [vmem:[%s745 + $0xc8] sm:$0xff]
        %v772 = vld [vmem:[%s745 + $0xd0] sm:$0xff]
        %v773 = vld [vmem:[%s745 + $0xd8] sm:$0xff]
        %v774 = vld [vmem:[%s745 + $0xe0] sm:$0xff]
        %v775 = vld [vmem:[%s745 + $0xe8] sm:$0xff]
        %v776 = vld [vmem:[%s745 + $0xf0] sm:$0xff]
        %v777 = vld [vmem:[%s745 + $0xf8] sm:$0xff]
        %v810 = vunpack.c.l.b16 %v746
        %v811 = vunpack.c.h.b16 %v746
        %v812 = vunpack.c.l.b16 %v747
        %v813 = vunpack.c.h.b16 %v747
        %v814 = vunpack.c.l.b16 %v748
        %v815 = vunpack.c.h.b16 %v748
        %v816 = vunpack.c.l.b16 %v749
        %v817 = vunpack.c.h.b16 %v749
        %v818 = vunpack.c.l.b16 %v750
        %v819 = vunpack.c.h.b16 %v750
        %v820 = vunpack.c.l.b16 %v751
        %v821 = vunpack.c.h.b16 %v751
        %v822 = vunpack.c.l.b16 %v752
        %v823 = vunpack.c.h.b16 %v752
        %v824 = vunpack.c.l.b16 %v753
        %v825 = vunpack.c.h.b16 %v753
        %v826 = vunpack.c.l.b16 %v754
        %v827 = vunpack.c.h.b16 %v754
        %v828 = vunpack.c.l.b16 %v755
        %v829 = vunpack.c.h.b16 %v755
        %v830 = vunpack.c.l.b16 %v756
        %v831 = vunpack.c.h.b16 %v756
        %v832 = vunpack.c.l.b16 %v757
        %v833 = vunpack.c.h.b16 %v757
        %v834 = vunpack.c.l.b16 %v758
        %v835 = vunpack.c.h.b16 %v758
        %v836 = vunpack.c.l.b16 %v759
        %v837 = vunpack.c.h.b16 %v759
        %v838 = vunpack.c.l.b16 %v760
        %v839 = vunpack.c.h.b16 %v760
        %v840 = vunpack.c.l.b16 %v761
        %v841 = vunpack.c.h.b16 %v761
        %v842 = vunpack.c.l.b16 %v762
        %v843 = vunpack.c.h.b16 %v762
        %v844 = vunpack.c.l.b16 %v763
        %v845 = vunpack.c.h.b16 %v763
        %v846 = vunpack.c.l.b16 %v764
        %v847 = vunpack.c.h.b16 %v764
        %v848 = vunpack.c.l.b16 %v765
        %v849 = vunpack.c.h.b16 %v765
        %v850 = vunpack.c.l.b16 %v766
        %v851 = vunpack.c.h.b16 %v766
        %v852 = vunpack.c.l.b16 %v767
        %v853 = vunpack.c.h.b16 %v767
        %v854 = vunpack.c.l.b16 %v768
        %v855 = vunpack.c.h.b16 %v768
        %v856 = vunpack.c.l.b16 %v769
        %v857 = vunpack.c.h.b16 %v769
        %v858 = vunpack.c.l.b16 %v770
        %v859 = vunpack.c.h.b16 %v770
        %v860 = vunpack.c.l.b16 %v771
        %v861 = vunpack.c.h.b16 %v771
        %v862 = vunpack.c.l.b16 %v772
        %v863 = vunpack.c.h.b16 %v772
        %v864 = vunpack.c.l.b16 %v773
        %v865 = vunpack.c.h.b16 %v773
        %v866 = vunpack.c.l.b16 %v774
        %v867 = vunpack.c.h.b16 %v774
        %v868 = vunpack.c.l.b16 %v775
        %v869 = vunpack.c.h.b16 %v775
        %v870 = vunpack.c.l.b16 %v776
        %v871 = vunpack.c.h.b16 %v776
        %v872 = vunpack.c.l.b16 %v777
        %v873 = vunpack.c.h.b16 %v777
        %v874 = vpack.c.b16 %v812, %v810
        %v875 = vpack.c.b16 %v813, %v811
        %v876 = vpack.c.b16 %v816, %v814
        %v877 = vpack.c.b16 %v817, %v815
        %v878 = vpack.c.b16 %v820, %v818
        %v879 = vpack.c.b16 %v821, %v819
        %v880 = vpack.c.b16 %v824, %v822
        %v881 = vpack.c.b16 %v825, %v823
        %v882 = vpack.c.b16 %v828, %v826
        %v883 = vpack.c.b16 %v829, %v827
        %v884 = vpack.c.b16 %v832, %v830
        %v885 = vpack.c.b16 %v833, %v831
        %v886 = vpack.c.b16 %v836, %v834
        %v887 = vpack.c.b16 %v837, %v835
        %v888 = vpack.c.b16 %v840, %v838
        %v889 = vpack.c.b16 %v841, %v839
        %v890 = vpack.c.b16 %v844, %v842
        %v891 = vpack.c.b16 %v845, %v843
        %v892 = vpack.c.b16 %v848, %v846
        %v893 = vpack.c.b16 %v849, %v847
        %v894 = vpack.c.b16 %v852, %v850
        %v895 = vpack.c.b16 %v853, %v851
        %v896 = vpack.c.b16 %v856, %v854
        %v897 = vpack.c.b16 %v857, %v855
        %v898 = vpack.c.b16 %v860, %v858
        %v899 = vpack.c.b16 %v861, %v859
        %v900 = vpack.c.b16 %v864, %v862
        %v901 = vpack.c.b16 %v865, %v863
        %v902 = vpack.c.b16 %v868, %v866
        %v903 = vpack.c.b16 %v869, %v867
        %v904 = vpack.c.b16 %v872, %v870
        %v905 = vpack.c.b16 %v873, %v871
        %938 = vmatprep.subr.bf16.mxu0 %v875
        %939 = vmatpush1.bf16.msra.mxu0 %v874
        %940 = vmatprep.subr.bf16.mxu0 %v877
        %941 = vmatpush1.bf16.msra.mxu0 %v876
        %942 = vmatprep.subr.bf16.mxu0 %v879
        %943 = vmatpush1.bf16.msra.mxu0 %v878
        %944 = vmatprep.subr.bf16.mxu0 %v881
        %945 = vmatpush1.bf16.msra.mxu0 %v880
        %946 = vmatprep.subr.bf16.mxu0 %v883
        %947 = vmatpush1.bf16.msra.mxu0 %v882
        %948 = vmatprep.subr.bf16.mxu0 %v885
        %949 = vmatpush1.bf16.msra.mxu0 %v884
        %950 = vmatprep.subr.bf16.mxu0 %v887
        %951 = vmatpush1.bf16.msra.mxu0 %v886
        %952 = vmatprep.subr.bf16.mxu0 %v889
        %953 = vmatpush1.bf16.msra.mxu0 %v888
        %954 = vmatprep.subr.bf16.mxu0 %v891
        %955 = vmatpush1.bf16.msra.mxu0 %v890
        %956 = vmatprep.subr.bf16.mxu0 %v893
        %957 = vmatpush1.bf16.msra.mxu0 %v892
        %958 = vmatprep.subr.bf16.mxu0 %v895
        %959 = vmatpush1.bf16.msra.mxu0 %v894
        %960 = vmatprep.subr.bf16.mxu0 %v897
        %961 = vmatpush1.bf16.msra.mxu0 %v896
        %962 = vmatprep.subr.bf16.mxu0 %v899
        %963 = vmatpush1.bf16.msra.mxu0 %v898
        %964 = vmatprep.subr.bf16.mxu0 %v901
        %965 = vmatpush1.bf16.msra.mxu0 %v900
        %966 = vmatprep.subr.bf16.mxu0 %v903
        %967 = vmatpush1.bf16.msra.mxu0 %v902
        %968 = vmatprep.subr.bf16.mxu0 %v905
        %969 = vmatpush1.bf16.msra.mxu0 %v904
        %970 = vmatprep.mubr.bf16.mxu0 %v742
        %971 = vmatmul.mubr.bf16.gmra.mrb[0].mxu0 %v741
        %v972 = vpop.f32.mrb[0].mxu0
        %v973 = vadd.f32 0.0, %v972
        %v974 = vpop.f32.mrb[0].mxu0
        %v975 = vadd.f32 0.0, %v974
        %v976 = vpop.f32.mrb[0].mxu0
        %v977 = vadd.f32 0.0, %v976
        %v978 = vpop.f32.mrb[0].mxu0
        %v979 = vadd.f32 0.0, %v978
        %980 = vmatprep.mubr.bf16.mxu0 %v744
        %981 = vmatmul.mubr.bf16.gmra.mrb[0].mxu0 %v743
        %v982 = vpop.f32.mrb[0].mxu0
        %v983 = vadd.f32 0.0, %v982
        %v984 = vpop.f32.mrb[0].mxu0
        %v985 = vadd.f32 0.0, %v984
        %v986 = vpop.f32.mrb[0].mxu0
        %v987 = vadd.f32 0.0, %v986
        %v988 = vpop.f32.mrb[0].mxu0
        %v989 = vadd.f32 0.0, %v988
        %990 = vdwg.mxu0
        %v1023 = vunpack.c.l.b16 %v635
        %v1024 = vunpack.c.h.b16 %v635
        %v1025 = vunpack.c.l.b16 %v636
        %v1026 = vunpack.c.h.b16 %v636
        %v1027 = vunpack.c.l.b16 %v637
        %v1028 = vunpack.c.h.b16 %v637
        %v1029 = vunpack.c.l.b16 %v638
        %v1030 = vunpack.c.h.b16 %v638
        %v1031 = vunpack.c.l.b16 %v639
        %v1032 = vunpack.c.h.b16 %v639
        %v1033 = vunpack.c.l.b16 %v640
        %v1034 = vunpack.c.h.b16 %v640
        %v1035 = vunpack.c.l.b16 %v641
        %v1036 = vunpack.c.h.b16 %v641
        %v1037 = vunpack.c.l.b16 %v642
        %v1038 = vunpack.c.h.b16 %v642
        %v1039 = vunpack.c.l.b16 %v643
        %v1040 = vunpack.c.h.b16 %v643
        %v1041 = vunpack.c.l.b16 %v644
        %v1042 = vunpack.c.h.b16 %v644
        %v1043 = vunpack.c.l.b16 %v645
        %v1044 = vunpack.c.h.b16 %v645
        %v1045 = vunpack.c.l.b16 %v646
        %v1046 = vunpack.c.h.b16 %v646
        %v1047 = vunpack.c.l.b16 %v647
        %v1048 = vunpack.c.h.b16 %v647
        %v1049 = vunpack.c.l.b16 %v648
        %v1050 = vunpack.c.h.b16 %v648
        %v1051 = vunpack.c.l.b16 %v649
        %v1052 = vunpack.c.h.b16 %v649
        %v1053 = vunpack.c.l.b16 %v650
        %v1054 = vunpack.c.h.b16 %v650
        %v1055 = vunpack.c.l.b16 %v651
        %v1056 = vunpack.c.h.b16 %v651
        %v1057 = vunpack.c.l.b16 %v652
        %v1058 = vunpack.c.h.b16 %v652
        %v1059 = vunpack.c.l.b16 %v653
        %v1060 = vunpack.c.h.b16 %v653
        %v1061 = vunpack.c.l.b16 %v654
        %v1062 = vunpack.c.h.b16 %v654
        %v1063 = vunpack.c.l.b16 %v655
        %v1064 = vunpack.c.h.b16 %v655
        %v1065 = vunpack.c.l.b16 %v656
        %v1066 = vunpack.c.h.b16 %v656
        %v1067 = vunpack.c.l.b16 %v657
        %v1068 = vunpack.c.h.b16 %v657
        %v1069 = vunpack.c.l.b16 %v658
        %v1070 = vunpack.c.h.b16 %v658
        %v1071 = vunpack.c.l.b16 %v659
        %v1072 = vunpack.c.h.b16 %v659
        %v1073 = vunpack.c.l.b16 %v660
        %v1074 = vunpack.c.h.b16 %v660
        %v1075 = vunpack.c.l.b16 %v661
        %v1076 = vunpack.c.h.b16 %v661
        %v1077 = vunpack.c.l.b16 %v662
        %v1078 = vunpack.c.h.b16 %v662
        %v1079 = vunpack.c.l.b16 %v663
        %v1080 = vunpack.c.h.b16 %v663
        %v1081 = vunpack.c.l.b16 %v664
        %v1082 = vunpack.c.h.b16 %v664
        %v1083 = vunpack.c.l.b16 %v665
        %v1084 = vunpack.c.h.b16 %v665
        %v1085 = vunpack.c.l.b16 %v666
        %v1086 = vunpack.c.h.b16 %v666
        %v1087 = vpack.c.b16 %v1025, %v1023
        %v1088 = vpack.c.b16 %v1026, %v1024
        %v1089 = vpack.c.b16 %v1029, %v1027
        %v1090 = vpack.c.b16 %v1030, %v1028
        %v1091 = vpack.c.b16 %v1033, %v1031
        %v1092 = vpack.c.b16 %v1034, %v1032
        %v1093 = vpack.c.b16 %v1037, %v1035
        %v1094 = vpack.c.b16 %v1038, %v1036
        %v1095 = vpack.c.b16 %v1041, %v1039
        %v1096 = vpack.c.b16 %v1042, %v1040
        %v1097 = vpack.c.b16 %v1045, %v1043
        %v1098 = vpack.c.b16 %v1046, %v1044
        %v1099 = vpack.c.b16 %v1049, %v1047
        %v1100 = vpack.c.b16 %v1050, %v1048
        %v1101 = vpack.c.b16 %v1053, %v1051
        %v1102 = vpack.c.b16 %v1054, %v1052
        %v1103 = vpack.c.b16 %v1057, %v1055
        %v1104 = vpack.c.b16 %v1058, %v1056
        %v1105 = vpack.c.b16 %v1061, %v1059
        %v1106 = vpack.c.b16 %v1062, %v1060
        %v1107 = vpack.c.b16 %v1065, %v1063
        %v1108 = vpack.c.b16 %v1066, %v1064
        %v1109 = vpack.c.b16 %v1069, %v1067
        %v1110 = vpack.c.b16 %v1070, %v1068
        %v1111 = vpack.c.b16 %v1073, %v1071
        %v1112 = vpack.c.b16 %v1074, %v1072
        %v1113 = vpack.c.b16 %v1077, %v1075
        %v1114 = vpack.c.b16 %v1078, %v1076
        %v1115 = vpack.c.b16 %v1081, %v1079
        %v1116 = vpack.c.b16 %v1082, %v1080
        %v1117 = vpack.c.b16 %v1085, %v1083
        %v1118 = vpack.c.b16 %v1086, %v1084
        %1151 = vmatprep.subr.bf16.mxu0 %v1088
        %1152 = vmatpush1.bf16.msra.mxu0 %v1087
        %1153 = vmatprep.subr.bf16.mxu0 %v1090
        %1154 = vmatpush1.bf16.msra.mxu0 %v1089
        %1155 = vmatprep.subr.bf16.mxu0 %v1092
        %1156 = vmatpush1.bf16.msra.mxu0 %v1091
        %1157 = vmatprep.subr.bf16.mxu0 %v1094
        %1158 = vmatpush1.bf16.msra.mxu0 %v1093
        %1159 = vmatprep.subr.bf16.mxu0 %v1096
        %1160 = vmatpush1.bf16.msra.mxu0 %v1095
        %1161 = vmatprep.subr.bf16.mxu0 %v1098
        %1162 = vmatpush1.bf16.msra.mxu0 %v1097
        %1163 = vmatprep.subr.bf16.mxu0 %v1100
        %1164 = vmatpush1.bf16.msra.mxu0 %v1099
        %1165 = vmatprep.subr.bf16.mxu0 %v1102
        %1166 = vmatpush1.bf16.msra.mxu0 %v1101
        %1167 = vmatprep.subr.bf16.mxu0 %v1104
        %1168 = vmatpush1.bf16.msra.mxu0 %v1103
        %1169 = vmatprep.subr.bf16.mxu0 %v1106
        %1170 = vmatpush1.bf16.msra.mxu0 %v1105
        %1171 = vmatprep.subr.bf16.mxu0 %v1108
        %1172 = vmatpush1.bf16.msra.mxu0 %v1107
        %1173 = vmatprep.subr.bf16.mxu0 %v1110
        %1174 = vmatpush1.bf16.msra.mxu0 %v1109
        %1175 = vmatprep.subr.bf16.mxu0 %v1112
        %1176 = vmatpush1.bf16.msra.mxu0 %v1111
        %1177 = vmatprep.subr.bf16.mxu0 %v1114
        %1178 = vmatpush1.bf16.msra.mxu0 %v1113
        %1179 = vmatprep.subr.bf16.mxu0 %v1116
        %1180 = vmatpush1.bf16.msra.mxu0 %v1115
        %1181 = vmatprep.subr.bf16.mxu0 %v1118
        %1182 = vmatpush1.bf16.msra.mxu0 %v1117
        %1183 = vmatprep.mubr.bf16.mxu0 %v632
        %1184 = vmatmul.mubr.bf16.gmra.mrb[0].mxu0 %v631
        %v1185 = vpop.f32.mrb[0].mxu0
        %v1186 = vadd.f32 %v973, %v1185
        %v1187 = vpop.f32.mrb[0].mxu0
        %v1188 = vadd.f32 %v975, %v1187
        %v1189 = vpop.f32.mrb[0].mxu0
        %v1190 = vadd.f32 %v977, %v1189
        %v1191 = vpop.f32.mrb[0].mxu0
        %v1192 = vadd.f32 %v979, %v1191
        %1193 = vmatprep.mubr.bf16.mxu0 %v634
        %1194 = vmatmul.mubr.bf16.gmra.mrb[0].mxu0 %v633
        %v1195 = vpop.f32.mrb[0].mxu0
        %v1196 = vadd.f32 %v983, %v1195
        %v1197 = vpop.f32.mrb[0].mxu0
        %v1198 = vadd.f32 %v985, %v1197
        %v1199 = vpop.f32.mrb[0].mxu0
        %v1200 = vadd.f32 %v987, %v1199
        %v1201 = vpop.f32.mrb[0].mxu0
        %v1202 = vadd.f32 %v989, %v1201
        %1203 = vdwg.mxu0
        %s1204 = scalar_lea.vmem %s1, 32
        %v1205 = vld [vmem:[%s1204] sm:$0xf]
        %v1206 = vld [vmem:[%s1204 + $0x4] sm:$0xf]
        %v1207 = vld [vmem:[%s1204 + $0x8] sm:$0xf]
        %v1208 = vld [vmem:[%s1204 + $0xc] sm:$0xf]
        %v1213 = vunpack.c.l.b16 %v1205
        %v1214 = vunpack.c.l.b16 %v1206
        %v1215 = vunpack.c.l.b16 %v1207
        %v1216 = vunpack.c.l.b16 %v1208
        %v1217 = vpack.c.b16 %v1214, %v1213
        %v1218 = vpack.c.b16 %v1216, %v1215
        %v1220 = vsel %vm571, %v1217, 0
        %v1223 = vsel %vm571, %v1218, 0
        %1225 = vmatprep.subr.bf16.mxu0 %v556
        %1226 = vmatpush1.bf16.msra.mxu0 %v555
        %1227 = vmatprep.subr.bf16.mxu0 %v558
        %1228 = vmatpush1.bf16.msra.mxu0 %v557
        %1229 = vmatprep.subr.bf16.mxu0 %v560
        %1230 = vmatpush1.bf16.msra.mxu0 %v559
        %1231 = vmatprep.subr.bf16.mxu0 %v562
        %1232 = vmatpush1.bf16.msra.mxu0 %v561
        %1233 = vmatprep.subr.bf16.mxu0 0
        %1234 = vmatpush1.bf16.msra.mxu0 0
        %1235 = vmatprep.subr.bf16.mxu0 0
        %1236 = vmatpush1.bf16.msra.mxu0 0
        %1237 = vmatprep.subr.bf16.mxu0 0
        %1238 = vmatpush1.bf16.msra.mxu0 0
        %1239 = vmatprep.subr.bf16.mxu0 0
        %1240 = vmatpush1.bf16.msra.mxu0 0
        %1241 = vmatprep.subr.bf16.mxu0 0
        %1242 = vmatpush1.bf16.msra.mxu0 0
        %1243 = vmatprep.subr.bf16.mxu0 0
        %1244 = vmatpush1.bf16.msra.mxu0 0
        %1245 = vmatprep.subr.bf16.mxu0 0
        %1246 = vmatpush1.bf16.msra.mxu0 0
        %1247 = vmatprep.subr.bf16.mxu0 0
        %1248 = vmatpush1.bf16.msra.mxu0 0
        %1249 = vmatprep.subr.bf16.mxu0 0
        %1250 = vmatpush1.bf16.msra.mxu0 0
        %1251 = vmatprep.subr.bf16.mxu0 0
        %1252 = vmatpush1.bf16.msra.mxu0 0
        %1253 = vmatprep.subr.bf16.mxu0 0
        %1254 = vmatpush1.bf16.msra.mxu0 0
        %1255 = vmatprep.subr.bf16.mxu0 0
        %1256 = vmatpush1.bf16.msra.mxu0 0
        %1257 = vmatprep.mubr.bf16.mxu0 0
        %1258 = vmatmul.mubr.bf16.gmra.mrb[0].mxu0 %v1220
        %v1259 = vpop.f32.mrb[0].mxu0
        %v1260 = vadd.f32 0.0, %v1259
        %v1261 = vpop.f32.mrb[0].mxu0
        %v1262 = vadd.f32 0.0, %v1261
        %v1263 = vpop.f32.mrb[0].mxu0
        %v1264 = vadd.f32 0.0, %v1263
        %v1265 = vpop.f32.mrb[0].mxu0
        %v1266 = vadd.f32 0.0, %v1265
        %1267 = vmatprep.mubr.bf16.mxu0 0
        %1268 = vmatmul.mubr.bf16.gmra.mrb[0].mxu0 %v1223
        %v1269 = vpop.f32.mrb[0].mxu0
        %v1270 = vadd.f32 0.0, %v1269
        %v1271 = vpop.f32.mrb[0].mxu0
        %v1272 = vadd.f32 0.0, %v1271
        %v1273 = vpop.f32.mrb[0].mxu0
        %v1274 = vadd.f32 0.0, %v1273
        %v1275 = vpop.f32.mrb[0].mxu0
        %v1276 = vadd.f32 0.0, %v1275
        %1277 = vdwg.mxu0
        %v1278 = vpack.c.bf16 %v1264, %v1260
        %v1279 = vpack.c.bf16 %v1266, %v1262
        %v1280 = vpack.c.bf16 %v1274, %v1270
        %v1281 = vpack.c.bf16 %v1276, %v1272
        %s1282 = scalar_lea.vmem %s2, 512
        %v1283 = vld [vmem:[%s1282] sm:$0xff]
        %v1284 = vld [vmem:[%s1282 + $0x8] sm:$0xff]
        %v1285 = vld [vmem:[%s1282 + $0x10] sm:$0xff]
        %v1286 = vld [vmem:[%s1282 + $0x18] sm:$0xff]
        %v1287 = vld [vmem:[%s1282 + $0x20] sm:$0xff]
        %v1288 = vld [vmem:[%s1282 + $0x28] sm:$0xff]
        %v1289 = vld [vmem:[%s1282 + $0x30] sm:$0xff]
        %v1290 = vld [vmem:[%s1282 + $0x38] sm:$0xff]
        %v1291 = vld [vmem:[%s1282 + $0x40] sm:$0xff]
        %v1292 = vld [vmem:[%s1282 + $0x48] sm:$0xff]
        %v1293 = vld [vmem:[%s1282 + $0x50] sm:$0xff]
        %v1294 = vld [vmem:[%s1282 + $0x58] sm:$0xff]
        %v1295 = vld [vmem:[%s1282 + $0x60] sm:$0xff]
        %v1296 = vld [vmem:[%s1282 + $0x68] sm:$0xff]
        %v1297 = vld [vmem:[%s1282 + $0x70] sm:$0xff]
        %v1298 = vld [vmem:[%s1282 + $0x78] sm:$0xff]
        %v1299 = vld [vmem:[%s1282 + $0x80] sm:$0xff]
        %v1300 = vld [vmem:[%s1282 + $0x88] sm:$0xff]
        %v1301 = vld [vmem:[%s1282 + $0x90] sm:$0xff]
        %v1302 = vld [vmem:[%s1282 + $0x98] sm:$0xff]
        %v1303 = vld [vmem:[%s1282 + $0xa0] sm:$0xff]
        %v1304 = vld [vmem:[%s1282 + $0xa8] sm:$0xff]
        %v1305 = vld [vmem:[%s1282 + $0xb0] sm:$0xff]
        %v1306 = vld [vmem:[%s1282 + $0xb8] sm:$0xff]
        %v1307 = vld [vmem:[%s1282 + $0xc0] sm:$0xff]
        %v1308 = vld [vmem:[%s1282 + $0xc8] sm:$0xff]
        %v1309 = vld [vmem:[%s1282 + $0xd0] sm:$0xff]
        %v1310 = vld [vmem:[%s1282 + $0xd8] sm:$0xff]
        %v1311 = vld [vmem:[%s1282 + $0xe0] sm:$0xff]
        %v1312 = vld [vmem:[%s1282 + $0xe8] sm:$0xff]
        %v1313 = vld [vmem:[%s1282 + $0xf0] sm:$0xff]
        %v1314 = vld [vmem:[%s1282 + $0xf8] sm:$0xff]
        %v1347 = vunpack.c.l.b16 %v1283
        %v1348 = vunpack.c.h.b16 %v1283
        %v1349 = vunpack.c.l.b16 %v1284
        %v1350 = vunpack.c.h.b16 %v1284
        %v1351 = vunpack.c.l.b16 %v1285
        %v1352 = vunpack.c.h.b16 %v1285
        %v1353 = vunpack.c.l.b16 %v1286
        %v1354 = vunpack.c.h.b16 %v1286
        %v1355 = vunpack.c.l.b16 %v1287
        %v1356 = vunpack.c.h.b16 %v1287
        %v1357 = vunpack.c.l.b16 %v1288
        %v1358 = vunpack.c.h.b16 %v1288
        %v1359 = vunpack.c.l.b16 %v1289
        %v1360 = vunpack.c.h.b16 %v1289
        %v1361 = vunpack.c.l.b16 %v1290
        %v1362 = vunpack.c.h.b16 %v1290
        %v1363 = vunpack.c.l.b16 %v1291
        %v1364 = vunpack.c.h.b16 %v1291
        %v1365 = vunpack.c.l.b16 %v1292
        %v1366 = vunpack.c.h.b16 %v1292
        %v1367 = vunpack.c.l.b16 %v1293
        %v1368 = vunpack.c.h.b16 %v1293
        %v1369 = vunpack.c.l.b16 %v1294
        %v1370 = vunpack.c.h.b16 %v1294
        %v1371 = vunpack.c.l.b16 %v1295
        %v1372 = vunpack.c.h.b16 %v1295
        %v1373 = vunpack.c.l.b16 %v1296
        %v1374 = vunpack.c.h.b16 %v1296
        %v1375 = vunpack.c.l.b16 %v1297
        %v1376 = vunpack.c.h.b16 %v1297
        %v1377 = vunpack.c.l.b16 %v1298
        %v1378 = vunpack.c.h.b16 %v1298
        %v1379 = vunpack.c.l.b16 %v1299
        %v1380 = vunpack.c.h.b16 %v1299
        %v1381 = vunpack.c.l.b16 %v1300
        %v1382 = vunpack.c.h.b16 %v1300
        %v1383 = vunpack.c.l.b16 %v1301
        %v1384 = vunpack.c.h.b16 %v1301
        %v1385 = vunpack.c.l.b16 %v1302
        %v1386 = vunpack.c.h.b16 %v1302
        %v1387 = vunpack.c.l.b16 %v1303
        %v1388 = vunpack.c.h.b16 %v1303
        %v1389 = vunpack.c.l.b16 %v1304
        %v1390 = vunpack.c.h.b16 %v1304
        %v1391 = vunpack.c.l.b16 %v1305
        %v1392 = vunpack.c.h.b16 %v1305
        %v1393 = vunpack.c.l.b16 %v1306
        %v1394 = vunpack.c.h.b16 %v1306
        %v1395 = vunpack.c.l.b16 %v1307
        %v1396 = vunpack.c.h.b16 %v1307
        %v1397 = vunpack.c.l.b16 %v1308
        %v1398 = vunpack.c.h.b16 %v1308
        %v1399 = vunpack.c.l.b16 %v1309
        %v1400 = vunpack.c.h.b16 %v1309
        %v1401 = vunpack.c.l.b16 %v1310
        %v1402 = vunpack.c.h.b16 %v1310
        %v1403 = vunpack.c.l.b16 %v1311
        %v1404 = vunpack.c.h.b16 %v1311
        %v1405 = vunpack.c.l.b16 %v1312
        %v1406 = vunpack.c.h.b16 %v1312
        %v1407 = vunpack.c.l.b16 %v1313
        %v1408 = vunpack.c.h.b16 %v1313
        %v1409 = vunpack.c.l.b16 %v1314
        %v1410 = vunpack.c.h.b16 %v1314
        %v1411 = vpack.c.b16 %v1349, %v1347
        %v1412 = vpack.c.b16 %v1350, %v1348
        %v1413 = vpack.c.b16 %v1353, %v1351
        %v1414 = vpack.c.b16 %v1354, %v1352
        %v1415 = vpack.c.b16 %v1357, %v1355
        %v1416 = vpack.c.b16 %v1358, %v1356
        %v1417 = vpack.c.b16 %v1361, %v1359
        %v1418 = vpack.c.b16 %v1362, %v1360
        %v1419 = vpack.c.b16 %v1365, %v1363
        %v1420 = vpack.c.b16 %v1366, %v1364
        %v1421 = vpack.c.b16 %v1369, %v1367
        %v1422 = vpack.c.b16 %v1370, %v1368
        %v1423 = vpack.c.b16 %v1373, %v1371
        %v1424 = vpack.c.b16 %v1374, %v1372
        %v1425 = vpack.c.b16 %v1377, %v1375
        %v1426 = vpack.c.b16 %v1378, %v1376
        %v1427 = vpack.c.b16 %v1381, %v1379
        %v1428 = vpack.c.b16 %v1382, %v1380
        %v1429 = vpack.c.b16 %v1385, %v1383
        %v1430 = vpack.c.b16 %v1386, %v1384
        %v1431 = vpack.c.b16 %v1389, %v1387
        %v1432 = vpack.c.b16 %v1390, %v1388
        %v1433 = vpack.c.b16 %v1393, %v1391
        %v1434 = vpack.c.b16 %v1394, %v1392
        %v1435 = vpack.c.b16 %v1397, %v1395
        %v1436 = vpack.c.b16 %v1398, %v1396
        %v1437 = vpack.c.b16 %v1401, %v1399
        %v1438 = vpack.c.b16 %v1402, %v1400
        %v1439 = vpack.c.b16 %v1405, %v1403
        %v1440 = vpack.c.b16 %v1406, %v1404
        %v1441 = vpack.c.b16 %v1409, %v1407
        %v1442 = vpack.c.b16 %v1410, %v1408
        %1475 = vmatprep.subr.bf16.mxu0 %v1412
        %1476 = vmatpush1.bf16.msra.mxu0 %v1411
        %1477 = vmatprep.subr.bf16.mxu0 %v1414
        %1478 = vmatpush1.bf16.msra.mxu0 %v1413
        %1479 = vmatprep.subr.bf16.mxu0 %v1416
        %1480 = vmatpush1.bf16.msra.mxu0 %v1415
        %1481 = vmatprep.subr.bf16.mxu0 %v1418
        %1482 = vmatpush1.bf16.msra.mxu0 %v1417
        %1483 = vmatprep.subr.bf16.mxu0 %v1420
        %1484 = vmatpush1.bf16.msra.mxu0 %v1419
        %1485 = vmatprep.subr.bf16.mxu0 %v1422
        %1486 = vmatpush1.bf16.msra.mxu0 %v1421
        %1487 = vmatprep.subr.bf16.mxu0 %v1424
        %1488 = vmatpush1.bf16.msra.mxu0 %v1423
        %1489 = vmatprep.subr.bf16.mxu0 %v1426
        %1490 = vmatpush1.bf16.msra.mxu0 %v1425
        %1491 = vmatprep.subr.bf16.mxu0 %v1428
        %1492 = vmatpush1.bf16.msra.mxu0 %v1427
        %1493 = vmatprep.subr.bf16.mxu0 %v1430
        %1494 = vmatpush1.bf16.msra.mxu0 %v1429
        %1495 = vmatprep.subr.bf16.mxu0 %v1432
        %1496 = vmatpush1.bf16.msra.mxu0 %v1431
        %1497 = vmatprep.subr.bf16.mxu0 %v1434
        %1498 = vmatpush1.bf16.msra.mxu0 %v1433
        %1499 = vmatprep.subr.bf16.mxu0 %v1436
        %1500 = vmatpush1.bf16.msra.mxu0 %v1435
        %1501 = vmatprep.subr.bf16.mxu0 %v1438
        %1502 = vmatpush1.bf16.msra.mxu0 %v1437
        %1503 = vmatprep.subr.bf16.mxu0 %v1440
        %1504 = vmatpush1.bf16.msra.mxu0 %v1439
        %1505 = vmatprep.subr.bf16.mxu0 %v1442
        %1506 = vmatpush1.bf16.msra.mxu0 %v1441
        %1507 = vmatprep.mubr.bf16.mxu0 %v1279
        %1508 = vmatmul.mubr.bf16.gmra.mrb[0].mxu0 %v1278
        %v1509 = vpop.f32.mrb[0].mxu0
        %v1510 = vadd.f32 0.0, %v1509
        %v1511 = vpop.f32.mrb[0].mxu0
        %v1512 = vadd.f32 0.0, %v1511
        %v1513 = vpop.f32.mrb[0].mxu0
        %v1514 = vadd.f32 0.0, %v1513
        %v1515 = vpop.f32.mrb[0].mxu0
        %v1516 = vadd.f32 0.0, %v1515
        %1517 = vmatprep.mubr.bf16.mxu0 %v1281
        %1518 = vmatmul.mubr.bf16.gmra.mrb[0].mxu0 %v1280
        %v1519 = vpop.f32.mrb[0].mxu0
        %v1520 = vadd.f32 0.0, %v1519
        %v1521 = vpop.f32.mrb[0].mxu0
        %v1522 = vadd.f32 0.0, %v1521
        %v1523 = vpop.f32.mrb[0].mxu0
        %v1524 = vadd.f32 0.0, %v1523
        %v1525 = vpop.f32.mrb[0].mxu0
        %v1526 = vadd.f32 0.0, %v1525
        %1527 = vdwg.mxu0
        %v1528 = vadd.f32 %v1186, %v1510
        %v1529 = vadd.f32 %v1188, %v1512
        %v1530 = vadd.f32 %v1190, %v1514
        %v1531 = vadd.f32 %v1192, %v1516
        %v1532 = vadd.f32 %v1196, %v1520
        %v1533 = vadd.f32 %v1198, %v1522
        %v1534 = vadd.f32 %v1200, %v1524
        %v1535 = vadd.f32 %v1202, %v1526
        %s1536 = scalar_lea.vmem %s1, 48
        %v1537 = vld [vmem:[%s1536] sm:$0xf]
        %v1538 = vld [vmem:[%s1536 + $0x4] sm:$0xf]
        %v1539 = vld [vmem:[%s1536 + $0x8] sm:$0xf]
        %v1540 = vld [vmem:[%s1536 + $0xc] sm:$0xf]
        %v1545 = vunpack.c.l.b16 %v1537
        %v1546 = vunpack.c.l.b16 %v1538
        %v1547 = vunpack.c.l.b16 %v1539
        %v1548 = vunpack.c.l.b16 %v1540
        %v1549 = vpack.c.b16 %v1546, %v1545
        %v1550 = vpack.c.b16 %v1548, %v1547
        %v1552 = vsel %vm571, %v1549, 0
        %v1555 = vsel %vm571, %v1550, 0
        %1557 = vmatprep.subr.bf16.mxu0 %v556
        %1558 = vmatpush1.bf16.msra.mxu0 %v555
        %1559 = vmatprep.subr.bf16.mxu0 %v558
        %1560 = vmatpush1.bf16.msra.mxu0 %v557
        %1561 = vmatprep.subr.bf16.mxu0 %v560
        %1562 = vmatpush1.bf16.msra.mxu0 %v559
        %1563 = vmatprep.subr.bf16.mxu0 %v562
        %1564 = vmatpush1.bf16.msra.mxu0 %v561
        %1565 = vmatprep.subr.bf16.mxu0 0
        %1566 = vmatpush1.bf16.msra.mxu0 0
        %1567 = vmatprep.subr.bf16.mxu0 0
        %1568 = vmatpush1.bf16.msra.mxu0 0
        %1569 = vmatprep.subr.bf16.mxu0 0
        %1570 = vmatpush1.bf16.msra.mxu0 0
        %1571 = vmatprep.subr.bf16.mxu0 0
        %1572 = vmatpush1.bf16.msra.mxu0 0
        %1573 = vmatprep.subr.bf16.mxu0 0
        %1574 = vmatpush1.bf16.msra.mxu0 0
        %1575 = vmatprep.subr.bf16.mxu0 0
        %1576 = vmatpush1.bf16.msra.mxu0 0
        %1577 = vmatprep.subr.bf16.mxu0 0
        %1578 = vmatpush1.bf16.msra.mxu0 0
        %1579 = vmatprep.subr.bf16.mxu0 0
        %1580 = vmatpush1.bf16.msra.mxu0 0
        %1581 = vmatprep.subr.bf16.mxu0 0
        %1582 = vmatpush1.bf16.msra.mxu0 0
        %1583 = vmatprep.subr.bf16.mxu0 0
        %1584 = vmatpush1.bf16.msra.mxu0 0
        %1585 = vmatprep.subr.bf16.mxu0 0
        %1586 = vmatpush1.bf16.msra.mxu0 0
        %1587 = vmatprep.subr.bf16.mxu0 0
        %1588 = vmatpush1.bf16.msra.mxu0 0
        %1589 = vmatprep.mubr.bf16.mxu0 0
        %1590 = vmatmul.mubr.bf16.gmra.mrb[0].mxu0 %v1552
        %v1591 = vpop.f32.mrb[0].mxu0
        %v1592 = vadd.f32 0.0, %v1591
        %v1593 = vpop.f32.mrb[0].mxu0
        %v1594 = vadd.f32 0.0, %v1593
        %v1595 = vpop.f32.mrb[0].mxu0
        %v1596 = vadd.f32 0.0, %v1595
        %v1597 = vpop.f32.mrb[0].mxu0
        %v1598 = vadd.f32 0.0, %v1597
        %1599 = vmatprep.mubr.bf16.mxu0 0
        %1600 = vmatmul.mubr.bf16.gmra.mrb[0].mxu0 %v1555
        %v1601 = vpop.f32.mrb[0].mxu0
        %v1602 = vadd.f32 0.0, %v1601
        %v1603 = vpop.f32.mrb[0].mxu0
        %v1604 = vadd.f32 0.0, %v1603
        %v1605 = vpop.f32.mrb[0].mxu0
        %v1606 = vadd.f32 0.0, %v1605
        %v1607 = vpop.f32.mrb[0].mxu0
        %v1608 = vadd.f32 0.0, %v1607
        %1609 = vdwg.mxu0
        %v1610 = vpack.c.bf16 %v1596, %v1592
        %v1611 = vpack.c.bf16 %v1598, %v1594
        %v1612 = vpack.c.bf16 %v1606, %v1602
        %v1613 = vpack.c.bf16 %v1608, %v1604
        %s1614 = scalar_lea.vmem %s2, 768
        %v1615 = vld [vmem:[%s1614] sm:$0xff]
        %v1616 = vld [vmem:[%s1614 + $0x8] sm:$0xff]
        %v1617 = vld [vmem:[%s1614 + $0x10] sm:$0xff]
        %v1618 = vld [vmem:[%s1614 + $0x18] sm:$0xff]
        %v1619 = vld [vmem:[%s1614 + $0x20] sm:$0xff]
        %v1620 = vld [vmem:[%s1614 + $0x28] sm:$0xff]
        %v1621 = vld [vmem:[%s1614 + $0x30] sm:$0xff]
        %v1622 = vld [vmem:[%s1614 + $0x38] sm:$0xff]
        %v1623 = vld [vmem:[%s1614 + $0x40] sm:$0xff]
        %v1624 = vld [vmem:[%s1614 + $0x48] sm:$0xff]
        %v1625 = vld [vmem:[%s1614 + $0x50] sm:$0xff]
        %v1626 = vld [vmem:[%s1614 + $0x58] sm:$0xff]
        %v1627 = vld [vmem:[%s1614 + $0x60] sm:$0xff]
        %v1628 = vld [vmem:[%s1614 + $0x68] sm:$0xff]
        %v1629 = vld [vmem:[%s1614 + $0x70] sm:$0xff]
        %v1630 = vld [vmem:[%s1614 + $0x78] sm:$0xff]
        %v1631 = vld [vmem:[%s1614 + $0x80] sm:$0xff]
        %v1632 = vld [vmem:[%s1614 + $0x88] sm:$0xff]
        %v1633 = vld [vmem:[%s1614 + $0x90] sm:$0xff]
        %v1634 = vld [vmem:[%s1614 + $0x98] sm:$0xff]
        %v1635 = vld [vmem:[%s1614 + $0xa0] sm:$0xff]
        %v1636 = vld [vmem:[%s1614 + $0xa8] sm:$0xff]
        %v1637 = vld [vmem:[%s1614 + $0xb0] sm:$0xff]
        %v1638 = vld [vmem:[%s1614 + $0xb8] sm:$0xff]
        %v1639 = vld [vmem:[%s1614 + $0xc0] sm:$0xff]
        %v1640 = vld [vmem:[%s1614 + $0xc8] sm:$0xff]
        %v1641 = vld [vmem:[%s1614 + $0xd0] sm:$0xff]
        %v1642 = vld [vmem:[%s1614 + $0xd8] sm:$0xff]
        %v1643 = vld [vmem:[%s1614 + $0xe0] sm:$0xff]
        %v1644 = vld [vmem:[%s1614 + $0xe8] sm:$0xff]
        %v1645 = vld [vmem:[%s1614 + $0xf0] sm:$0xff]
        %v1646 = vld [vmem:[%s1614 + $0xf8] sm:$0xff]
        %v1679 = vunpack.c.l.b16 %v1615
        %v1680 = vunpack.c.h.b16 %v1615
        %v1681 = vunpack.c.l.b16 %v1616
        %v1682 = vunpack.c.h.b16 %v1616
        %v1683 = vunpack.c.l.b16 %v1617
        %v1684 = vunpack.c.h.b16 %v1617
        %v1685 = vunpack.c.l.b16 %v1618
        %v1686 = vunpack.c.h.b16 %v1618
        %v1687 = vunpack.c.l.b16 %v1619
        %v1688 = vunpack.c.h.b16 %v1619
        %v1689 = vunpack.c.l.b16 %v1620
        %v1690 = vunpack.c.h.b16 %v1620
        %v1691 = vunpack.c.l.b16 %v1621
        %v1692 = vunpack.c.h.b16 %v1621
        %v1693 = vunpack.c.l.b16 %v1622
        %v1694 = vunpack.c.h.b16 %v1622
        %v1695 = vunpack.c.l.b16 %v1623
        %v1696 = vunpack.c.h.b16 %v1623
        %v1697 = vunpack.c.l.b16 %v1624
        %v1698 = vunpack.c.h.b16 %v1624
        %v1699 = vunpack.c.l.b16 %v1625
        %v1700 = vunpack.c.h.b16 %v1625
        %v1701 = vunpack.c.l.b16 %v1626
        %v1702 = vunpack.c.h.b16 %v1626
        %v1703 = vunpack.c.l.b16 %v1627
        %v1704 = vunpack.c.h.b16 %v1627
        %v1705 = vunpack.c.l.b16 %v1628
        %v1706 = vunpack.c.h.b16 %v1628
        %v1707 = vunpack.c.l.b16 %v1629
        %v1708 = vunpack.c.h.b16 %v1629
        %v1709 = vunpack.c.l.b16 %v1630
        %v1710 = vunpack.c.h.b16 %v1630
        %v1711 = vunpack.c.l.b16 %v1631
        %v1712 = vunpack.c.h.b16 %v1631
        %v1713 = vunpack.c.l.b16 %v1632
        %v1714 = vunpack.c.h.b16 %v1632
        %v1715 = vunpack.c.l.b16 %v1633
        %v1716 = vunpack.c.h.b16 %v1633
        %v1717 = vunpack.c.l.b16 %v1634
        %v1718 = vunpack.c.h.b16 %v1634
        %v1719 = vunpack.c.l.b16 %v1635
        %v1720 = vunpack.c.h.b16 %v1635
        %v1721 = vunpack.c.l.b16 %v1636
        %v1722 = vunpack.c.h.b16 %v1636
        %v1723 = vunpack.c.l.b16 %v1637
        %v1724 = vunpack.c.h.b16 %v1637
        %v1725 = vunpack.c.l.b16 %v1638
        %v1726 = vunpack.c.h.b16 %v1638
        %v1727 = vunpack.c.l.b16 %v1639
        %v1728 = vunpack.c.h.b16 %v1639
        %v1729 = vunpack.c.l.b16 %v1640
        %v1730 = vunpack.c.h.b16 %v1640
        %v1731 = vunpack.c.l.b16 %v1641
        %v1732 = vunpack.c.h.b16 %v1641
        %v1733 = vunpack.c.l.b16 %v1642
        %v1734 = vunpack.c.h.b16 %v1642
        %v1735 = vunpack.c.l.b16 %v1643
        %v1736 = vunpack.c.h.b16 %v1643
        %v1737 = vunpack.c.l.b16 %v1644
        %v1738 = vunpack.c.h.b16 %v1644
        %v1739 = vunpack.c.l.b16 %v1645
        %v1740 = vunpack.c.h.b16 %v1645
        %v1741 = vunpack.c.l.b16 %v1646
        %v1742 = vunpack.c.h.b16 %v1646
        %v1743 = vpack.c.b16 %v1681, %v1679
        %v1744 = vpack.c.b16 %v1682, %v1680
        %v1745 = vpack.c.b16 %v1685, %v1683
        %v1746 = vpack.c.b16 %v1686, %v1684
        %v1747 = vpack.c.b16 %v1689, %v1687
        %v1748 = vpack.c.b16 %v1690, %v1688
        %v1749 = vpack.c.b16 %v1693, %v1691
        %v1750 = vpack.c.b16 %v1694, %v1692
        %v1751 = vpack.c.b16 %v1697, %v1695
        %v1752 = vpack.c.b16 %v1698, %v1696
        %v1753 = vpack.c.b16 %v1701, %v1699
        %v1754 = vpack.c.b16 %v1702, %v1700
        %v1755 = vpack.c.b16 %v1705, %v1703
        %v1756 = vpack.c.b16 %v1706, %v1704
        %v1757 = vpack.c.b16 %v1709, %v1707
        %v1758 = vpack.c.b16 %v1710, %v1708
        %v1759 = vpack.c.b16 %v1713, %v1711
        %v1760 = vpack.c.b16 %v1714, %v1712
        %v1761 = vpack.c.b16 %v1717, %v1715
        %v1762 = vpack.c.b16 %v1718, %v1716
        %v1763 = vpack.c.b16 %v1721, %v1719
        %v1764 = vpack.c.b16 %v1722, %v1720
        %v1765 = vpack.c.b16 %v1725, %v1723
        %v1766 = vpack.c.b16 %v1726, %v1724
        %v1767 = vpack.c.b16 %v1729, %v1727
        %v1768 = vpack.c.b16 %v1730, %v1728
        %v1769 = vpack.c.b16 %v1733, %v1731
        %v1770 = vpack.c.b16 %v1734, %v1732
        %v1771 = vpack.c.b16 %v1737, %v1735
        %v1772 = vpack.c.b16 %v1738, %v1736
        %v1773 = vpack.c.b16 %v1741, %v1739
        %v1774 = vpack.c.b16 %v1742, %v1740
        %1807 = vmatprep.subr.bf16.mxu0 %v1744
        %1808 = vmatpush1.bf16.msra.mxu0 %v1743
        %1809 = vmatprep.subr.bf16.mxu0 %v1746
        %1810 = vmatpush1.bf16.msra.mxu0 %v1745
        %1811 = vmatprep.subr.bf16.mxu0 %v1748
        %1812 = vmatpush1.bf16.msra.mxu0 %v1747
        %1813 = vmatprep.subr.bf16.mxu0 %v1750
        %1814 = vmatpush1.bf16.msra.mxu0 %v1749
        %1815 = vmatprep.subr.bf16.mxu0 %v1752
        %1816 = vmatpush1.bf16.msra.mxu0 %v1751
        %1817 = vmatprep.subr.bf16.mxu0 %v1754
        %1818 = vmatpush1.bf16.msra.mxu0 %v1753
        %1819 = vmatprep.subr.bf16.mxu0 %v1756
        %1820 = vmatpush1.bf16.msra.mxu0 %v1755
        %1821 = vmatprep.subr.bf16.mxu0 %v1758
        %1822 = vmatpush1.bf16.msra.mxu0 %v1757
        %1823 = vmatprep.subr.bf16.mxu0 %v1760
        %1824 = vmatpush1.bf16.msra.mxu0 %v1759
        %1825 = vmatprep.subr.bf16.mxu0 %v1762
        %1826 = vmatpush1.bf16.msra.mxu0 %v1761
        %1827 = vmatprep.subr.bf16.mxu0 %v1764
        %1828 = vmatpush1.bf16.msra.mxu0 %v1763
        %1829 = vmatprep.subr.bf16.mxu0 %v1766
        %1830 = vmatpush1.bf16.msra.mxu0 %v1765
        %1831 = vmatprep.subr.bf16.mxu0 %v1768
        %1832 = vmatpush1.bf16.msra.mxu0 %v1767
        %1833 = vmatprep.subr.bf16.mxu0 %v1770
        %1834 = vmatpush1.bf16.msra.mxu0 %v1769
        %1835 = vmatprep.subr.bf16.mxu0 %v1772
        %1836 = vmatpush1.bf16.msra.mxu0 %v1771
        %1837 = vmatprep.subr.bf16.mxu0 %v1774
        %1838 = vmatpush1.bf16.msra.mxu0 %v1773
        %1839 = vmatprep.mubr.bf16.mxu0 %v1611
        %1840 = vmatmul.mubr.bf16.gmra.mrb[0].mxu0 %v1610
        %v1841 = vpop.f32.mrb[0].mxu0
        %v1842 = vadd.f32 0.0, %v1841
        %v1843 = vpop.f32.mrb[0].mxu0
        %v1844 = vadd.f32 0.0, %v1843
        %v1845 = vpop.f32.mrb[0].mxu0
        %v1846 = vadd.f32 0.0, %v1845
        %v1847 = vpop.f32.mrb[0].mxu0
        %v1848 = vadd.f32 0.0, %v1847
        %1849 = vmatprep.mubr.bf16.mxu0 %v1613
        %1850 = vmatmul.mubr.bf16.gmra.mrb[0].mxu0 %v1612
        %v1851 = vpop.f32.mrb[0].mxu0
        %v1852 = vadd.f32 0.0, %v1851
        %v1853 = vpop.f32.mrb[0].mxu0
        %v1854 = vadd.f32 0.0, %v1853
        %v1855 = vpop.f32.mrb[0].mxu0
        %v1856 = vadd.f32 0.0, %v1855
        %v1857 = vpop.f32.mrb[0].mxu0
        %v1858 = vadd.f32 0.0, %v1857
        %1859 = vdwg.mxu0
        %v1860 = vadd.f32 %v1528, %v1842
        %v1861 = vadd.f32 %v1529, %v1844
        %v1862 = vadd.f32 %v1530, %v1846
        %v1863 = vadd.f32 %v1531, %v1848
        %v1864 = vadd.f32 %v1532, %v1852
        %v1865 = vadd.f32 %v1533, %v1854
        %v1866 = vadd.f32 %v1534, %v1856
        %v1867 = vadd.f32 %v1535, %v1858
        %v1868 = vld [vmem:[%s3] sm:$0x3]
        %v1870 = vlaneseq
        %v1871 = vshrl.u32 %v1870, 7
        %v1872 = vsub.s32 0, %v1871
        %v1873 = vrot.slane %v1868, %v1872
        %v1874 = vlaneseq
        %v1875 = vshrl.u32 %v1874, 7
        %v1876 = vsub.s32 1, %v1875
        %v1877 = vrot.slane %v1868, %v1876
        %v1880 = vadd.f32 %v1860, %v1873
        %v1881 = vadd.f32 %v1861, %v1877
        %v1882 = vadd.f32 %v1862, %v1873
        %v1883 = vadd.f32 %v1863, %v1877
        %v1884 = vadd.f32 %v1864, %v1873
        %v1885 = vadd.f32 %v1865, %v1877
        %v1886 = vadd.f32 %v1866, %v1873
        %v1887 = vadd.f32 %v1867, %v1877
        %vm1888 = vcmp.ge.f32.partialorder %v1880, 0.0
        %vm1889 = vcmp.ge.f32.partialorder %v1881, 0.0
        %vm1890 = vcmp.ge.f32.partialorder %v1882, 0.0
        %vm1891 = vcmp.ge.f32.partialorder %v1883, 0.0
        %vm1892 = vcmp.ge.f32.partialorder %v1884, 0.0
        %vm1893 = vcmp.ge.f32.partialorder %v1885, 0.0
        %vm1894 = vcmp.ge.f32.partialorder %v1886, 0.0
        %vm1895 = vcmp.ge.f32.partialorder %v1887, 0.0
        %v1896 = vmul.f32 %v1880, 0.2
        %v1897 = vmul.f32 %v1881, 0.2
        %v1898 = vmul.f32 %v1882, 0.2
        %v1899 = vmul.f32 %v1883, 0.2
        %v1900 = vmul.f32 %v1884, 0.2
        %v1901 = vmul.f32 %v1885, 0.2
        %v1902 = vmul.f32 %v1886, 0.2
        %v1903 = vmul.f32 %v1887, 0.2
        %v1904 = vsel %vm1888, %v1880, %v1896
        %v1905 = vsel %vm1889, %v1881, %v1897
        %v1906 = vsel %vm1890, %v1882, %v1898
        %v1907 = vsel %vm1891, %v1883, %v1899
        %v1908 = vsel %vm1892, %v1884, %v1900
        %v1909 = vsel %vm1893, %v1885, %v1901
        %v1910 = vsel %vm1894, %v1886, %v1902
        %v1911 = vsel %vm1895, %v1887, %v1903
        %v1912 = vpack.c.bf16 %v1906, %v1904
        %v1913 = vpack.c.bf16 %v1907, %v1905
        %v1914 = vpack.c.bf16 %v1910, %v1908
        %v1915 = vpack.c.bf16 %v1911, %v1909
        %v1916 = vld [vmem:[%s4] sm:$0xf]
        %v1917 = vld [vmem:[%s4 + $0x4] sm:$0xf]
        %v1920 = vunpack.c.l.b16 %v1916
        %v1921 = vunpack.c.l.b16 %v1917
        %v1922 = vpack.c.b16 %v1921, %v1920
        %vm1923 = vcmask 261120
        %v1925 = vsel %vm1923, %v1922, 0
        %1927 = vmatprep.subr.bf16.mxu0 %v1913
        %1928 = vmatpush1.bf16.msra.mxu0 %v1912
        %1929 = vmatprep.subr.bf16.mxu0 %v1915
        %1930 = vmatpush1.bf16.msra.mxu0 %v1914
        %1931 = vmatprep.subr.bf16.mxu0 0
        %1932 = vmatpush1.bf16.msra.mxu0 0
        %1933 = vmatprep.subr.bf16.mxu0 0
        %1934 = vmatpush1.bf16.msra.mxu0 0
        %1935 = vmatprep.subr.bf16.mxu0 0
        %1936 = vmatpush1.bf16.msra.mxu0 0
        %1937 = vmatprep.subr.bf16.mxu0 0
        %1938 = vmatpush1.bf16.msra.mxu0 0
        %1939 = vmatprep.subr.bf16.mxu0 0
        %1940 = vmatpush1.bf16.msra.mxu0 0
        %1941 = vmatprep.subr.bf16.mxu0 0
        %1942 = vmatpush1.bf16.msra.mxu0 0
        %1943 = vmatprep.subr.bf16.mxu0 0
        %1944 = vmatpush1.bf16.msra.mxu0 0
        %1945 = vmatprep.subr.bf16.mxu0 0
        %1946 = vmatpush1.bf16.msra.mxu0 0
        %1947 = vmatprep.subr.bf16.mxu0 0
        %1948 = vmatpush1.bf16.msra.mxu0 0
        %1949 = vmatprep.subr.bf16.mxu0 0
        %1950 = vmatpush1.bf16.msra.mxu0 0
        %1951 = vmatprep.subr.bf16.mxu0 0
        %1952 = vmatpush1.bf16.msra.mxu0 0
        %1953 = vmatprep.subr.bf16.mxu0 0
        %1954 = vmatpush1.bf16.msra.mxu0 0
        %1955 = vmatprep.subr.bf16.mxu0 0
        %1956 = vmatpush1.bf16.msra.mxu0 0
        %1957 = vmatprep.subr.bf16.mxu0 0
        %1958 = vmatpush1.bf16.msra.mxu0 0
        %1959 = vmatprep.mubr.bf16.mxu0 0
        %1960 = vmatmul.mubr.bf16.gmra.mrb[0].mxu0 %v1925
        %v1961 = vpop.f32.mrb[0].mxu0
        %v1962 = vadd.f32 0.0, %v1961
        %v1963 = vpop.f32.mrb[0].mxu0
        %v1964 = vadd.f32 0.0, %v1963
        %v1965 = vpop.f32.mrb[0].mxu0
        %v1966 = vadd.f32 0.0, %v1965
        %v1967 = vpop.f32.mrb[0].mxu0
        %v1968 = vadd.f32 0.0, %v1967
        %1969 = vdwg.mxu0
        %v1970 = vpack.c.bf16 %v1966, %v1962
        %v1971 = vpack.c.bf16 %v1968, %v1964
        %v1972 = vld [vmem:[#allocation2] sm:$0xff]
        %v1973 = vld [vmem:[#allocation2 + $0x8] sm:$0xff]
        %v1974 = vld [vmem:[#allocation2 + $0x10] sm:$0xff]
        %v1975 = vld [vmem:[#allocation2 + $0x18] sm:$0xff]
        %v1976 = vld [vmem:[#allocation2 + $0x20] sm:$0xff]
        %v1977 = vld [vmem:[#allocation2 + $0x28] sm:$0xff]
        %v1978 = vld [vmem:[#allocation2 + $0x30] sm:$0xff]
        %v1979 = vld [vmem:[#allocation2 + $0x38] sm:$0xff]
        %v1980 = vld [vmem:[#allocation2 + $0x40] sm:$0xff]
        %v1981 = vld [vmem:[#allocation2 + $0x48] sm:$0xff]
        %v1982 = vld [vmem:[#allocation2 + $0x50] sm:$0xff]
        %v1983 = vld [vmem:[#allocation2 + $0x58] sm:$0xff]
        %v1984 = vld [vmem:[#allocation2 + $0x60] sm:$0xff]
        %v1985 = vld [vmem:[#allocation2 + $0x68] sm:$0xff]
        %v1986 = vld [vmem:[#allocation2 + $0x70] sm:$0xff]
        %v1987 = vld [vmem:[#allocation2 + $0x78] sm:$0xff]
        %v1988 = vld [vmem:[#allocation2 + $0x80] sm:$0xff]
        %v1989 = vld [vmem:[#allocation2 + $0x88] sm:$0xff]
        %v1990 = vld [vmem:[#allocation2 + $0x90] sm:$0xff]
        %v1991 = vld [vmem:[#allocation2 + $0x98] sm:$0xff]
        %v1992 = vld [vmem:[#allocation2 + $0xa0] sm:$0xff]
        %v1993 = vld [vmem:[#allocation2 + $0xa8] sm:$0xff]
        %v1994 = vld [vmem:[#allocation2 + $0xb0] sm:$0xff]
        %v1995 = vld [vmem:[#allocation2 + $0xb8] sm:$0xff]
        %v1996 = vld [vmem:[#allocation2 + $0xc0] sm:$0xff]
        %v1997 = vld [vmem:[#allocation2 + $0xc8] sm:$0xff]
        %v1998 = vld [vmem:[#allocation2 + $0xd0] sm:$0xff]
        %v1999 = vld [vmem:[#allocation2 + $0xd8] sm:$0xff]
        %v2000 = vld [vmem:[#allocation2 + $0xe0] sm:$0xff]
        %v2001 = vld [vmem:[#allocation2 + $0xe8] sm:$0xff]
        %v2002 = vld [vmem:[#allocation2 + $0xf0] sm:$0xff]
        %v2003 = vld [vmem:[#allocation2 + $0xf8] sm:$0xff]
        %s2004 = scalar_lea.vmem %s4, 8
        %v2005 = vld [vmem:[%s2004] sm:$0xf]
        %v2006 = vld [vmem:[%s2004 + $0x4] sm:$0xf]
        %v2009 = vunpack.c.l.b16 %v2005
        %v2010 = vunpack.c.l.b16 %v2006
        %v2011 = vpack.c.b16 %v2010, %v2009
        %v2013 = vsel %vm1923, %v2011, 0
        %2015 = vmatprep.subr.bf16.mxu0 %v1913
        %2016 = vmatpush1.bf16.msra.mxu0 %v1912
        %2017 = vmatprep.subr.bf16.mxu0 %v1915
        %2018 = vmatpush1.bf16.msra.mxu0 %v1914
        %2019 = vmatprep.subr.bf16.mxu0 0
        %2020 = vmatpush1.bf16.msra.mxu0 0
        %2021 = vmatprep.subr.bf16.mxu0 0
        %2022 = vmatpush1.bf16.msra.mxu0 0
        %2023 = vmatprep.subr.bf16.mxu0 0
        %2024 = vmatpush1.bf16.msra.mxu0 0
        %2025 = vmatprep.subr.bf16.mxu0 0
        %2026 = vmatpush1.bf16.msra.mxu0 0
        %2027 = vmatprep.subr.bf16.mxu0 0
        %2028 = vmatpush1.bf16.msra.mxu0 0
        %2029 = vmatprep.subr.bf16.mxu0 0
        %2030 = vmatpush1.bf16.msra.mxu0 0
        %2031 = vmatprep.subr.bf16.mxu0 0
        %2032 = vmatpush1.bf16.msra.mxu0 0
        %2033 = vmatprep.subr.bf16.mxu0 0
        %2034 = vmatpush1.bf16.msra.mxu0 0
        %2035 = vmatprep.subr.bf16.mxu0 0
        %2036 = vmatpush1.bf16.msra.mxu0 0
        %2037 = vmatprep.subr.bf16.mxu0 0
        %2038 = vmatpush1.bf16.msra.mxu0 0
        %2039 = vmatprep.subr.bf16.mxu0 0
        %2040 = vmatpush1.bf16.msra.mxu0 0
        %2041 = vmatprep.subr.bf16.mxu0 0
        %2042 = vmatpush1.bf16.msra.mxu0 0
        %2043 = vmatprep.subr.bf16.mxu0 0
        %2044 = vmatpush1.bf16.msra.mxu0 0
        %2045 = vmatprep.subr.bf16.mxu0 0
        %2046 = vmatpush1.bf16.msra.mxu0 0
        %2047 = vmatprep.mubr.bf16.mxu0 0
        %2048 = vmatmul.mubr.bf16.gmra.mrb[0].mxu0 %v2013
        %v2049 = vpop.f32.mrb[0].mxu0
        %v2050 = vadd.f32 0.0, %v2049
        %v2051 = vpop.f32.mrb[0].mxu0
        %v2052 = vadd.f32 0.0, %v2051
        %v2053 = vpop.f32.mrb[0].mxu0
        %v2054 = vadd.f32 0.0, %v2053
        %v2055 = vpop.f32.mrb[0].mxu0
        %v2056 = vadd.f32 0.0, %v2055
        %2057 = vdwg.mxu0
        %v2058 = vpack.c.bf16 %v2054, %v2050
        %v2059 = vpack.c.bf16 %v2056, %v2052
        %s2060 = scalar_lea.vmem [#allocation2], 256
        %v2061 = vld [vmem:[%s2060] sm:$0xff]
        %v2062 = vld [vmem:[%s2060 + $0x8] sm:$0xff]
        %v2063 = vld [vmem:[%s2060 + $0x10] sm:$0xff]
        %v2064 = vld [vmem:[%s2060 + $0x18] sm:$0xff]
        %v2065 = vld [vmem:[%s2060 + $0x20] sm:$0xff]
        %v2066 = vld [vmem:[%s2060 + $0x28] sm:$0xff]
        %v2067 = vld [vmem:[%s2060 + $0x30] sm:$0xff]
        %v2068 = vld [vmem:[%s2060 + $0x38] sm:$0xff]
        %v2069 = vld [vmem:[%s2060 + $0x40] sm:$0xff]
        %v2070 = vld [vmem:[%s2060 + $0x48] sm:$0xff]
        %v2071 = vld [vmem:[%s2060 + $0x50] sm:$0xff]
        %v2072 = vld [vmem:[%s2060 + $0x58] sm:$0xff]
        %v2073 = vld [vmem:[%s2060 + $0x60] sm:$0xff]
        %v2074 = vld [vmem:[%s2060 + $0x68] sm:$0xff]
        %v2075 = vld [vmem:[%s2060 + $0x70] sm:$0xff]
        %v2076 = vld [vmem:[%s2060 + $0x78] sm:$0xff]
        %v2077 = vld [vmem:[%s2060 + $0x80] sm:$0xff]
        %v2078 = vld [vmem:[%s2060 + $0x88] sm:$0xff]
        %v2079 = vld [vmem:[%s2060 + $0x90] sm:$0xff]
        %v2080 = vld [vmem:[%s2060 + $0x98] sm:$0xff]
        %v2081 = vld [vmem:[%s2060 + $0xa0] sm:$0xff]
        %v2082 = vld [vmem:[%s2060 + $0xa8] sm:$0xff]
        %v2083 = vld [vmem:[%s2060 + $0xb0] sm:$0xff]
        %v2084 = vld [vmem:[%s2060 + $0xb8] sm:$0xff]
        %v2085 = vld [vmem:[%s2060 + $0xc0] sm:$0xff]
        %v2086 = vld [vmem:[%s2060 + $0xc8] sm:$0xff]
        %v2087 = vld [vmem:[%s2060 + $0xd0] sm:$0xff]
        %v2088 = vld [vmem:[%s2060 + $0xd8] sm:$0xff]
        %v2089 = vld [vmem:[%s2060 + $0xe0] sm:$0xff]
        %v2090 = vld [vmem:[%s2060 + $0xe8] sm:$0xff]
        %v2091 = vld [vmem:[%s2060 + $0xf0] sm:$0xff]
        %v2092 = vld [vmem:[%s2060 + $0xf8] sm:$0xff]
        %v2125 = vunpack.c.l.b16 %v2061
        %v2126 = vunpack.c.h.b16 %v2061
        %v2127 = vunpack.c.l.b16 %v2062
        %v2128 = vunpack.c.h.b16 %v2062
        %v2129 = vunpack.c.l.b16 %v2063
        %v2130 = vunpack.c.h.b16 %v2063
        %v2131 = vunpack.c.l.b16 %v2064
        %v2132 = vunpack.c.h.b16 %v2064
        %v2133 = vunpack.c.l.b16 %v2065
        %v2134 = vunpack.c.h.b16 %v2065
        %v2135 = vunpack.c.l.b16 %v2066
        %v2136 = vunpack.c.h.b16 %v2066
        %v2137 = vunpack.c.l.b16 %v2067
        %v2138 = vunpack.c.h.b16 %v2067
        %v2139 = vunpack.c.l.b16 %v2068
        %v2140 = vunpack.c.h.b16 %v2068
        %v2141 = vunpack.c.l.b16 %v2069
        %v2142 = vunpack.c.h.b16 %v2069
        %v2143 = vunpack.c.l.b16 %v2070
        %v2144 = vunpack.c.h.b16 %v2070
        %v2145 = vunpack.c.l.b16 %v2071
        %v2146 = vunpack.c.h.b16 %v2071
        %v2147 = vunpack.c.l.b16 %v2072
        %v2148 = vunpack.c.h.b16 %v2072
        %v2149 = vunpack.c.l.b16 %v2073
        %v2150 = vunpack.c.h.b16 %v2073
        %v2151 = vunpack.c.l.b16 %v2074
        %v2152 = vunpack.c.h.b16 %v2074
        %v2153 = vunpack.c.l.b16 %v2075
        %v2154 = vunpack.c.h.b16 %v2075
        %v2155 = vunpack.c.l.b16 %v2076
        %v2156 = vunpack.c.h.b16 %v2076
        %v2157 = vunpack.c.l.b16 %v2077
        %v2158 = vunpack.c.h.b16 %v2077
        %v2159 = vunpack.c.l.b16 %v2078
        %v2160 = vunpack.c.h.b16 %v2078
        %v2161 = vunpack.c.l.b16 %v2079
        %v2162 = vunpack.c.h.b16 %v2079
        %v2163 = vunpack.c.l.b16 %v2080
        %v2164 = vunpack.c.h.b16 %v2080
        %v2165 = vunpack.c.l.b16 %v2081
        %v2166 = vunpack.c.h.b16 %v2081
        %v2167 = vunpack.c.l.b16 %v2082
        %v2168 = vunpack.c.h.b16 %v2082
        %v2169 = vunpack.c.l.b16 %v2083
        %v2170 = vunpack.c.h.b16 %v2083
        %v2171 = vunpack.c.l.b16 %v2084
        %v2172 = vunpack.c.h.b16 %v2084
        %v2173 = vunpack.c.l.b16 %v2085
        %v2174 = vunpack.c.h.b16 %v2085
        %v2175 = vunpack.c.l.b16 %v2086
        %v2176 = vunpack.c.h.b16 %v2086
        %v2177 = vunpack.c.l.b16 %v2087
        %v2178 = vunpack.c.h.b16 %v2087
        %v2179 = vunpack.c.l.b16 %v2088
        %v2180 = vunpack.c.h.b16 %v2088
        %v2181 = vunpack.c.l.b16 %v2089
        %v2182 = vunpack.c.h.b16 %v2089
        %v2183 = vunpack.c.l.b16 %v2090
        %v2184 = vunpack.c.h.b16 %v2090
        %v2185 = vunpack.c.l.b16 %v2091
        %v2186 = vunpack.c.h.b16 %v2091
        %v2187 = vunpack.c.l.b16 %v2092
        %v2188 = vunpack.c.h.b16 %v2092
        %v2189 = vpack.c.b16 %v2127, %v2125
        %v2190 = vpack.c.b16 %v2128, %v2126
        %v2191 = vpack.c.b16 %v2131, %v2129
        %v2192 = vpack.c.b16 %v2132, %v2130
        %v2193 = vpack.c.b16 %v2135, %v2133
        %v2194 = vpack.c.b16 %v2136, %v2134
        %v2195 = vpack.c.b16 %v2139, %v2137
        %v2196 = vpack.c.b16 %v2140, %v2138
        %v2197 = vpack.c.b16 %v2143, %v2141
        %v2198 = vpack.c.b16 %v2144, %v2142
        %v2199 = vpack.c.b16 %v2147, %v2145
        %v2200 = vpack.c.b16 %v2148, %v2146
        %v2201 = vpack.c.b16 %v2151, %v2149
        %v2202 = vpack.c.b16 %v2152, %v2150
        %v2203 = vpack.c.b16 %v2155, %v2153
        %v2204 = vpack.c.b16 %v2156, %v2154
        %v2205 = vpack.c.b16 %v2159, %v2157
        %v2206 = vpack.c.b16 %v2160, %v2158
        %v2207 = vpack.c.b16 %v2163, %v2161
        %v2208 = vpack.c.b16 %v2164, %v2162
        %v2209 = vpack.c.b16 %v2167, %v2165
        %v2210 = vpack.c.b16 %v2168, %v2166
        %v2211 = vpack.c.b16 %v2171, %v2169
        %v2212 = vpack.c.b16 %v2172, %v2170
        %v2213 = vpack.c.b16 %v2175, %v2173
        %v2214 = vpack.c.b16 %v2176, %v2174
        %v2215 = vpack.c.b16 %v2179, %v2177
        %v2216 = vpack.c.b16 %v2180, %v2178
        %v2217 = vpack.c.b16 %v2183, %v2181
        %v2218 = vpack.c.b16 %v2184, %v2182
        %v2219 = vpack.c.b16 %v2187, %v2185
        %v2220 = vpack.c.b16 %v2188, %v2186
        %2253 = vmatprep.subr.bf16.mxu0 %v2190
        %2254 = vmatpush1.bf16.msra.mxu0 %v2189
        %2255 = vmatprep.subr.bf16.mxu0 %v2192
        %2256 = vmatpush1.bf16.msra.mxu0 %v2191
        %2257 = vmatprep.subr.bf16.mxu0 %v2194
        %2258 = vmatpush1.bf16.msra.mxu0 %v2193
        %2259 = vmatprep.subr.bf16.mxu0 %v2196
        %2260 = vmatpush1.bf16.msra.mxu0 %v2195
        %2261 = vmatprep.subr.bf16.mxu0 %v2198
        %2262 = vmatpush1.bf16.msra.mxu0 %v2197
        %2263 = vmatprep.subr.bf16.mxu0 %v2200
        %2264 = vmatpush1.bf16.msra.mxu0 %v2199
        %2265 = vmatprep.subr.bf16.mxu0 %v2202
        %2266 = vmatpush1.bf16.msra.mxu0 %v2201
        %2267 = vmatprep.subr.bf16.mxu0 %v2204
        %2268 = vmatpush1.bf16.msra.mxu0 %v2203
        %2269 = vmatprep.subr.bf16.mxu0 %v2206
        %2270 = vmatpush1.bf16.msra.mxu0 %v2205
        %2271 = vmatprep.subr.bf16.mxu0 %v2208
        %2272 = vmatpush1.bf16.msra.mxu0 %v2207
        %2273 = vmatprep.subr.bf16.mxu0 %v2210
        %2274 = vmatpush1.bf16.msra.mxu0 %v2209
        %2275 = vmatprep.subr.bf16.mxu0 %v2212
        %2276 = vmatpush1.bf16.msra.mxu0 %v2211
        %2277 = vmatprep.subr.bf16.mxu0 %v2214
        %2278 = vmatpush1.bf16.msra.mxu0 %v2213
        %2279 = vmatprep.subr.bf16.mxu0 %v2216
        %2280 = vmatpush1.bf16.msra.mxu0 %v2215
        %2281 = vmatprep.subr.bf16.mxu0 %v2218
        %2282 = vmatpush1.bf16.msra.mxu0 %v2217
        %2283 = vmatprep.subr.bf16.mxu0 %v2220
        %2284 = vmatpush1.bf16.msra.mxu0 %v2219
        %2285 = vmatprep.mubr.bf16.mxu0 %v2059
        %2286 = vmatmul.mubr.bf16.gmra.mrb[0].mxu0 %v2058
        %v2287 = vpop.f32.mrb[0].mxu0
        %v2288 = vadd.f32 0.0, %v2287
        %v2289 = vpop.f32.mrb[0].mxu0
        %v2290 = vadd.f32 0.0, %v2289
        %v2291 = vpop.f32.mrb[0].mxu0
        %v2292 = vadd.f32 0.0, %v2291
        %v2293 = vpop.f32.mrb[0].mxu0
        %v2294 = vadd.f32 0.0, %v2293
        %2295 = vdwg.mxu0
        %v2328 = vunpack.c.l.b16 %v1972
        %v2329 = vunpack.c.h.b16 %v1972
        %v2330 = vunpack.c.l.b16 %v1973
        %v2331 = vunpack.c.h.b16 %v1973
        %v2332 = vunpack.c.l.b16 %v1974
        %v2333 = vunpack.c.h.b16 %v1974
        %v2334 = vunpack.c.l.b16 %v1975
        %v2335 = vunpack.c.h.b16 %v1975
        %v2336 = vunpack.c.l.b16 %v1976
        %v2337 = vunpack.c.h.b16 %v1976
        %v2338 = vunpack.c.l.b16 %v1977
        %v2339 = vunpack.c.h.b16 %v1977
        %v2340 = vunpack.c.l.b16 %v1978
        %v2341 = vunpack.c.h.b16 %v1978
        %v2342 = vunpack.c.l.b16 %v1979
        %v2343 = vunpack.c.h.b16 %v1979
        %v2344 = vunpack.c.l.b16 %v1980
        %v2345 = vunpack.c.h.b16 %v1980
        %v2346 = vunpack.c.l.b16 %v1981
        %v2347 = vunpack.c.h.b16 %v1981
        %v2348 = vunpack.c.l.b16 %v1982
        %v2349 = vunpack.c.h.b16 %v1982
        %v2350 = vunpack.c.l.b16 %v1983
        %v2351 = vunpack.c.h.b16 %v1983
        %v2352 = vunpack.c.l.b16 %v1984
        %v2353 = vunpack.c.h.b16 %v1984
        %v2354 = vunpack.c.l.b16 %v1985
        %v2355 = vunpack.c.h.b16 %v1985
        %v2356 = vunpack.c.l.b16 %v1986
        %v2357 = vunpack.c.h.b16 %v1986
        %v2358 = vunpack.c.l.b16 %v1987
        %v2359 = vunpack.c.h.b16 %v1987
        %v2360 = vunpack.c.l.b16 %v1988
        %v2361 = vunpack.c.h.b16 %v1988
        %v2362 = vunpack.c.l.b16 %v1989
        %v2363 = vunpack.c.h.b16 %v1989
        %v2364 = vunpack.c.l.b16 %v1990
        %v2365 = vunpack.c.h.b16 %v1990
        %v2366 = vunpack.c.l.b16 %v1991
        %v2367 = vunpack.c.h.b16 %v1991
        %v2368 = vunpack.c.l.b16 %v1992
        %v2369 = vunpack.c.h.b16 %v1992
        %v2370 = vunpack.c.l.b16 %v1993
        %v2371 = vunpack.c.h.b16 %v1993
        %v2372 = vunpack.c.l.b16 %v1994
        %v2373 = vunpack.c.h.b16 %v1994
        %v2374 = vunpack.c.l.b16 %v1995
        %v2375 = vunpack.c.h.b16 %v1995
        %v2376 = vunpack.c.l.b16 %v1996
        %v2377 = vunpack.c.h.b16 %v1996
        %v2378 = vunpack.c.l.b16 %v1997
        %v2379 = vunpack.c.h.b16 %v1997
        %v2380 = vunpack.c.l.b16 %v1998
        %v2381 = vunpack.c.h.b16 %v1998
        %v2382 = vunpack.c.l.b16 %v1999
        %v2383 = vunpack.c.h.b16 %v1999
        %v2384 = vunpack.c.l.b16 %v2000
        %v2385 = vunpack.c.h.b16 %v2000
        %v2386 = vunpack.c.l.b16 %v2001
        %v2387 = vunpack.c.h.b16 %v2001
        %v2388 = vunpack.c.l.b16 %v2002
        %v2389 = vunpack.c.h.b16 %v2002
        %v2390 = vunpack.c.l.b16 %v2003
        %v2391 = vunpack.c.h.b16 %v2003
        %v2392 = vpack.c.b16 %v2330, %v2328
        %v2393 = vpack.c.b16 %v2331, %v2329
        %v2394 = vpack.c.b16 %v2334, %v2332
        %v2395 = vpack.c.b16 %v2335, %v2333
        %v2396 = vpack.c.b16 %v2338, %v2336
        %v2397 = vpack.c.b16 %v2339, %v2337
        %v2398 = vpack.c.b16 %v2342, %v2340
        %v2399 = vpack.c.b16 %v2343, %v2341
        %v2400 = vpack.c.b16 %v2346, %v2344
        %v2401 = vpack.c.b16 %v2347, %v2345
        %v2402 = vpack.c.b16 %v2350, %v2348
        %v2403 = vpack.c.b16 %v2351, %v2349
        %v2404 = vpack.c.b16 %v2354, %v2352
        %v2405 = vpack.c.b16 %v2355, %v2353
        %v2406 = vpack.c.b16 %v2358, %v2356
        %v2407 = vpack.c.b16 %v2359, %v2357
        %v2408 = vpack.c.b16 %v2362, %v2360
        %v2409 = vpack.c.b16 %v2363, %v2361
        %v2410 = vpack.c.b16 %v2366, %v2364
        %v2411 = vpack.c.b16 %v2367, %v2365
        %v2412 = vpack.c.b16 %v2370, %v2368
        %v2413 = vpack.c.b16 %v2371, %v2369
        %v2414 = vpack.c.b16 %v2374, %v2372
        %v2415 = vpack.c.b16 %v2375, %v2373
        %v2416 = vpack.c.b16 %v2378, %v2376
        %v2417 = vpack.c.b16 %v2379, %v2377
        %v2418 = vpack.c.b16 %v2382, %v2380
        %v2419 = vpack.c.b16 %v2383, %v2381
        %v2420 = vpack.c.b16 %v2386, %v2384
        %v2421 = vpack.c.b16 %v2387, %v2385
        %v2422 = vpack.c.b16 %v2390, %v2388
        %v2423 = vpack.c.b16 %v2391, %v2389
        %2456 = vmatprep.subr.bf16.mxu0 %v2393
        %2457 = vmatpush1.bf16.msra.mxu0 %v2392
        %2458 = vmatprep.subr.bf16.mxu0 %v2395
        %2459 = vmatpush1.bf16.msra.mxu0 %v2394
        %2460 = vmatprep.subr.bf16.mxu0 %v2397
        %2461 = vmatpush1.bf16.msra.mxu0 %v2396
        %2462 = vmatprep.subr.bf16.mxu0 %v2399
        %2463 = vmatpush1.bf16.msra.mxu0 %v2398
        %2464 = vmatprep.subr.bf16.mxu0 %v2401
        %2465 = vmatpush1.bf16.msra.mxu0 %v2400
        %2466 = vmatprep.subr.bf16.mxu0 %v2403
        %2467 = vmatpush1.bf16.msra.mxu0 %v2402
        %2468 = vmatprep.subr.bf16.mxu0 %v2405
        %2469 = vmatpush1.bf16.msra.mxu0 %v2404
        %2470 = vmatprep.subr.bf16.mxu0 %v2407
        %2471 = vmatpush1.bf16.msra.mxu0 %v2406
        %2472 = vmatprep.subr.bf16.mxu0 %v2409
        %2473 = vmatpush1.bf16.msra.mxu0 %v2408
        %2474 = vmatprep.subr.bf16.mxu0 %v2411
        %2475 = vmatpush1.bf16.msra.mxu0 %v2410
        %2476 = vmatprep.subr.bf16.mxu0 %v2413
        %2477 = vmatpush1.bf16.msra.mxu0 %v2412
        %2478 = vmatprep.subr.bf16.mxu0 %v2415
        %2479 = vmatpush1.bf16.msra.mxu0 %v2414
        %2480 = vmatprep.subr.bf16.mxu0 %v2417
        %2481 = vmatpush1.bf16.msra.mxu0 %v2416
        %2482 = vmatprep.subr.bf16.mxu0 %v2419
        %2483 = vmatpush1.bf16.msra.mxu0 %v2418
        %2484 = vmatprep.subr.bf16.mxu0 %v2421
        %2485 = vmatpush1.bf16.msra.mxu0 %v2420
        %2486 = vmatprep.subr.bf16.mxu0 %v2423
        %2487 = vmatpush1.bf16.msra.mxu0 %v2422
        %2488 = vmatprep.mubr.bf16.mxu0 %v1971
        %2489 = vmatmul.mubr.bf16.gmra.mrb[0].mxu0 %v1970
        %v2490 = vpop.f32.mrb[0].mxu0
        %v2491 = vadd.f32 %v2288, %v2490
        %v2492 = vpop.f32.mrb[0].mxu0
        %v2493 = vadd.f32 %v2290, %v2492
        %v2494 = vpop.f32.mrb[0].mxu0
        %v2495 = vadd.f32 %v2292, %v2494
        %v2496 = vpop.f32.mrb[0].mxu0
        %v2497 = vadd.f32 %v2294, %v2496
        %2498 = vdwg.mxu0
        %s2499 = scalar_lea.vmem %s4, 16
        %v2500 = vld [vmem:[%s2499] sm:$0xf]
        %v2501 = vld [vmem:[%s2499 + $0x4] sm:$0xf]
        %v2504 = vunpack.c.l.b16 %v2500
        %v2505 = vunpack.c.l.b16 %v2501
        %v2506 = vpack.c.b16 %v2505, %v2504
        %v2508 = vsel %vm1923, %v2506, 0
        %2510 = vmatprep.subr.bf16.mxu0 %v1913
        %2511 = vmatpush1.bf16.msra.mxu0 %v1912
        %2512 = vmatprep.subr.bf16.mxu0 %v1915
        %2513 = vmatpush1.bf16.msra.mxu0 %v1914
        %2514 = vmatprep.subr.bf16.mxu0 0
        %2515 = vmatpush1.bf16.msra.mxu0 0
        %2516 = vmatprep.subr.bf16.mxu0 0
        %2517 = vmatpush1.bf16.msra.mxu0 0
        %2518 = vmatprep.subr.bf16.mxu0 0
        %2519 = vmatpush1.bf16.msra.mxu0 0
        %2520 = vmatprep.subr.bf16.mxu0 0
        %2521 = vmatpush1.bf16.msra.mxu0 0
        %2522 = vmatprep.subr.bf16.mxu0 0
        %2523 = vmatpush1.bf16.msra.mxu0 0
        %2524 = vmatprep.subr.bf16.mxu0 0
        %2525 = vmatpush1.bf16.msra.mxu0 0
        %2526 = vmatprep.subr.bf16.mxu0 0
        %2527 = vmatpush1.bf16.msra.mxu0 0
        %2528 = vmatprep.subr.bf16.mxu0 0
        %2529 = vmatpush1.bf16.msra.mxu0 0
        %2530 = vmatprep.subr.bf16.mxu0 0
        %2531 = vmatpush1.bf16.msra.mxu0 0
        %2532 = vmatprep.subr.bf16.mxu0 0
        %2533 = vmatpush1.bf16.msra.mxu0 0
        %2534 = vmatprep.subr.bf16.mxu0 0
        %2535 = vmatpush1.bf16.msra.mxu0 0
        %2536 = vmatprep.subr.bf16.mxu0 0
        %2537 = vmatpush1.bf16.msra.mxu0 0
        %2538 = vmatprep.subr.bf16.mxu0 0
        %2539 = vmatpush1.bf16.msra.mxu0 0
        %2540 = vmatprep.subr.bf16.mxu0 0
        %2541 = vmatpush1.bf16.msra.mxu0 0
        %2542 = vmatprep.mubr.bf16.mxu0 0
        %2543 = vmatmul.mubr.bf16.gmra.mrb[0].mxu0 %v2508
        %v2544 = vpop.f32.mrb[0].mxu0
        %v2545 = vadd.f32 0.0, %v2544
        %v2546 = vpop.f32.mrb[0].mxu0
        %v2547 = vadd.f32 0.0, %v2546
        %v2548 = vpop.f32.mrb[0].mxu0
        %v2549 = vadd.f32 0.0, %v2548
        %v2550 = vpop.f32.mrb[0].mxu0
        %v2551 = vadd.f32 0.0, %v2550
        %2552 = vdwg.mxu0
        %v2553 = vpack.c.bf16 %v2549, %v2545
        %v2554 = vpack.c.bf16 %v2551, %v2547
        %s2555 = scalar_lea.vmem [#allocation2], 512
        %v2556 = vld [vmem:[%s2555] sm:$0xff]
        %v2557 = vld [vmem:[%s2555 + $0x8] sm:$0xff]
        %v2558 = vld [vmem:[%s2555 + $0x10] sm:$0xff]
        %v2559 = vld [vmem:[%s2555 + $0x18] sm:$0xff]
        %v2560 = vld [vmem:[%s2555 + $0x20] sm:$0xff]
        %v2561 = vld [vmem:[%s2555 + $0x28] sm:$0xff]
        %v2562 = vld [vmem:[%s2555 + $0x30] sm:$0xff]
        %v2563 = vld [vmem:[%s2555 + $0x38] sm:$0xff]
        %v2564 = vld [vmem:[%s2555 + $0x40] sm:$0xff]
        %v2565 = vld [vmem:[%s2555 + $0x48] sm:$0xff]
        %v2566 = vld [vmem:[%s2555 + $0x50] sm:$0xff]
        %v2567 = vld [vmem:[%s2555 + $0x58] sm:$0xff]
        %v2568 = vld [vmem:[%s2555 + $0x60] sm:$0xff]
        %v2569 = vld [vmem:[%s2555 + $0x68] sm:$0xff]
        %v2570 = vld [vmem:[%s2555 + $0x70] sm:$0xff]
        %v2571 = vld [vmem:[%s2555 + $0x78] sm:$0xff]
        %v2572 = vld [vmem:[%s2555 + $0x80] sm:$0xff]
        %v2573 = vld [vmem:[%s2555 + $0x88] sm:$0xff]
        %v2574 = vld [vmem:[%s2555 + $0x90] sm:$0xff]
        %v2575 = vld [vmem:[%s2555 + $0x98] sm:$0xff]
        %v2576 = vld [vmem:[%s2555 + $0xa0] sm:$0xff]
        %v2577 = vld [vmem:[%s2555 + $0xa8] sm:$0xff]
        %v2578 = vld [vmem:[%s2555 + $0xb0] sm:$0xff]
        %v2579 = vld [vmem:[%s2555 + $0xb8] sm:$0xff]
        %v2580 = vld [vmem:[%s2555 + $0xc0] sm:$0xff]
        %v2581 = vld [vmem:[%s2555 + $0xc8] sm:$0xff]
        %v2582 = vld [vmem:[%s2555 + $0xd0] sm:$0xff]
        %v2583 = vld [vmem:[%s2555 + $0xd8] sm:$0xff]
        %v2584 = vld [vmem:[%s2555 + $0xe0] sm:$0xff]
        %v2585 = vld [vmem:[%s2555 + $0xe8] sm:$0xff]
        %v2586 = vld [vmem:[%s2555 + $0xf0] sm:$0xff]
        %v2587 = vld [vmem:[%s2555 + $0xf8] sm:$0xff]
        %v2620 = vunpack.c.l.b16 %v2556
        %v2621 = vunpack.c.h.b16 %v2556
        %v2622 = vunpack.c.l.b16 %v2557
        %v2623 = vunpack.c.h.b16 %v2557
        %v2624 = vunpack.c.l.b16 %v2558
        %v2625 = vunpack.c.h.b16 %v2558
        %v2626 = vunpack.c.l.b16 %v2559
        %v2627 = vunpack.c.h.b16 %v2559
        %v2628 = vunpack.c.l.b16 %v2560
        %v2629 = vunpack.c.h.b16 %v2560
        %v2630 = vunpack.c.l.b16 %v2561
        %v2631 = vunpack.c.h.b16 %v2561
        %v2632 = vunpack.c.l.b16 %v2562
        %v2633 = vunpack.c.h.b16 %v2562
        %v2634 = vunpack.c.l.b16 %v2563
        %v2635 = vunpack.c.h.b16 %v2563
        %v2636 = vunpack.c.l.b16 %v2564
        %v2637 = vunpack.c.h.b16 %v2564
        %v2638 = vunpack.c.l.b16 %v2565
        %v2639 = vunpack.c.h.b16 %v2565
        %v2640 = vunpack.c.l.b16 %v2566
        %v2641 = vunpack.c.h.b16 %v2566
        %v2642 = vunpack.c.l.b16 %v2567
        %v2643 = vunpack.c.h.b16 %v2567
        %v2644 = vunpack.c.l.b16 %v2568
        %v2645 = vunpack.c.h.b16 %v2568
        %v2646 = vunpack.c.l.b16 %v2569
        %v2647 = vunpack.c.h.b16 %v2569
        %v2648 = vunpack.c.l.b16 %v2570
        %v2649 = vunpack.c.h.b16 %v2570
        %v2650 = vunpack.c.l.b16 %v2571
        %v2651 = vunpack.c.h.b16 %v2571
        %v2652 = vunpack.c.l.b16 %v2572
        %v2653 = vunpack.c.h.b16 %v2572
        %v2654 = vunpack.c.l.b16 %v2573
        %v2655 = vunpack.c.h.b16 %v2573
        %v2656 = vunpack.c.l.b16 %v2574
        %v2657 = vunpack.c.h.b16 %v2574
        %v2658 = vunpack.c.l.b16 %v2575
        %v2659 = vunpack.c.h.b16 %v2575
        %v2660 = vunpack.c.l.b16 %v2576
        %v2661 = vunpack.c.h.b16 %v2576
        %v2662 = vunpack.c.l.b16 %v2577
        %v2663 = vunpack.c.h.b16 %v2577
        %v2664 = vunpack.c.l.b16 %v2578
        %v2665 = vunpack.c.h.b16 %v2578
        %v2666 = vunpack.c.l.b16 %v2579
        %v2667 = vunpack.c.h.b16 %v2579
        %v2668 = vunpack.c.l.b16 %v2580
        %v2669 = vunpack.c.h.b16 %v2580
        %v2670 = vunpack.c.l.b16 %v2581
        %v2671 = vunpack.c.h.b16 %v2581
        %v2672 = vunpack.c.l.b16 %v2582
        %v2673 = vunpack.c.h.b16 %v2582
        %v2674 = vunpack.c.l.b16 %v2583
        %v2675 = vunpack.c.h.b16 %v2583
        %v2676 = vunpack.c.l.b16 %v2584
        %v2677 = vunpack.c.h.b16 %v2584
        %v2678 = vunpack.c.l.b16 %v2585
        %v2679 = vunpack.c.h.b16 %v2585
        %v2680 = vunpack.c.l.b16 %v2586
        %v2681 = vunpack.c.h.b16 %v2586
        %v2682 = vunpack.c.l.b16 %v2587
        %v2683 = vunpack.c.h.b16 %v2587
        %v2684 = vpack.c.b16 %v2622, %v2620
        %v2685 = vpack.c.b16 %v2623, %v2621
        %v2686 = vpack.c.b16 %v2626, %v2624
        %v2687 = vpack.c.b16 %v2627, %v2625
        %v2688 = vpack.c.b16 %v2630, %v2628
        %v2689 = vpack.c.b16 %v2631, %v2629
        %v2690 = vpack.c.b16 %v2634, %v2632
        %v2691 = vpack.c.b16 %v2635, %v2633
        %v2692 = vpack.c.b16 %v2638, %v2636
        %v2693 = vpack.c.b16 %v2639, %v2637
        %v2694 = vpack.c.b16 %v2642, %v2640
        %v2695 = vpack.c.b16 %v2643, %v2641
        %v2696 = vpack.c.b16 %v2646, %v2644
        %v2697 = vpack.c.b16 %v2647, %v2645
        %v2698 = vpack.c.b16 %v2650, %v2648
        %v2699 = vpack.c.b16 %v2651, %v2649
        %v2700 = vpack.c.b16 %v2654, %v2652
        %v2701 = vpack.c.b16 %v2655, %v2653
        %v2702 = vpack.c.b16 %v2658, %v2656
        %v2703 = vpack.c.b16 %v2659, %v2657
        %v2704 = vpack.c.b16 %v2662, %v2660
        %v2705 = vpack.c.b16 %v2663, %v2661
        %v2706 = vpack.c.b16 %v2666, %v2664
        %v2707 = vpack.c.b16 %v2667, %v2665
        %v2708 = vpack.c.b16 %v2670, %v2668
        %v2709 = vpack.c.b16 %v2671, %v2669
        %v2710 = vpack.c.b16 %v2674, %v2672
        %v2711 = vpack.c.b16 %v2675, %v2673
        %v2712 = vpack.c.b16 %v2678, %v2676
        %v2713 = vpack.c.b16 %v2679, %v2677
        %v2714 = vpack.c.b16 %v2682, %v2680
        %v2715 = vpack.c.b16 %v2683, %v2681
        %2748 = vmatprep.subr.bf16.mxu0 %v2685
        %2749 = vmatpush1.bf16.msra.mxu0 %v2684
        %2750 = vmatprep.subr.bf16.mxu0 %v2687
        %2751 = vmatpush1.bf16.msra.mxu0 %v2686
        %2752 = vmatprep.subr.bf16.mxu0 %v2689
        %2753 = vmatpush1.bf16.msra.mxu0 %v2688
        %2754 = vmatprep.subr.bf16.mxu0 %v2691
        %2755 = vmatpush1.bf16.msra.mxu0 %v2690
        %2756 = vmatprep.subr.bf16.mxu0 %v2693
        %2757 = vmatpush1.bf16.msra.mxu0 %v2692
        %2758 = vmatprep.subr.bf16.mxu0 %v2695
        %2759 = vmatpush1.bf16.msra.mxu0 %v2694
        %2760 = vmatprep.subr.bf16.mxu0 %v2697
        %2761 = vmatpush1.bf16.msra.mxu0 %v2696
        %2762 = vmatprep.subr.bf16.mxu0 %v2699
        %2763 = vmatpush1.bf16.msra.mxu0 %v2698
        %2764 = vmatprep.subr.bf16.mxu0 %v2701
        %2765 = vmatpush1.bf16.msra.mxu0 %v2700
        %2766 = vmatprep.subr.bf16.mxu0 %v2703
        %2767 = vmatpush1.bf16.msra.mxu0 %v2702
        %2768 = vmatprep.subr.bf16.mxu0 %v2705
        %2769 = vmatpush1.bf16.msra.mxu0 %v2704
        %2770 = vmatprep.subr.bf16.mxu0 %v2707
        %2771 = vmatpush1.bf16.msra.mxu0 %v2706
        %2772 = vmatprep.subr.bf16.mxu0 %v2709
        %2773 = vmatpush1.bf16.msra.mxu0 %v2708
        %2774 = vmatprep.subr.bf16.mxu0 %v2711
        %2775 = vmatpush1.bf16.msra.mxu0 %v2710
        %2776 = vmatprep.subr.bf16.mxu0 %v2713
        %2777 = vmatpush1.bf16.msra.mxu0 %v2712
        %2778 = vmatprep.subr.bf16.mxu0 %v2715
        %2779 = vmatpush1.bf16.msra.mxu0 %v2714
        %2780 = vmatprep.mubr.bf16.mxu0 %v2554
        %2781 = vmatmul.mubr.bf16.gmra.mrb[0].mxu0 %v2553
        %v2782 = vpop.f32.mrb[0].mxu0
        %v2783 = vadd.f32 0.0, %v2782
        %v2784 = vpop.f32.mrb[0].mxu0
        %v2785 = vadd.f32 0.0, %v2784
        %v2786 = vpop.f32.mrb[0].mxu0
        %v2787 = vadd.f32 0.0, %v2786
        %v2788 = vpop.f32.mrb[0].mxu0
        %v2789 = vadd.f32 0.0, %v2788
        %2790 = vdwg.mxu0
        %v2791 = vadd.f32 %v2491, %v2783
        %v2792 = vadd.f32 %v2493, %v2785
        %v2793 = vadd.f32 %v2495, %v2787
        %v2794 = vadd.f32 %v2497, %v2789
        %s2795 = scalar_lea.vmem %s4, 24
        %v2796 = vld [vmem:[%s2795] sm:$0xf]
        %v2797 = vld [vmem:[%s2795 + $0x4] sm:$0xf]
        %v2800 = vunpack.c.l.b16 %v2796
        %v2801 = vunpack.c.l.b16 %v2797
        %v2802 = vpack.c.b16 %v2801, %v2800
        %v2804 = vsel %vm1923, %v2802, 0
        %2806 = vmatprep.subr.bf16.mxu0 %v1913
        %2807 = vmatpush1.bf16.msra.mxu0 %v1912
        %2808 = vmatprep.subr.bf16.mxu0 %v1915
        %2809 = vmatpush1.bf16.msra.mxu0 %v1914
        %2810 = vmatprep.subr.bf16.mxu0 0
        %2811 = vmatpush1.bf16.msra.mxu0 0
        %2812 = vmatprep.subr.bf16.mxu0 0
        %2813 = vmatpush1.bf16.msra.mxu0 0
        %2814 = vmatprep.subr.bf16.mxu0 0
        %2815 = vmatpush1.bf16.msra.mxu0 0
        %2816 = vmatprep.subr.bf16.mxu0 0
        %2817 = vmatpush1.bf16.msra.mxu0 0
        %2818 = vmatprep.subr.bf16.mxu0 0
        %2819 = vmatpush1.bf16.msra.mxu0 0
        %2820 = vmatprep.subr.bf16.mxu0 0
        %2821 = vmatpush1.bf16.msra.mxu0 0
        %2822 = vmatprep.subr.bf16.mxu0 0
        %2823 = vmatpush1.bf16.msra.mxu0 0
        %2824 = vmatprep.subr.bf16.mxu0 0
        %2825 = vmatpush1.bf16.msra.mxu0 0
        %2826 = vmatprep.subr.bf16.mxu0 0
        %2827 = vmatpush1.bf16.msra.mxu0 0
        %2828 = vmatprep.subr.bf16.mxu0 0
        %2829 = vmatpush1.bf16.msra.mxu0 0
        %2830 = vmatprep.subr.bf16.mxu0 0
        %2831 = vmatpush1.bf16.msra.mxu0 0
        %2832 = vmatprep.subr.bf16.mxu0 0
        %2833 = vmatpush1.bf16.msra.mxu0 0
        %2834 = vmatprep.subr.bf16.mxu0 0
        %2835 = vmatpush1.bf16.msra.mxu0 0
        %2836 = vmatprep.subr.bf16.mxu0 0
        %2837 = vmatpush1.bf16.msra.mxu0 0
        %2838 = vmatprep.mubr.bf16.mxu0 0
        %2839 = vmatmul.mubr.bf16.gmra.mrb[0].mxu0 %v2804
        %v2840 = vpop.f32.mrb[0].mxu0
        %v2841 = vadd.f32 0.0, %v2840
        %v2842 = vpop.f32.mrb[0].mxu0
        %v2843 = vadd.f32 0.0, %v2842
        %v2844 = vpop.f32.mrb[0].mxu0
        %v2845 = vadd.f32 0.0, %v2844
        %v2846 = vpop.f32.mrb[0].mxu0
        %v2847 = vadd.f32 0.0, %v2846
        %2848 = vdwg.mxu0
        %v2849 = vpack.c.bf16 %v2845, %v2841
        %v2850 = vpack.c.bf16 %v2847, %v2843
        %s2851 = scalar_lea.vmem [#allocation2], 768
        %v2852 = vld [vmem:[%s2851] sm:$0xff]
        %v2853 = vld [vmem:[%s2851 + $0x8] sm:$0xff]
        %v2854 = vld [vmem:[%s2851 + $0x10] sm:$0xff]
        %v2855 = vld [vmem:[%s2851 + $0x18] sm:$0xff]
        %v2856 = vld [vmem:[%s2851 + $0x20] sm:$0xff]
        %v2857 = vld [vmem:[%s2851 + $0x28] sm:$0xff]
        %v2858 = vld [vmem:[%s2851 + $0x30] sm:$0xff]
        %v2859 = vld [vmem:[%s2851 + $0x38] sm:$0xff]
        %v2860 = vld [vmem:[%s2851 + $0x40] sm:$0xff]
        %v2861 = vld [vmem:[%s2851 + $0x48] sm:$0xff]
        %v2862 = vld [vmem:[%s2851 + $0x50] sm:$0xff]
        %v2863 = vld [vmem:[%s2851 + $0x58] sm:$0xff]
        %v2864 = vld [vmem:[%s2851 + $0x60] sm:$0xff]
        %v2865 = vld [vmem:[%s2851 + $0x68] sm:$0xff]
        %v2866 = vld [vmem:[%s2851 + $0x70] sm:$0xff]
        %v2867 = vld [vmem:[%s2851 + $0x78] sm:$0xff]
        %v2868 = vld [vmem:[%s2851 + $0x80] sm:$0xff]
        %v2869 = vld [vmem:[%s2851 + $0x88] sm:$0xff]
        %v2870 = vld [vmem:[%s2851 + $0x90] sm:$0xff]
        %v2871 = vld [vmem:[%s2851 + $0x98] sm:$0xff]
        %v2872 = vld [vmem:[%s2851 + $0xa0] sm:$0xff]
        %v2873 = vld [vmem:[%s2851 + $0xa8] sm:$0xff]
        %v2874 = vld [vmem:[%s2851 + $0xb0] sm:$0xff]
        %v2875 = vld [vmem:[%s2851 + $0xb8] sm:$0xff]
        %v2876 = vld [vmem:[%s2851 + $0xc0] sm:$0xff]
        %v2877 = vld [vmem:[%s2851 + $0xc8] sm:$0xff]
        %v2878 = vld [vmem:[%s2851 + $0xd0] sm:$0xff]
        %v2879 = vld [vmem:[%s2851 + $0xd8] sm:$0xff]
        %v2880 = vld [vmem:[%s2851 + $0xe0] sm:$0xff]
        %v2881 = vld [vmem:[%s2851 + $0xe8] sm:$0xff]
        %v2882 = vld [vmem:[%s2851 + $0xf0] sm:$0xff]
        %v2883 = vld [vmem:[%s2851 + $0xf8] sm:$0xff]
        %v2916 = vunpack.c.l.b16 %v2852
        %v2917 = vunpack.c.h.b16 %v2852
        %v2918 = vunpack.c.l.b16 %v2853
        %v2919 = vunpack.c.h.b16 %v2853
        %v2920 = vunpack.c.l.b16 %v2854
        %v2921 = vunpack.c.h.b16 %v2854
        %v2922 = vunpack.c.l.b16 %v2855
        %v2923 = vunpack.c.h.b16 %v2855
        %v2924 = vunpack.c.l.b16 %v2856
        %v2925 = vunpack.c.h.b16 %v2856
        %v2926 = vunpack.c.l.b16 %v2857
        %v2927 = vunpack.c.h.b16 %v2857
        %v2928 = vunpack.c.l.b16 %v2858
        %v2929 = vunpack.c.h.b16 %v2858
        %v2930 = vunpack.c.l.b16 %v2859
        %v2931 = vunpack.c.h.b16 %v2859
        %v2932 = vunpack.c.l.b16 %v2860
        %v2933 = vunpack.c.h.b16 %v2860
        %v2934 = vunpack.c.l.b16 %v2861
        %v2935 = vunpack.c.h.b16 %v2861
        %v2936 = vunpack.c.l.b16 %v2862
        %v2937 = vunpack.c.h.b16 %v2862
        %v2938 = vunpack.c.l.b16 %v2863
        %v2939 = vunpack.c.h.b16 %v2863
        %v2940 = vunpack.c.l.b16 %v2864
        %v2941 = vunpack.c.h.b16 %v2864
        %v2942 = vunpack.c.l.b16 %v2865
        %v2943 = vunpack.c.h.b16 %v2865
        %v2944 = vunpack.c.l.b16 %v2866
        %v2945 = vunpack.c.h.b16 %v2866
        %v2946 = vunpack.c.l.b16 %v2867
        %v2947 = vunpack.c.h.b16 %v2867
        %v2948 = vunpack.c.l.b16 %v2868
        %v2949 = vunpack.c.h.b16 %v2868
        %v2950 = vunpack.c.l.b16 %v2869
        %v2951 = vunpack.c.h.b16 %v2869
        %v2952 = vunpack.c.l.b16 %v2870
        %v2953 = vunpack.c.h.b16 %v2870
        %v2954 = vunpack.c.l.b16 %v2871
        %v2955 = vunpack.c.h.b16 %v2871
        %v2956 = vunpack.c.l.b16 %v2872
        %v2957 = vunpack.c.h.b16 %v2872
        %v2958 = vunpack.c.l.b16 %v2873
        %v2959 = vunpack.c.h.b16 %v2873
        %v2960 = vunpack.c.l.b16 %v2874
        %v2961 = vunpack.c.h.b16 %v2874
        %v2962 = vunpack.c.l.b16 %v2875
        %v2963 = vunpack.c.h.b16 %v2875
        %v2964 = vunpack.c.l.b16 %v2876
        %v2965 = vunpack.c.h.b16 %v2876
        %v2966 = vunpack.c.l.b16 %v2877
        %v2967 = vunpack.c.h.b16 %v2877
        %v2968 = vunpack.c.l.b16 %v2878
        %v2969 = vunpack.c.h.b16 %v2878
        %v2970 = vunpack.c.l.b16 %v2879
        %v2971 = vunpack.c.h.b16 %v2879
        %v2972 = vunpack.c.l.b16 %v2880
        %v2973 = vunpack.c.h.b16 %v2880
        %v2974 = vunpack.c.l.b16 %v2881
        %v2975 = vunpack.c.h.b16 %v2881
        %v2976 = vunpack.c.l.b16 %v2882
        %v2977 = vunpack.c.h.b16 %v2882
        %v2978 = vunpack.c.l.b16 %v2883
        %v2979 = vunpack.c.h.b16 %v2883
        %v2980 = vpack.c.b16 %v2918, %v2916
        %v2981 = vpack.c.b16 %v2919, %v2917
        %v2982 = vpack.c.b16 %v2922, %v2920
        %v2983 = vpack.c.b16 %v2923, %v2921
        %v2984 = vpack.c.b16 %v2926, %v2924
        %v2985 = vpack.c.b16 %v2927, %v2925
        %v2986 = vpack.c.b16 %v2930, %v2928
        %v2987 = vpack.c.b16 %v2931, %v2929
        %v2988 = vpack.c.b16 %v2934, %v2932
        %v2989 = vpack.c.b16 %v2935, %v2933
        %v2990 = vpack.c.b16 %v2938, %v2936
        %v2991 = vpack.c.b16 %v2939, %v2937
        %v2992 = vpack.c.b16 %v2942, %v2940
        %v2993 = vpack.c.b16 %v2943, %v2941
        %v2994 = vpack.c.b16 %v2946, %v2944
        %v2995 = vpack.c.b16 %v2947, %v2945
        %v2996 = vpack.c.b16 %v2950, %v2948
        %v2997 = vpack.c.b16 %v2951, %v2949
        %v2998 = vpack.c.b16 %v2954, %v2952
        %v2999 = vpack.c.b16 %v2955, %v2953
        %v3000 = vpack.c.b16 %v2958, %v2956
        %v3001 = vpack.c.b16 %v2959, %v2957
        %v3002 = vpack.c.b16 %v2962, %v2960
        %v3003 = vpack.c.b16 %v2963, %v2961
        %v3004 = vpack.c.b16 %v2966, %v2964
        %v3005 = vpack.c.b16 %v2967, %v2965
        %v3006 = vpack.c.b16 %v2970, %v2968
        %v3007 = vpack.c.b16 %v2971, %v2969
        %v3008 = vpack.c.b16 %v2974, %v2972
        %v3009 = vpack.c.b16 %v2975, %v2973
        %v3010 = vpack.c.b16 %v2978, %v2976
        %v3011 = vpack.c.b16 %v2979, %v2977
        %3044 = vmatprep.subr.bf16.mxu0 %v2981
        %3045 = vmatpush1.bf16.msra.mxu0 %v2980
        %3046 = vmatprep.subr.bf16.mxu0 %v2983
        %3047 = vmatpush1.bf16.msra.mxu0 %v2982
        %3048 = vmatprep.subr.bf16.mxu0 %v2985
        %3049 = vmatpush1.bf16.msra.mxu0 %v2984
        %3050 = vmatprep.subr.bf16.mxu0 %v2987
        %3051 = vmatpush1.bf16.msra.mxu0 %v2986
        %3052 = vmatprep.subr.bf16.mxu0 %v2989
        %3053 = vmatpush1.bf16.msra.mxu0 %v2988
        %3054 = vmatprep.subr.bf16.mxu0 %v2991
        %3055 = vmatpush1.bf16.msra.mxu0 %v2990
        %3056 = vmatprep.subr.bf16.mxu0 %v2993
        %3057 = vmatpush1.bf16.msra.mxu0 %v2992
        %3058 = vmatprep.subr.bf16.mxu0 %v2995
        %3059 = vmatpush1.bf16.msra.mxu0 %v2994
        %3060 = vmatprep.subr.bf16.mxu0 %v2997
        %3061 = vmatpush1.bf16.msra.mxu0 %v2996
        %3062 = vmatprep.subr.bf16.mxu0 %v2999
        %3063 = vmatpush1.bf16.msra.mxu0 %v2998
        %3064 = vmatprep.subr.bf16.mxu0 %v3001
        %3065 = vmatpush1.bf16.msra.mxu0 %v3000
        %3066 = vmatprep.subr.bf16.mxu0 %v3003
        %3067 = vmatpush1.bf16.msra.mxu0 %v3002
        %3068 = vmatprep.subr.bf16.mxu0 %v3005
        %3069 = vmatpush1.bf16.msra.mxu0 %v3004
        %3070 = vmatprep.subr.bf16.mxu0 %v3007
        %3071 = vmatpush1.bf16.msra.mxu0 %v3006
        %3072 = vmatprep.subr.bf16.mxu0 %v3009
        %3073 = vmatpush1.bf16.msra.mxu0 %v3008
        %3074 = vmatprep.subr.bf16.mxu0 %v3011
        %3075 = vmatpush1.bf16.msra.mxu0 %v3010
        %3076 = vmatprep.mubr.bf16.mxu0 %v2850
        %3077 = vmatmul.mubr.bf16.gmra.mrb[0].mxu0 %v2849
        %v3078 = vpop.f32.mrb[0].mxu0
        %v3079 = vadd.f32 0.0, %v3078
        %v3080 = vpop.f32.mrb[0].mxu0
        %v3081 = vadd.f32 0.0, %v3080
        %v3082 = vpop.f32.mrb[0].mxu0
        %v3083 = vadd.f32 0.0, %v3082
        %v3084 = vpop.f32.mrb[0].mxu0
        %v3085 = vadd.f32 0.0, %v3084
        %3086 = vdwg.mxu0
        %v3087 = vadd.f32 %v2791, %v3079
        %v3088 = vadd.f32 %v2792, %v3081
        %v3089 = vadd.f32 %v2793, %v3083
        %v3090 = vadd.f32 %v2794, %v3085
        %v3091 = vld [vmem:[%s6] sm:$0x3]
        %v3093 = vlaneseq
        %v3094 = vshrl.u32 %v3093, 7
        %v3095 = vsub.s32 0, %v3094
        %v3096 = vrot.slane %v3091, %v3095
        %v3097 = vlaneseq
        %v3098 = vshrl.u32 %v3097, 7
        %v3099 = vsub.s32 1, %v3098
        %v3100 = vrot.slane %v3091, %v3099
        %v3103 = vadd.f32 %v3087, %v3096
        %v3104 = vadd.f32 %v3088, %v3100
        %v3105 = vadd.f32 %v3089, %v3096
        %v3106 = vadd.f32 %v3090, %v3100
        %vm3107 = vcmp.ge.f32.partialorder %v3103, 0.0
        %vm3108 = vcmp.ge.f32.partialorder %v3104, 0.0
        %vm3109 = vcmp.ge.f32.partialorder %v3105, 0.0
        %vm3110 = vcmp.ge.f32.partialorder %v3106, 0.0
        %v3111 = vmul.f32 %v3103, 0.2
        %v3112 = vmul.f32 %v3104, 0.2
        %v3113 = vmul.f32 %v3105, 0.2
        %v3114 = vmul.f32 %v3106, 0.2
        %v3115 = vsel %vm3107, %v3103, %v3111
        %v3116 = vsel %vm3108, %v3104, %v3112
        %v3117 = vsel %vm3109, %v3105, %v3113
        %v3118 = vsel %vm3110, %v3106, %v3114
        %v3119 = vpack.c.bf16 %v3117, %v3115
        %v3120 = vpack.c.bf16 %v3118, %v3116
        %v3121 = vld [vmem:[%s7] sm:$0xf]
        %vm3122 = vcmask 130048
        %v3124 = vsel %vm3122, %v3121, 0
        %3126 = vmatprep.subr.bf16.mxu0 %v3120
        %3127 = vmatpush1.bf16.msra.mxu0 %v3119
        %3128 = vmatprep.subr.bf16.mxu0 0
        %3129 = vmatpush1.bf16.msra.mxu0 0
        %3130 = vmatprep.subr.bf16.mxu0 0
        %3131 = vmatpush1.bf16.msra.mxu0 0
        %3132 = vmatprep.subr.bf16.mxu0 0
        %3133 = vmatpush1.bf16.msra.mxu0 0
        %3134 = vmatprep.subr.bf16.mxu0 0
        %3135 = vmatpush1.bf16.msra.mxu0 0
        %3136 = vmatprep.subr.bf16.mxu0 0
        %3137 = vmatpush1.bf16.msra.mxu0 0
        %3138 = vmatprep.subr.bf16.mxu0 0
        %3139 = vmatpush1.bf16.msra.mxu0 0
        %3140 = vmatprep.subr.bf16.mxu0 0
        %3141 = vmatpush1.bf16.msra.mxu0 0
        %3142 = vmatprep.subr.bf16.mxu0 0
        %3143 = vmatpush1.bf16.msra.mxu0 0
        %3144 = vmatprep.subr.bf16.mxu0 0
        %3145 = vmatpush1.bf16.msra.mxu0 0
        %3146 = vmatprep.subr.bf16.mxu0 0
        %3147 = vmatpush1.bf16.msra.mxu0 0
        %3148 = vmatprep.subr.bf16.mxu0 0
        %3149 = vmatpush1.bf16.msra.mxu0 0
        %3150 = vmatprep.subr.bf16.mxu0 0
        %3151 = vmatpush1.bf16.msra.mxu0 0
        %3152 = vmatprep.subr.bf16.mxu0 0
        %3153 = vmatpush1.bf16.msra.mxu0 0
        %3154 = vmatprep.subr.bf16.mxu0 0
        %3155 = vmatpush1.bf16.msra.mxu0 0
        %3156 = vmatprep.subr.bf16.mxu0 0
        %3157 = vmatpush1.bf16.msra.mxu0 0
        %3158 = vmatprep.mubr.bf16.mxu0 0
        %3159 = vmatmul.mubr.bf16.gmra.mrb[0].mxu0 %v3124
        %v3160 = vpop.f32.mrb[0].mxu0
        %v3161 = vadd.f32 0.0, %v3160
        %v3162 = vpop.f32.mrb[0].mxu0
        %v3163 = vadd.f32 0.0, %v3162
        %v3164 = vpop.f32.mrb[0].mxu0
        %v3165 = vpop.f32.mrb[0].mxu0
        %3166 = vdwg.mxu0
        %v3167 = vpack.c.bf16 %v3161, %v3161
        %v3168 = vpack.c.bf16 %v3163, %v3163
        %v3169 = vld [vmem:[#allocation4] sm:$0xff]
        %v3170 = vld [vmem:[#allocation4 + $0x8] sm:$0xff]
        %v3171 = vld [vmem:[#allocation4 + $0x10] sm:$0xff]
        %v3172 = vld [vmem:[#allocation4 + $0x18] sm:$0xff]
        %v3173 = vld [vmem:[#allocation4 + $0x20] sm:$0xff]
        %v3174 = vld [vmem:[#allocation4 + $0x28] sm:$0xff]
        %v3175 = vld [vmem:[#allocation4 + $0x30] sm:$0xff]
        %v3176 = vld [vmem:[#allocation4 + $0x38] sm:$0xff]
        %v3177 = vld [vmem:[#allocation4 + $0x40] sm:$0xff]
        %v3178 = vld [vmem:[#allocation4 + $0x48] sm:$0xff]
        %v3179 = vld [vmem:[#allocation4 + $0x50] sm:$0xff]
        %v3180 = vld [vmem:[#allocation4 + $0x58] sm:$0xff]
        %v3181 = vld [vmem:[#allocation4 + $0x60] sm:$0xff]
        %v3182 = vld [vmem:[#allocation4 + $0x68] sm:$0xff]
        %v3183 = vld [vmem:[#allocation4 + $0x70] sm:$0xff]
        %v3184 = vld [vmem:[#allocation4 + $0x78] sm:$0xff]
        %v3185 = vld [vmem:[#allocation4 + $0x80] sm:$0xff]
        %v3186 = vld [vmem:[#allocation4 + $0x88] sm:$0xff]
        %v3187 = vld [vmem:[#allocation4 + $0x90] sm:$0xff]
        %v3188 = vld [vmem:[#allocation4 + $0x98] sm:$0xff]
        %v3189 = vld [vmem:[#allocation4 + $0xa0] sm:$0xff]
        %v3190 = vld [vmem:[#allocation4 + $0xa8] sm:$0xff]
        %v3191 = vld [vmem:[#allocation4 + $0xb0] sm:$0xff]
        %v3192 = vld [vmem:[#allocation4 + $0xb8] sm:$0xff]
        %v3193 = vld [vmem:[#allocation4 + $0xc0] sm:$0xff]
        %v3194 = vld [vmem:[#allocation4 + $0xc8] sm:$0xff]
        %v3195 = vld [vmem:[#allocation4 + $0xd0] sm:$0xff]
        %v3196 = vld [vmem:[#allocation4 + $0xd8] sm:$0xff]
        %v3197 = vld [vmem:[#allocation4 + $0xe0] sm:$0xff]
        %v3198 = vld [vmem:[#allocation4 + $0xe8] sm:$0xff]
        %v3199 = vld [vmem:[#allocation4 + $0xf0] sm:$0xff]
        %v3200 = vld [vmem:[#allocation4 + $0xf8] sm:$0xff]
        %s3201 = scalar_lea.vmem %s7, 4
        %v3202 = vld [vmem:[%s3201] sm:$0xf]
        %v3204 = vsel %vm3122, %v3202, 0
        %3206 = vmatprep.subr.bf16.mxu0 %v3120
        %3207 = vmatpush1.bf16.msra.mxu0 %v3119
        %3208 = vmatprep.subr.bf16.mxu0 0
        %3209 = vmatpush1.bf16.msra.mxu0 0
        %3210 = vmatprep.subr.bf16.mxu0 0
        %3211 = vmatpush1.bf16.msra.mxu0 0
        %3212 = vmatprep.subr.bf16.mxu0 0
        %3213 = vmatpush1.bf16.msra.mxu0 0
        %3214 = vmatprep.subr.bf16.mxu0 0
        %3215 = vmatpush1.bf16.msra.mxu0 0
        %3216 = vmatprep.subr.bf16.mxu0 0
        %3217 = vmatpush1.bf16.msra.mxu0 0
        %3218 = vmatprep.subr.bf16.mxu0 0
        %3219 = vmatpush1.bf16.msra.mxu0 0
        %3220 = vmatprep.subr.bf16.mxu0 0
        %3221 = vmatpush1.bf16.msra.mxu0 0
        %3222 = vmatprep.subr.bf16.mxu0 0
        %3223 = vmatpush1.bf16.msra.mxu0 0
        %3224 = vmatprep.subr.bf16.mxu0 0
        %3225 = vmatpush1.bf16.msra.mxu0 0
        %3226 = vmatprep.subr.bf16.mxu0 0
        %3227 = vmatpush1.bf16.msra.mxu0 0
        %3228 = vmatprep.subr.bf16.mxu0 0
        %3229 = vmatpush1.bf16.msra.mxu0 0
        %3230 = vmatprep.subr.bf16.mxu0 0
        %3231 = vmatpush1.bf16.msra.mxu0 0
        %3232 = vmatprep.subr.bf16.mxu0 0
        %3233 = vmatpush1.bf16.msra.mxu0 0
        %3234 = vmatprep.subr.bf16.mxu0 0
        %3235 = vmatpush1.bf16.msra.mxu0 0
        %3236 = vmatprep.subr.bf16.mxu0 0
        %3237 = vmatpush1.bf16.msra.mxu0 0
        %3238 = vmatprep.mubr.bf16.mxu0 0
        %3239 = vmatmul.mubr.bf16.gmra.mrb[0].mxu0 %v3204
        %v3240 = vpop.f32.mrb[0].mxu0
        %v3241 = vadd.f32 0.0, %v3240
        %v3242 = vpop.f32.mrb[0].mxu0
        %v3243 = vadd.f32 0.0, %v3242
        %v3244 = vpop.f32.mrb[0].mxu0
        %v3245 = vpop.f32.mrb[0].mxu0
        %3246 = vdwg.mxu0
        %v3247 = vpack.c.bf16 %v3241, %v3241
        %v3248 = vpack.c.bf16 %v3243, %v3243
        %s3249 = scalar_lea.vmem [#allocation4], 256
        %v3250 = vld [vmem:[%s3249] sm:$0xff]
        %v3251 = vld [vmem:[%s3249 + $0x8] sm:$0xff]
        %v3252 = vld [vmem:[%s3249 + $0x10] sm:$0xff]
        %v3253 = vld [vmem:[%s3249 + $0x18] sm:$0xff]
        %v3254 = vld [vmem:[%s3249 + $0x20] sm:$0xff]
        %v3255 = vld [vmem:[%s3249 + $0x28] sm:$0xff]
        %v3256 = vld [vmem:[%s3249 + $0x30] sm:$0xff]
        %v3257 = vld [vmem:[%s3249 + $0x38] sm:$0xff]
        %v3258 = vld [vmem:[%s3249 + $0x40] sm:$0xff]
        %v3259 = vld [vmem:[%s3249 + $0x48] sm:$0xff]
        %v3260 = vld [vmem:[%s3249 + $0x50] sm:$0xff]
        %v3261 = vld [vmem:[%s3249 + $0x58] sm:$0xff]
        %v3262 = vld [vmem:[%s3249 + $0x60] sm:$0xff]
        %v3263 = vld [vmem:[%s3249 + $0x68] sm:$0xff]
        %v3264 = vld [vmem:[%s3249 + $0x70] sm:$0xff]
        %v3265 = vld [vmem:[%s3249 + $0x78] sm:$0xff]
        %v3266 = vld [vmem:[%s3249 + $0x80] sm:$0xff]
        %v3267 = vld [vmem:[%s3249 + $0x88] sm:$0xff]
        %v3268 = vld [vmem:[%s3249 + $0x90] sm:$0xff]
        %v3269 = vld [vmem:[%s3249 + $0x98] sm:$0xff]
        %v3270 = vld [vmem:[%s3249 + $0xa0] sm:$0xff]
        %v3271 = vld [vmem:[%s3249 + $0xa8] sm:$0xff]
        %v3272 = vld [vmem:[%s3249 + $0xb0] sm:$0xff]
        %v3273 = vld [vmem:[%s3249 + $0xb8] sm:$0xff]
        %v3274 = vld [vmem:[%s3249 + $0xc0] sm:$0xff]
        %v3275 = vld [vmem:[%s3249 + $0xc8] sm:$0xff]
        %v3276 = vld [vmem:[%s3249 + $0xd0] sm:$0xff]
        %v3277 = vld [vmem:[%s3249 + $0xd8] sm:$0xff]
        %v3278 = vld [vmem:[%s3249 + $0xe0] sm:$0xff]
        %v3279 = vld [vmem:[%s3249 + $0xe8] sm:$0xff]
        %v3280 = vld [vmem:[%s3249 + $0xf0] sm:$0xff]
        %v3281 = vld [vmem:[%s3249 + $0xf8] sm:$0xff]
        %v3314 = vunpack.c.l.b16 %v3250
        %v3315 = vunpack.c.h.b16 %v3250
        %v3316 = vunpack.c.l.b16 %v3251
        %v3317 = vunpack.c.h.b16 %v3251
        %v3318 = vunpack.c.l.b16 %v3252
        %v3319 = vunpack.c.h.b16 %v3252
        %v3320 = vunpack.c.l.b16 %v3253
        %v3321 = vunpack.c.h.b16 %v3253
        %v3322 = vunpack.c.l.b16 %v3254
        %v3323 = vunpack.c.h.b16 %v3254
        %v3324 = vunpack.c.l.b16 %v3255
        %v3325 = vunpack.c.h.b16 %v3255
        %v3326 = vunpack.c.l.b16 %v3256
        %v3327 = vunpack.c.h.b16 %v3256
        %v3328 = vunpack.c.l.b16 %v3257
        %v3329 = vunpack.c.h.b16 %v3257
        %v3330 = vunpack.c.l.b16 %v3258
        %v3331 = vunpack.c.h.b16 %v3258
        %v3332 = vunpack.c.l.b16 %v3259
        %v3333 = vunpack.c.h.b16 %v3259
        %v3334 = vunpack.c.l.b16 %v3260
        %v3335 = vunpack.c.h.b16 %v3260
        %v3336 = vunpack.c.l.b16 %v3261
        %v3337 = vunpack.c.h.b16 %v3261
        %v3338 = vunpack.c.l.b16 %v3262
        %v3339 = vunpack.c.h.b16 %v3262
        %v3340 = vunpack.c.l.b16 %v3263
        %v3341 = vunpack.c.h.b16 %v3263
        %v3342 = vunpack.c.l.b16 %v3264
        %v3343 = vunpack.c.h.b16 %v3264
        %v3344 = vunpack.c.l.b16 %v3265
        %v3345 = vunpack.c.h.b16 %v3265
        %v3346 = vunpack.c.l.b16 %v3266
        %v3347 = vunpack.c.h.b16 %v3266
        %v3348 = vunpack.c.l.b16 %v3267
        %v3349 = vunpack.c.h.b16 %v3267
        %v3350 = vunpack.c.l.b16 %v3268
        %v3351 = vunpack.c.h.b16 %v3268
        %v3352 = vunpack.c.l.b16 %v3269
        %v3353 = vunpack.c.h.b16 %v3269
        %v3354 = vunpack.c.l.b16 %v3270
        %v3355 = vunpack.c.h.b16 %v3270
        %v3356 = vunpack.c.l.b16 %v3271
        %v3357 = vunpack.c.h.b16 %v3271
        %v3358 = vunpack.c.l.b16 %v3272
        %v3359 = vunpack.c.h.b16 %v3272
        %v3360 = vunpack.c.l.b16 %v3273
        %v3361 = vunpack.c.h.b16 %v3273
        %v3362 = vunpack.c.l.b16 %v3274
        %v3363 = vunpack.c.h.b16 %v3274
        %v3364 = vunpack.c.l.b16 %v3275
        %v3365 = vunpack.c.h.b16 %v3275
        %v3366 = vunpack.c.l.b16 %v3276
        %v3367 = vunpack.c.h.b16 %v3276
        %v3368 = vunpack.c.l.b16 %v3277
        %v3369 = vunpack.c.h.b16 %v3277
        %v3370 = vunpack.c.l.b16 %v3278
        %v3371 = vunpack.c.h.b16 %v3278
        %v3372 = vunpack.c.l.b16 %v3279
        %v3373 = vunpack.c.h.b16 %v3279
        %v3374 = vunpack.c.l.b16 %v3280
        %v3375 = vunpack.c.h.b16 %v3280
        %v3376 = vunpack.c.l.b16 %v3281
        %v3377 = vunpack.c.h.b16 %v3281
        %v3378 = vpack.c.b16 %v3316, %v3314
        %v3379 = vpack.c.b16 %v3317, %v3315
        %v3380 = vpack.c.b16 %v3320, %v3318
        %v3381 = vpack.c.b16 %v3321, %v3319
        %v3382 = vpack.c.b16 %v3324, %v3322
        %v3383 = vpack.c.b16 %v3325, %v3323
        %v3384 = vpack.c.b16 %v3328, %v3326
        %v3385 = vpack.c.b16 %v3329, %v3327
        %v3386 = vpack.c.b16 %v3332, %v3330
        %v3387 = vpack.c.b16 %v3333, %v3331
        %v3388 = vpack.c.b16 %v3336, %v3334
        %v3389 = vpack.c.b16 %v3337, %v3335
        %v3390 = vpack.c.b16 %v3340, %v3338
        %v3391 = vpack.c.b16 %v3341, %v3339
        %v3392 = vpack.c.b16 %v3344, %v3342
        %v3393 = vpack.c.b16 %v3345, %v3343
        %v3394 = vpack.c.b16 %v3348, %v3346
        %v3395 = vpack.c.b16 %v3349, %v3347
        %v3396 = vpack.c.b16 %v3352, %v3350
        %v3397 = vpack.c.b16 %v3353, %v3351
        %v3398 = vpack.c.b16 %v3356, %v3354
        %v3399 = vpack.c.b16 %v3357, %v3355
        %v3400 = vpack.c.b16 %v3360, %v3358
        %v3401 = vpack.c.b16 %v3361, %v3359
        %v3402 = vpack.c.b16 %v3364, %v3362
        %v3403 = vpack.c.b16 %v3365, %v3363
        %v3404 = vpack.c.b16 %v3368, %v3366
        %v3405 = vpack.c.b16 %v3369, %v3367
        %v3406 = vpack.c.b16 %v3372, %v3370
        %v3407 = vpack.c.b16 %v3373, %v3371
        %v3408 = vpack.c.b16 %v3376, %v3374
        %v3409 = vpack.c.b16 %v3377, %v3375
        %3442 = vmatprep.subr.bf16.mxu0 %v3379
        %3443 = vmatpush1.bf16.msra.mxu0 %v3378
        %3444 = vmatprep.subr.bf16.mxu0 %v3381
        %3445 = vmatpush1.bf16.msra.mxu0 %v3380
        %3446 = vmatprep.subr.bf16.mxu0 %v3383
        %3447 = vmatpush1.bf16.msra.mxu0 %v3382
        %3448 = vmatprep.subr.bf16.mxu0 %v3385
        %3449 = vmatpush1.bf16.msra.mxu0 %v3384
        %3450 = vmatprep.subr.bf16.mxu0 %v3387
        %3451 = vmatpush1.bf16.msra.mxu0 %v3386
        %3452 = vmatprep.subr.bf16.mxu0 %v3389
        %3453 = vmatpush1.bf16.msra.mxu0 %v3388
        %3454 = vmatprep.subr.bf16.mxu0 %v3391
        %3455 = vmatpush1.bf16.msra.mxu0 %v3390
        %3456 = vmatprep.subr.bf16.mxu0 %v3393
        %3457 = vmatpush1.bf16.msra.mxu0 %v3392
        %3458 = vmatprep.subr.bf16.mxu0 %v3395
        %3459 = vmatpush1.bf16.msra.mxu0 %v3394
        %3460 = vmatprep.subr.bf16.mxu0 %v3397
        %3461 = vmatpush1.bf16.msra.mxu0 %v3396
        %3462 = vmatprep.subr.bf16.mxu0 %v3399
        %3463 = vmatpush1.bf16.msra.mxu0 %v3398
        %3464 = vmatprep.subr.bf16.mxu0 %v3401
        %3465 = vmatpush1.bf16.msra.mxu0 %v3400
        %3466 = vmatprep.subr.bf16.mxu0 %v3403
        %3467 = vmatpush1.bf16.msra.mxu0 %v3402
        %3468 = vmatprep.subr.bf16.mxu0 %v3405
        %3469 = vmatpush1.bf16.msra.mxu0 %v3404
        %3470 = vmatprep.subr.bf16.mxu0 %v3407
        %3471 = vmatpush1.bf16.msra.mxu0 %v3406
        %3472 = vmatprep.subr.bf16.mxu0 %v3409
        %3473 = vmatpush1.bf16.msra.mxu0 %v3408
        %3474 = vmatprep.mubr.bf16.mxu0 %v3248
        %3475 = vmatmul.mubr.bf16.gmra.mrb[0].mxu0 %v3247
        %v3476 = vpop.f32.mrb[0].mxu0
        %v3477 = vadd.f32 0.0, %v3476
        %v3478 = vpop.f32.mrb[0].mxu0
        %v3479 = vadd.f32 0.0, %v3478
        %v3480 = vpop.f32.mrb[0].mxu0
        %v3481 = vpop.f32.mrb[0].mxu0
        %3482 = vdwg.mxu0
        %v3515 = vunpack.c.l.b16 %v3169
        %v3516 = vunpack.c.h.b16 %v3169
        %v3517 = vunpack.c.l.b16 %v3170
        %v3518 = vunpack.c.h.b16 %v3170
        %v3519 = vunpack.c.l.b16 %v3171
        %v3520 = vunpack.c.h.b16 %v3171
        %v3521 = vunpack.c.l.b16 %v3172
        %v3522 = vunpack.c.h.b16 %v3172
        %v3523 = vunpack.c.l.b16 %v3173
        %v3524 = vunpack.c.h.b16 %v3173
        %v3525 = vunpack.c.l.b16 %v3174
        %v3526 = vunpack.c.h.b16 %v3174
        %v3527 = vunpack.c.l.b16 %v3175
        %v3528 = vunpack.c.h.b16 %v3175
        %v3529 = vunpack.c.l.b16 %v3176
        %v3530 = vunpack.c.h.b16 %v3176
        %v3531 = vunpack.c.l.b16 %v3177
        %v3532 = vunpack.c.h.b16 %v3177
        %v3533 = vunpack.c.l.b16 %v3178
        %v3534 = vunpack.c.h.b16 %v3178
        %v3535 = vunpack.c.l.b16 %v3179
        %v3536 = vunpack.c.h.b16 %v3179
        %v3537 = vunpack.c.l.b16 %v3180
        %v3538 = vunpack.c.h.b16 %v3180
        %v3539 = vunpack.c.l.b16 %v3181
        %v3540 = vunpack.c.h.b16 %v3181
        %v3541 = vunpack.c.l.b16 %v3182
        %v3542 = vunpack.c.h.b16 %v3182
        %v3543 = vunpack.c.l.b16 %v3183
        %v3544 = vunpack.c.h.b16 %v3183
        %v3545 = vunpack.c.l.b16 %v3184
        %v3546 = vunpack.c.h.b16 %v3184
        %v3547 = vunpack.c.l.b16 %v3185
        %v3548 = vunpack.c.h.b16 %v3185
        %v3549 = vunpack.c.l.b16 %v3186
        %v3550 = vunpack.c.h.b16 %v3186
        %v3551 = vunpack.c.l.b16 %v3187
        %v3552 = vunpack.c.h.b16 %v3187
        %v3553 = vunpack.c.l.b16 %v3188
        %v3554 = vunpack.c.h.b16 %v3188
        %v3555 = vunpack.c.l.b16 %v3189
        %v3556 = vunpack.c.h.b16 %v3189
        %v3557 = vunpack.c.l.b16 %v3190
        %v3558 = vunpack.c.h.b16 %v3190
        %v3559 = vunpack.c.l.b16 %v3191
        %v3560 = vunpack.c.h.b16 %v3191
        %v3561 = vunpack.c.l.b16 %v3192
        %v3562 = vunpack.c.h.b16 %v3192
        %v3563 = vunpack.c.l.b16 %v3193
        %v3564 = vunpack.c.h.b16 %v3193
        %v3565 = vunpack.c.l.b16 %v3194
        %v3566 = vunpack.c.h.b16 %v3194
        %v3567 = vunpack.c.l.b16 %v3195
        %v3568 = vunpack.c.h.b16 %v3195
        %v3569 = vunpack.c.l.b16 %v3196
        %v3570 = vunpack.c.h.b16 %v3196
        %v3571 = vunpack.c.l.b16 %v3197
        %v3572 = vunpack.c.h.b16 %v3197
        %v3573 = vunpack.c.l.b16 %v3198
        %v3574 = vunpack.c.h.b16 %v3198
        %v3575 = vunpack.c.l.b16 %v3199
        %v3576 = vunpack.c.h.b16 %v3199
        %v3577 = vunpack.c.l.b16 %v3200
        %v3578 = vunpack.c.h.b16 %v3200
        %v3579 = vpack.c.b16 %v3517, %v3515
        %v3580 = vpack.c.b16 %v3518, %v3516
        %v3581 = vpack.c.b16 %v3521, %v3519
        %v3582 = vpack.c.b16 %v3522, %v3520
        %v3583 = vpack.c.b16 %v3525, %v3523
        %v3584 = vpack.c.b16 %v3526, %v3524
        %v3585 = vpack.c.b16 %v3529, %v3527
        %v3586 = vpack.c.b16 %v3530, %v3528
        %v3587 = vpack.c.b16 %v3533, %v3531
        %v3588 = vpack.c.b16 %v3534, %v3532
        %v3589 = vpack.c.b16 %v3537, %v3535
        %v3590 = vpack.c.b16 %v3538, %v3536
        %v3591 = vpack.c.b16 %v3541, %v3539
        %v3592 = vpack.c.b16 %v3542, %v3540
        %v3593 = vpack.c.b16 %v3545, %v3543
        %v3594 = vpack.c.b16 %v3546, %v3544
        %v3595 = vpack.c.b16 %v3549, %v3547
        %v3596 = vpack.c.b16 %v3550, %v3548
        %v3597 = vpack.c.b16 %v3553, %v3551
        %v3598 = vpack.c.b16 %v3554, %v3552
        %v3599 = vpack.c.b16 %v3557, %v3555
        %v3600 = vpack.c.b16 %v3558, %v3556
        %v3601 = vpack.c.b16 %v3561, %v3559
        %v3602 = vpack.c.b16 %v3562, %v3560
        %v3603 = vpack.c.b16 %v3565, %v3563
        %v3604 = vpack.c.b16 %v3566, %v3564
        %v3605 = vpack.c.b16 %v3569, %v3567
        %v3606 = vpack.c.b16 %v3570, %v3568
        %v3607 = vpack.c.b16 %v3573, %v3571
        %v3608 = vpack.c.b16 %v3574, %v3572
        %v3609 = vpack.c.b16 %v3577, %v3575
        %v3610 = vpack.c.b16 %v3578, %v3576
        %3643 = vmatprep.subr.bf16.mxu0 %v3580
        %3644 = vmatpush1.bf16.msra.mxu0 %v3579
        %3645 = vmatprep.subr.bf16.mxu0 %v3582
        %3646 = vmatpush1.bf16.msra.mxu0 %v3581
        %3647 = vmatprep.subr.bf16.mxu0 %v3584
        %3648 = vmatpush1.bf16.msra.mxu0 %v3583
        %3649 = vmatprep.subr.bf16.mxu0 %v3586
        %3650 = vmatpush1.bf16.msra.mxu0 %v3585
        %3651 = vmatprep.subr.bf16.mxu0 %v3588
        %3652 = vmatpush1.bf16.msra.mxu0 %v3587
        %3653 = vmatprep.subr.bf16.mxu0 %v3590
        %3654 = vmatpush1.bf16.msra.mxu0 %v3589
        %3655 = vmatprep.subr.bf16.mxu0 %v3592
        %3656 = vmatpush1.bf16.msra.mxu0 %v3591
        %3657 = vmatprep.subr.bf16.mxu0 %v3594
        %3658 = vmatpush1.bf16.msra.mxu0 %v3593
        %3659 = vmatprep.subr.bf16.mxu0 %v3596
        %3660 = vmatpush1.bf16.msra.mxu0 %v3595
        %3661 = vmatprep.subr.bf16.mxu0 %v3598
        %3662 = vmatpush1.bf16.msra.mxu0 %v3597
        %3663 = vmatprep.subr.bf16.mxu0 %v3600
        %3664 = vmatpush1.bf16.msra.mxu0 %v3599
        %3665 = vmatprep.subr.bf16.mxu0 %v3602
        %3666 = vmatpush1.bf16.msra.mxu0 %v3601
        %3667 = vmatprep.subr.bf16.mxu0 %v3604
        %3668 = vmatpush1.bf16.msra.mxu0 %v3603
        %3669 = vmatprep.subr.bf16.mxu0 %v3606
        %3670 = vmatpush1.bf16.msra.mxu0 %v3605
        %3671 = vmatprep.subr.bf16.mxu0 %v3608
        %3672 = vmatpush1.bf16.msra.mxu0 %v3607
        %3673 = vmatprep.subr.bf16.mxu0 %v3610
        %3674 = vmatpush1.bf16.msra.mxu0 %v3609
        %3675 = vmatprep.mubr.bf16.mxu0 %v3168
        %3676 = vmatmul.mubr.bf16.gmra.mrb[0].mxu0 %v3167
        %v3677 = vpop.f32.mrb[0].mxu0
        %v3678 = vadd.f32 %v3477, %v3677
        %v3679 = vpop.f32.mrb[0].mxu0
        %v3680 = vadd.f32 %v3479, %v3679
        %v3681 = vpop.f32.mrb[0].mxu0
        %v3682 = vpop.f32.mrb[0].mxu0
        %3683 = vdwg.mxu0
        %s3684 = scalar_lea.vmem %s7, 8
        %v3685 = vld [vmem:[%s3684] sm:$0xf]
        %v3687 = vsel %vm3122, %v3685, 0
        %3689 = vmatprep.subr.bf16.mxu0 %v3120
        %3690 = vmatpush1.bf16.msra.mxu0 %v3119
        %3691 = vmatprep.subr.bf16.mxu0 0
        %3692 = vmatpush1.bf16.msra.mxu0 0
        %3693 = vmatprep.subr.bf16.mxu0 0
        %3694 = vmatpush1.bf16.msra.mxu0 0
        %3695 = vmatprep.subr.bf16.mxu0 0
        %3696 = vmatpush1.bf16.msra.mxu0 0
        %3697 = vmatprep.subr.bf16.mxu0 0
        %3698 = vmatpush1.bf16.msra.mxu0 0
        %3699 = vmatprep.subr.bf16.mxu0 0
        %3700 = vmatpush1.bf16.msra.mxu0 0
        %3701 = vmatprep.subr.bf16.mxu0 0
        %3702 = vmatpush1.bf16.msra.mxu0 0
        %3703 = vmatprep.subr.bf16.mxu0 0
        %3704 = vmatpush1.bf16.msra.mxu0 0
        %3705 = vmatprep.subr.bf16.mxu0 0
        %3706 = vmatpush1.bf16.msra.mxu0 0
        %3707 = vmatprep.subr.bf16.mxu0 0
        %3708 = vmatpush1.bf16.msra.mxu0 0
        %3709 = vmatprep.subr.bf16.mxu0 0
        %3710 = vmatpush1.bf16.msra.mxu0 0
        %3711 = vmatprep.subr.bf16.mxu0 0
        %3712 = vmatpush1.bf16.msra.mxu0 0
        %3713 = vmatprep.subr.bf16.mxu0 0
        %3714 = vmatpush1.bf16.msra.mxu0 0
        %3715 = vmatprep.subr.bf16.mxu0 0
        %3716 = vmatpush1.bf16.msra.mxu0 0
        %3717 = vmatprep.subr.bf16.mxu0 0
        %3718 = vmatpush1.bf16.msra.mxu0 0
        %3719 = vmatprep.subr.bf16.mxu0 0
        %3720 = vmatpush1.bf16.msra.mxu0 0
        %3721 = vmatprep.mubr.bf16.mxu0 0
        %3722 = vmatmul.mubr.bf16.gmra.mrb[0].mxu0 %v3687
        %v3723 = vpop.f32.mrb[0].mxu0
        %v3724 = vadd.f32 0.0, %v3723
        %v3725 = vpop.f32.mrb[0].mxu0
        %v3726 = vadd.f32 0.0, %v3725
        %v3727 = vpop.f32.mrb[0].mxu0
        %v3728 = vpop.f32.mrb[0].mxu0
        %3729 = vdwg.mxu0
        %v3730 = vpack.c.bf16 %v3724, %v3724
        %v3731 = vpack.c.bf16 %v3726, %v3726
        %s3732 = scalar_lea.vmem [#allocation4], 512
        %v3733 = vld [vmem:[%s3732] sm:$0xff]
        %v3734 = vld [vmem:[%s3732 + $0x8] sm:$0xff]
        %v3735 = vld [vmem:[%s3732 + $0x10] sm:$0xff]
        %v3736 = vld [vmem:[%s3732 + $0x18] sm:$0xff]
        %v3737 = vld [vmem:[%s3732 + $0x20] sm:$0xff]
        %v3738 = vld [vmem:[%s3732 + $0x28] sm:$0xff]
        %v3739 = vld [vmem:[%s3732 + $0x30] sm:$0xff]
        %v3740 = vld [vmem:[%s3732 + $0x38] sm:$0xff]
        %v3741 = vld [vmem:[%s3732 + $0x40] sm:$0xff]
        %v3742 = vld [vmem:[%s3732 + $0x48] sm:$0xff]
        %v3743 = vld [vmem:[%s3732 + $0x50] sm:$0xff]
        %v3744 = vld [vmem:[%s3732 + $0x58] sm:$0xff]
        %v3745 = vld [vmem:[%s3732 + $0x60] sm:$0xff]
        %v3746 = vld [vmem:[%s3732 + $0x68] sm:$0xff]
        %v3747 = vld [vmem:[%s3732 + $0x70] sm:$0xff]
        %v3748 = vld [vmem:[%s3732 + $0x78] sm:$0xff]
        %v3749 = vld [vmem:[%s3732 + $0x80] sm:$0xff]
        %v3750 = vld [vmem:[%s3732 + $0x88] sm:$0xff]
        %v3751 = vld [vmem:[%s3732 + $0x90] sm:$0xff]
        %v3752 = vld [vmem:[%s3732 + $0x98] sm:$0xff]
        %v3753 = vld [vmem:[%s3732 + $0xa0] sm:$0xff]
        %v3754 = vld [vmem:[%s3732 + $0xa8] sm:$0xff]
        %v3755 = vld [vmem:[%s3732 + $0xb0] sm:$0xff]
        %v3756 = vld [vmem:[%s3732 + $0xb8] sm:$0xff]
        %v3757 = vld [vmem:[%s3732 + $0xc0] sm:$0xff]
        %v3758 = vld [vmem:[%s3732 + $0xc8] sm:$0xff]
        %v3759 = vld [vmem:[%s3732 + $0xd0] sm:$0xff]
        %v3760 = vld [vmem:[%s3732 + $0xd8] sm:$0xff]
        %v3761 = vld [vmem:[%s3732 + $0xe0] sm:$0xff]
        %v3762 = vld [vmem:[%s3732 + $0xe8] sm:$0xff]
        %v3763 = vld [vmem:[%s3732 + $0xf0] sm:$0xff]
        %v3764 = vld [vmem:[%s3732 + $0xf8] sm:$0xff]
        %v3797 = vunpack.c.l.b16 %v3733
        %v3798 = vunpack.c.h.b16 %v3733
        %v3799 = vunpack.c.l.b16 %v3734
        %v3800 = vunpack.c.h.b16 %v3734
        %v3801 = vunpack.c.l.b16 %v3735
        %v3802 = vunpack.c.h.b16 %v3735
        %v3803 = vunpack.c.l.b16 %v3736
        %v3804 = vunpack.c.h.b16 %v3736
        %v3805 = vunpack.c.l.b16 %v3737
        %v3806 = vunpack.c.h.b16 %v3737
        %v3807 = vunpack.c.l.b16 %v3738
        %v3808 = vunpack.c.h.b16 %v3738
        %v3809 = vunpack.c.l.b16 %v3739
        %v3810 = vunpack.c.h.b16 %v3739
        %v3811 = vunpack.c.l.b16 %v3740
        %v3812 = vunpack.c.h.b16 %v3740
        %v3813 = vunpack.c.l.b16 %v3741
        %v3814 = vunpack.c.h.b16 %v3741
        %v3815 = vunpack.c.l.b16 %v3742
        %v3816 = vunpack.c.h.b16 %v3742
        %v3817 = vunpack.c.l.b16 %v3743
        %v3818 = vunpack.c.h.b16 %v3743
        %v3819 = vunpack.c.l.b16 %v3744
        %v3820 = vunpack.c.h.b16 %v3744
        %v3821 = vunpack.c.l.b16 %v3745
        %v3822 = vunpack.c.h.b16 %v3745
        %v3823 = vunpack.c.l.b16 %v3746
        %v3824 = vunpack.c.h.b16 %v3746
        %v3825 = vunpack.c.l.b16 %v3747
        %v3826 = vunpack.c.h.b16 %v3747
        %v3827 = vunpack.c.l.b16 %v3748
        %v3828 = vunpack.c.h.b16 %v3748
        %v3829 = vunpack.c.l.b16 %v3749
        %v3830 = vunpack.c.h.b16 %v3749
        %v3831 = vunpack.c.l.b16 %v3750
        %v3832 = vunpack.c.h.b16 %v3750
        %v3833 = vunpack.c.l.b16 %v3751
        %v3834 = vunpack.c.h.b16 %v3751
        %v3835 = vunpack.c.l.b16 %v3752
        %v3836 = vunpack.c.h.b16 %v3752
        %v3837 = vunpack.c.l.b16 %v3753
        %v3838 = vunpack.c.h.b16 %v3753
        %v3839 = vunpack.c.l.b16 %v3754
        %v3840 = vunpack.c.h.b16 %v3754
        %v3841 = vunpack.c.l.b16 %v3755
        %v3842 = vunpack.c.h.b16 %v3755
        %v3843 = vunpack.c.l.b16 %v3756
        %v3844 = vunpack.c.h.b16 %v3756
        %v3845 = vunpack.c.l.b16 %v3757
        %v3846 = vunpack.c.h.b16 %v3757
        %v3847 = vunpack.c.l.b16 %v3758
        %v3848 = vunpack.c.h.b16 %v3758
        %v3849 = vunpack.c.l.b16 %v3759
        %v3850 = vunpack.c.h.b16 %v3759
        %v3851 = vunpack.c.l.b16 %v3760
        %v3852 = vunpack.c.h.b16 %v3760
        %v3853 = vunpack.c.l.b16 %v3761
        %v3854 = vunpack.c.h.b16 %v3761
        %v3855 = vunpack.c.l.b16 %v3762
        %v3856 = vunpack.c.h.b16 %v3762
        %v3857 = vunpack.c.l.b16 %v3763
        %v3858 = vunpack.c.h.b16 %v3763
        %v3859 = vunpack.c.l.b16 %v3764
        %v3860 = vunpack.c.h.b16 %v3764
        %v3861 = vpack.c.b16 %v3799, %v3797
        %v3862 = vpack.c.b16 %v3800, %v3798
        %v3863 = vpack.c.b16 %v3803, %v3801
        %v3864 = vpack.c.b16 %v3804, %v3802
        %v3865 = vpack.c.b16 %v3807, %v3805
        %v3866 = vpack.c.b16 %v3808, %v3806
        %v3867 = vpack.c.b16 %v3811, %v3809
        %v3868 = vpack.c.b16 %v3812, %v3810
        %v3869 = vpack.c.b16 %v3815, %v3813
        %v3870 = vpack.c.b16 %v3816, %v3814
        %v3871 = vpack.c.b16 %v3819, %v3817
        %v3872 = vpack.c.b16 %v3820, %v3818
        %v3873 = vpack.c.b16 %v3823, %v3821
        %v3874 = vpack.c.b16 %v3824, %v3822
        %v3875 = vpack.c.b16 %v3827, %v3825
        %v3876 = vpack.c.b16 %v3828, %v3826
        %v3877 = vpack.c.b16 %v3831, %v3829
        %v3878 = vpack.c.b16 %v3832, %v3830
        %v3879 = vpack.c.b16 %v3835, %v3833
        %v3880 = vpack.c.b16 %v3836, %v3834
        %v3881 = vpack.c.b16 %v3839, %v3837
        %v3882 = vpack.c.b16 %v3840, %v3838
        %v3883 = vpack.c.b16 %v3843, %v3841
        %v3884 = vpack.c.b16 %v3844, %v3842
        %v3885 = vpack.c.b16 %v3847, %v3845
        %v3886 = vpack.c.b16 %v3848, %v3846
        %v3887 = vpack.c.b16 %v3851, %v3849
        %v3888 = vpack.c.b16 %v3852, %v3850
        %v3889 = vpack.c.b16 %v3855, %v3853
        %v3890 = vpack.c.b16 %v3856, %v3854
        %v3891 = vpack.c.b16 %v3859, %v3857
        %v3892 = vpack.c.b16 %v3860, %v3858
        %3925 = vmatprep.subr.bf16.mxu0 %v3862
        %3926 = vmatpush1.bf16.msra.mxu0 %v3861
        %3927 = vmatprep.subr.bf16.mxu0 %v3864
        %3928 = vmatpush1.bf16.msra.mxu0 %v3863
        %3929 = vmatprep.subr.bf16.mxu0 %v3866
        %3930 = vmatpush1.bf16.msra.mxu0 %v3865
        %3931 = vmatprep.subr.bf16.mxu0 %v3868
        %3932 = vmatpush1.bf16.msra.mxu0 %v3867
        %3933 = vmatprep.subr.bf16.mxu0 %v3870
        %3934 = vmatpush1.bf16.msra.mxu0 %v3869
        %3935 = vmatprep.subr.bf16.mxu0 %v3872
        %3936 = vmatpush1.bf16.msra.mxu0 %v3871
        %3937 = vmatprep.subr.bf16.mxu0 %v3874
        %3938 = vmatpush1.bf16.msra.mxu0 %v3873
        %3939 = vmatprep.subr.bf16.mxu0 %v3876
        %3940 = vmatpush1.bf16.msra.mxu0 %v3875
        %3941 = vmatprep.subr.bf16.mxu0 %v3878
        %3942 = vmatpush1.bf16.msra.mxu0 %v3877
        %3943 = vmatprep.subr.bf16.mxu0 %v3880
        %3944 = vmatpush1.bf16.msra.mxu0 %v3879
        %3945 = vmatprep.subr.bf16.mxu0 %v3882
        %3946 = vmatpush1.bf16.msra.mxu0 %v3881
        %3947 = vmatprep.subr.bf16.mxu0 %v3884
        %3948 = vmatpush1.bf16.msra.mxu0 %v3883
        %3949 = vmatprep.subr.bf16.mxu0 %v3886
        %3950 = vmatpush1.bf16.msra.mxu0 %v3885
        %3951 = vmatprep.subr.bf16.mxu0 %v3888
        %3952 = vmatpush1.bf16.msra.mxu0 %v3887
        %3953 = vmatprep.subr.bf16.mxu0 %v3890
        %3954 = vmatpush1.bf16.msra.mxu0 %v3889
        %3955 = vmatprep.subr.bf16.mxu0 %v3892
        %3956 = vmatpush1.bf16.msra.mxu0 %v3891
        %3957 = vmatprep.mubr.bf16.mxu0 %v3731
        %3958 = vmatmul.mubr.bf16.gmra.mrb[0].mxu0 %v3730
        %v3959 = vpop.f32.mrb[0].mxu0
        %v3960 = vadd.f32 0.0, %v3959
        %v3961 = vpop.f32.mrb[0].mxu0
        %v3962 = vadd.f32 0.0, %v3961
        %v3963 = vpop.f32.mrb[0].mxu0
        %v3964 = vpop.f32.mrb[0].mxu0
        %3965 = vdwg.mxu0
        %v3966 = vadd.f32 %v3678, %v3960
        %v3967 = vadd.f32 %v3680, %v3962
        %s3968 = scalar_lea.vmem %s7, 12
        %v3969 = vld [vmem:[%s3968] sm:$0xf]
        %v3971 = vsel %vm3122, %v3969, 0
        %3973 = vmatprep.subr.bf16.mxu0 %v3120
        %3974 = vmatpush1.bf16.msra.mxu0 %v3119
        %3975 = vmatprep.subr.bf16.mxu0 0
        %3976 = vmatpush1.bf16.msra.mxu0 0
        %3977 = vmatprep.subr.bf16.mxu0 0
        %3978 = vmatpush1.bf16.msra.mxu0 0
        %3979 = vmatprep.subr.bf16.mxu0 0
        %3980 = vmatpush1.bf16.msra.mxu0 0
        %3981 = vmatprep.subr.bf16.mxu0 0
        %3982 = vmatpush1.bf16.msra.mxu0 0
        %3983 = vmatprep.subr.bf16.mxu0 0
        %3984 = vmatpush1.bf16.msra.mxu0 0
        %3985 = vmatprep.subr.bf16.mxu0 0
        %3986 = vmatpush1.bf16.msra.mxu0 0
        %3987 = vmatprep.subr.bf16.mxu0 0
        %3988 = vmatpush1.bf16.msra.mxu0 0
        %3989 = vmatprep.subr.bf16.mxu0 0
        %3990 = vmatpush1.bf16.msra.mxu0 0
        %3991 = vmatprep.subr.bf16.mxu0 0
        %3992 = vmatpush1.bf16.msra.mxu0 0
        %3993 = vmatprep.subr.bf16.mxu0 0
        %3994 = vmatpush1.bf16.msra.mxu0 0
        %3995 = vmatprep.subr.bf16.mxu0 0
        %3996 = vmatpush1.bf16.msra.mxu0 0
        %3997 = vmatprep.subr.bf16.mxu0 0
        %3998 = vmatpush1.bf16.msra.mxu0 0
        %3999 = vmatprep.subr.bf16.mxu0 0
        %4000 = vmatpush1.bf16.msra.mxu0 0
        %4001 = vmatprep.subr.bf16.mxu0 0
        %4002 = vmatpush1.bf16.msra.mxu0 0
        %4003 = vmatprep.subr.bf16.mxu0 0
        %4004 = vmatpush1.bf16.msra.mxu0 0
        %4005 = vmatprep.mubr.bf16.mxu0 0
        %4006 = vmatmul.mubr.bf16.gmra.mrb[0].mxu0 %v3971
        %v4007 = vpop.f32.mrb[0].mxu0
        %v4008 = vadd.f32 0.0, %v4007
        %v4009 = vpop.f32.mrb[0].mxu0
        %v4010 = vadd.f32 0.0, %v4009
        %v4011 = vpop.f32.mrb[0].mxu0
        %v4012 = vpop.f32.mrb[0].mxu0
        %4013 = vdwg.mxu0
        %v4014 = vpack.c.bf16 %v4008, %v4008
        %v4015 = vpack.c.bf16 %v4010, %v4010
        %s4016 = scalar_lea.vmem [#allocation4], 768
        %v4017 = vld [vmem:[%s4016] sm:$0xff]
        %v4018 = vld [vmem:[%s4016 + $0x8] sm:$0xff]
        %v4019 = vld [vmem:[%s4016 + $0x10] sm:$0xff]
        %v4020 = vld [vmem:[%s4016 + $0x18] sm:$0xff]
        %v4021 = vld [vmem:[%s4016 + $0x20] sm:$0xff]
        %v4022 = vld [vmem:[%s4016 + $0x28] sm:$0xff]
        %v4023 = vld [vmem:[%s4016 + $0x30] sm:$0xff]
        %v4024 = vld [vmem:[%s4016 + $0x38] sm:$0xff]
        %v4025 = vld [vmem:[%s4016 + $0x40] sm:$0xff]
        %v4026 = vld [vmem:[%s4016 + $0x48] sm:$0xff]
        %v4027 = vld [vmem:[%s4016 + $0x50] sm:$0xff]
        %v4028 = vld [vmem:[%s4016 + $0x58] sm:$0xff]
        %v4029 = vld [vmem:[%s4016 + $0x60] sm:$0xff]
        %v4030 = vld [vmem:[%s4016 + $0x68] sm:$0xff]
        %v4031 = vld [vmem:[%s4016 + $0x70] sm:$0xff]
        %v4032 = vld [vmem:[%s4016 + $0x78] sm:$0xff]
        %v4033 = vld [vmem:[%s4016 + $0x80] sm:$0xff]
        %v4034 = vld [vmem:[%s4016 + $0x88] sm:$0xff]
        %v4035 = vld [vmem:[%s4016 + $0x90] sm:$0xff]
        %v4036 = vld [vmem:[%s4016 + $0x98] sm:$0xff]
        %v4037 = vld [vmem:[%s4016 + $0xa0] sm:$0xff]
        %v4038 = vld [vmem:[%s4016 + $0xa8] sm:$0xff]
        %v4039 = vld [vmem:[%s4016 + $0xb0] sm:$0xff]
        %v4040 = vld [vmem:[%s4016 + $0xb8] sm:$0xff]
        %v4041 = vld [vmem:[%s4016 + $0xc0] sm:$0xff]
        %v4042 = vld [vmem:[%s4016 + $0xc8] sm:$0xff]
        %v4043 = vld [vmem:[%s4016 + $0xd0] sm:$0xff]
        %v4044 = vld [vmem:[%s4016 + $0xd8] sm:$0xff]
        %v4045 = vld [vmem:[%s4016 + $0xe0] sm:$0xff]
        %v4046 = vld [vmem:[%s4016 + $0xe8] sm:$0xff]
        %v4047 = vld [vmem:[%s4016 + $0xf0] sm:$0xff]
        %v4048 = vld [vmem:[%s4016 + $0xf8] sm:$0xff]
        %v4081 = vunpack.c.l.b16 %v4017
        %v4082 = vunpack.c.h.b16 %v4017
        %v4083 = vunpack.c.l.b16 %v4018
        %v4084 = vunpack.c.h.b16 %v4018
        %v4085 = vunpack.c.l.b16 %v4019
        %v4086 = vunpack.c.h.b16 %v4019
        %v4087 = vunpack.c.l.b16 %v4020
        %v4088 = vunpack.c.h.b16 %v4020
        %v4089 = vunpack.c.l.b16 %v4021
        %v4090 = vunpack.c.h.b16 %v4021
        %v4091 = vunpack.c.l.b16 %v4022
        %v4092 = vunpack.c.h.b16 %v4022
        %v4093 = vunpack.c.l.b16 %v4023
        %v4094 = vunpack.c.h.b16 %v4023
        %v4095 = vunpack.c.l.b16 %v4024
        %v4096 = vunpack.c.h.b16 %v4024
        %v4097 = vunpack.c.l.b16 %v4025
        %v4098 = vunpack.c.h.b16 %v4025
        %v4099 = vunpack.c.l.b16 %v4026
        %v4100 = vunpack.c.h.b16 %v4026
        %v4101 = vunpack.c.l.b16 %v4027
        %v4102 = vunpack.c.h.b16 %v4027
        %v4103 = vunpack.c.l.b16 %v4028
        %v4104 = vunpack.c.h.b16 %v4028
        %v4105 = vunpack.c.l.b16 %v4029
        %v4106 = vunpack.c.h.b16 %v4029
        %v4107 = vunpack.c.l.b16 %v4030
        %v4108 = vunpack.c.h.b16 %v4030
        %v4109 = vunpack.c.l.b16 %v4031
        %v4110 = vunpack.c.h.b16 %v4031
        %v4111 = vunpack.c.l.b16 %v4032
        %v4112 = vunpack.c.h.b16 %v4032
        %v4113 = vunpack.c.l.b16 %v4033
        %v4114 = vunpack.c.h.b16 %v4033
        %v4115 = vunpack.c.l.b16 %v4034
        %v4116 = vunpack.c.h.b16 %v4034
        %v4117 = vunpack.c.l.b16 %v4035
        %v4118 = vunpack.c.h.b16 %v4035
        %v4119 = vunpack.c.l.b16 %v4036
        %v4120 = vunpack.c.h.b16 %v4036
        %v4121 = vunpack.c.l.b16 %v4037
        %v4122 = vunpack.c.h.b16 %v4037
        %v4123 = vunpack.c.l.b16 %v4038
        %v4124 = vunpack.c.h.b16 %v4038
        %v4125 = vunpack.c.l.b16 %v4039
        %v4126 = vunpack.c.h.b16 %v4039
        %v4127 = vunpack.c.l.b16 %v4040
        %v4128 = vunpack.c.h.b16 %v4040
        %v4129 = vunpack.c.l.b16 %v4041
        %v4130 = vunpack.c.h.b16 %v4041
        %v4131 = vunpack.c.l.b16 %v4042
        %v4132 = vunpack.c.h.b16 %v4042
        %v4133 = vunpack.c.l.b16 %v4043
        %v4134 = vunpack.c.h.b16 %v4043
        %v4135 = vunpack.c.l.b16 %v4044
        %v4136 = vunpack.c.h.b16 %v4044
        %v4137 = vunpack.c.l.b16 %v4045
        %v4138 = vunpack.c.h.b16 %v4045
        %v4139 = vunpack.c.l.b16 %v4046
        %v4140 = vunpack.c.h.b16 %v4046
        %v4141 = vunpack.c.l.b16 %v4047
        %v4142 = vunpack.c.h.b16 %v4047
        %v4143 = vunpack.c.l.b16 %v4048
        %v4144 = vunpack.c.h.b16 %v4048
        %v4145 = vpack.c.b16 %v4083, %v4081
        %v4146 = vpack.c.b16 %v4084, %v4082
        %v4147 = vpack.c.b16 %v4087, %v4085
        %v4148 = vpack.c.b16 %v4088, %v4086
        %v4149 = vpack.c.b16 %v4091, %v4089
        %v4150 = vpack.c.b16 %v4092, %v4090
        %v4151 = vpack.c.b16 %v4095, %v4093
        %v4152 = vpack.c.b16 %v4096, %v4094
        %v4153 = vpack.c.b16 %v4099, %v4097
        %v4154 = vpack.c.b16 %v4100, %v4098
        %v4155 = vpack.c.b16 %v4103, %v4101
        %v4156 = vpack.c.b16 %v4104, %v4102
        %v4157 = vpack.c.b16 %v4107, %v4105
        %v4158 = vpack.c.b16 %v4108, %v4106
        %v4159 = vpack.c.b16 %v4111, %v4109
        %v4160 = vpack.c.b16 %v4112, %v4110
        %v4161 = vpack.c.b16 %v4115, %v4113
        %v4162 = vpack.c.b16 %v4116, %v4114
        %v4163 = vpack.c.b16 %v4119, %v4117
        %v4164 = vpack.c.b16 %v4120, %v4118
        %v4165 = vpack.c.b16 %v4123, %v4121
        %v4166 = vpack.c.b16 %v4124, %v4122
        %v4167 = vpack.c.b16 %v4127, %v4125
        %v4168 = vpack.c.b16 %v4128, %v4126
        %v4169 = vpack.c.b16 %v4131, %v4129
        %v4170 = vpack.c.b16 %v4132, %v4130
        %v4171 = vpack.c.b16 %v4135, %v4133
        %v4172 = vpack.c.b16 %v4136, %v4134
        %v4173 = vpack.c.b16 %v4139, %v4137
        %v4174 = vpack.c.b16 %v4140, %v4138
        %v4175 = vpack.c.b16 %v4143, %v4141
        %v4176 = vpack.c.b16 %v4144, %v4142
        %4209 = vmatprep.subr.bf16.mxu0 %v4146
        %4210 = vmatpush1.bf16.msra.mxu0 %v4145
        %4211 = vmatprep.subr.bf16.mxu0 %v4148
        %4212 = vmatpush1.bf16.msra.mxu0 %v4147
        %4213 = vmatprep.subr.bf16.mxu0 %v4150
        %4214 = vmatpush1.bf16.msra.mxu0 %v4149
        %4215 = vmatprep.subr.bf16.mxu0 %v4152
        %4216 = vmatpush1.bf16.msra.mxu0 %v4151
        %4217 = vmatprep.subr.bf16.mxu0 %v4154
        %4218 = vmatpush1.bf16.msra.mxu0 %v4153
        %4219 = vmatprep.subr.bf16.mxu0 %v4156
        %4220 = vmatpush1.bf16.msra.mxu0 %v4155
        %4221 = vmatprep.subr.bf16.mxu0 %v4158
        %4222 = vmatpush1.bf16.msra.mxu0 %v4157
        %4223 = vmatprep.subr.bf16.mxu0 %v4160
        %4224 = vmatpush1.bf16.msra.mxu0 %v4159
        %4225 = vmatprep.subr.bf16.mxu0 %v4162
        %4226 = vmatpush1.bf16.msra.mxu0 %v4161
        %4227 = vmatprep.subr.bf16.mxu0 %v4164
        %4228 = vmatpush1.bf16.msra.mxu0 %v4163
        %4229 = vmatprep.subr.bf16.mxu0 %v4166
        %4230 = vmatpush1.bf16.msra.mxu0 %v4165
        %4231 = vmatprep.subr.bf16.mxu0 %v4168
        %4232 = vmatpush1.bf16.msra.mxu0 %v4167
        %4233 = vmatprep.subr.bf16.mxu0 %v4170
        %4234 = vmatpush1.bf16.msra.mxu0 %v4169
        %4235 = vmatprep.subr.bf16.mxu0 %v4172
        %4236 = vmatpush1.bf16.msra.mxu0 %v4171
        %4237 = vmatprep.subr.bf16.mxu0 %v4174
        %4238 = vmatpush1.bf16.msra.mxu0 %v4173
        %4239 = vmatprep.subr.bf16.mxu0 %v4176
        %4240 = vmatpush1.bf16.msra.mxu0 %v4175
        %4241 = vmatprep.mubr.bf16.mxu0 %v4015
        %4242 = vmatmul.mubr.bf16.gmra.mrb[0].mxu0 %v4014
        %v4243 = vpop.f32.mrb[0].mxu0
        %v4244 = vadd.f32 0.0, %v4243
        %v4245 = vpop.f32.mrb[0].mxu0
        %v4246 = vadd.f32 0.0, %v4245
        %v4247 = vpop.f32.mrb[0].mxu0
        %v4248 = vpop.f32.mrb[0].mxu0
        %4249 = vdwg.mxu0
        %v4250 = vadd.f32 %v3966, %v4244
        %v4251 = vadd.f32 %v3967, %v4246
        %v4252 = vld [vmem:[%s9] sm:$0x3]
        %v4254 = vlaneseq
        %v4255 = vshrl.u32 %v4254, 7
        %v4256 = vsub.s32 0, %v4255
        %v4257 = vrot.slane %v4252, %v4256
        %v4258 = vlaneseq
        %v4259 = vshrl.u32 %v4258, 7
        %v4260 = vsub.s32 1, %v4259
        %v4261 = vrot.slane %v4252, %v4260
        %v4264 = vadd.f32 %v4250, %v4257
        %v4265 = vadd.f32 %v4251, %v4261
        %vm4266 = vcmp.ge.f32.partialorder %v4264, 0.0
        %vm4267 = vcmp.ge.f32.partialorder %v4265, 0.0
        %v4268 = vmul.f32 %v4264, 0.2
        %v4269 = vmul.f32 %v4265, 0.2
        %v4270 = vsel %vm4266, %v4264, %v4268
        %v4271 = vsel %vm4267, %v4265, %v4269
        %v4272 = vpack.c.bf16 %v4270, %v4270
        %v4273 = vpack.c.bf16 %v4271, %v4271
        %v4274 = vld [vmem:[%s10] sm:$0x3]
        %vm4275 = vcmask 64512
        %v4277 = vsel %vm4275, %v4274, 0
        %vm4279 = vcmask 1043456
        %v4281 = vsel %vm4279, %v4272, 0
        %v4284 = vsel %vm4279, %v4273, 0
        %4286 = vmatprep.subr.bf16.mxu0 %v4284
        %4287 = vmatpush1.bf16.msra.mxu0 %v4281
        %4288 = vmatprep.subr.bf16.mxu0 0
        %4289 = vmatpush1.bf16.msra.mxu0 0
        %4290 = vmatprep.subr.bf16.mxu0 0
        %4291 = vmatpush1.bf16.msra.mxu0 0
        %4292 = vmatprep.subr.bf16.mxu0 0
        %4293 = vmatpush1.bf16.msra.mxu0 0
        %4294 = vmatprep.subr.bf16.mxu0 0
        %4295 = vmatpush1.bf16.msra.mxu0 0
        %4296 = vmatprep.subr.bf16.mxu0 0
        %4297 = vmatpush1.bf16.msra.mxu0 0
        %4298 = vmatprep.subr.bf16.mxu0 0
        %4299 = vmatpush1.bf16.msra.mxu0 0
        %4300 = vmatprep.subr.bf16.mxu0 0
        %4301 = vmatpush1.bf16.msra.mxu0 0
        %4302 = vmatprep.subr.bf16.mxu0 0
        %4303 = vmatpush1.bf16.msra.mxu0 0
        %4304 = vmatprep.subr.bf16.mxu0 0
        %4305 = vmatpush1.bf16.msra.mxu0 0
        %4306 = vmatprep.subr.bf16.mxu0 0
        %4307 = vmatpush1.bf16.msra.mxu0 0
        %4308 = vmatprep.subr.bf16.mxu0 0
        %4309 = vmatpush1.bf16.msra.mxu0 0
        %4310 = vmatprep.subr.bf16.mxu0 0
        %4311 = vmatpush1.bf16.msra.mxu0 0
        %4312 = vmatprep.subr.bf16.mxu0 0
        %4313 = vmatpush1.bf16.msra.mxu0 0
        %4314 = vmatprep.subr.bf16.mxu0 0
        %4315 = vmatpush1.bf16.msra.mxu0 0
        %4316 = vmatprep.subr.bf16.mxu0 0
        %4317 = vmatpush1.bf16.msra.mxu0 0
        %4318 = vmatprep.mubr.bf16.mxu0 0
        %4319 = vmatmul.mubr.bf16.gmra.mrb[0].mxu0 %v4277
        %v4320 = vpop.f32.mrb[0].mxu0
        %v4321 = vadd.f32 0.0, %v4320
        %v4322 = vpop.f32.mrb[0].mxu0
        %v4323 = vadd.f32 0.0, %v4322
        %v4324 = vpop.f32.mrb[0].mxu0
        %v4325 = vpop.f32.mrb[0].mxu0
        %4326 = vdwg.mxu0
        %v4327 = vpack.c.bf16 %v4321, %v4321
        %v4328 = vpack.c.bf16 %v4323, %v4323
        %v4329 = vld [vmem:[#allocation6] sm:$0xff]
        %v4330 = vld [vmem:[#allocation6 + $0x8] sm:$0xff]
        %v4331 = vld [vmem:[#allocation6 + $0x10] sm:$0xff]
        %v4332 = vld [vmem:[#allocation6 + $0x18] sm:$0xff]
        %v4333 = vld [vmem:[#allocation6 + $0x20] sm:$0xff]
        %v4334 = vld [vmem:[#allocation6 + $0x28] sm:$0xff]
        %v4335 = vld [vmem:[#allocation6 + $0x30] sm:$0xff]
        %v4336 = vld [vmem:[#allocation6 + $0x38] sm:$0xff]
        %v4337 = vld [vmem:[#allocation6 + $0x40] sm:$0xff]
        %v4338 = vld [vmem:[#allocation6 + $0x48] sm:$0xff]
        %v4339 = vld [vmem:[#allocation6 + $0x50] sm:$0xff]
        %v4340 = vld [vmem:[#allocation6 + $0x58] sm:$0xff]
        %v4341 = vld [vmem:[#allocation6 + $0x60] sm:$0xff]
        %v4342 = vld [vmem:[#allocation6 + $0x68] sm:$0xff]
        %v4343 = vld [vmem:[#allocation6 + $0x70] sm:$0xff]
        %v4344 = vld [vmem:[#allocation6 + $0x78] sm:$0xff]
        %v4345 = vld [vmem:[#allocation6 + $0x80] sm:$0xff]
        %v4346 = vld [vmem:[#allocation6 + $0x88] sm:$0xff]
        %v4347 = vld [vmem:[#allocation6 + $0x90] sm:$0xff]
        %v4348 = vld [vmem:[#allocation6 + $0x98] sm:$0xff]
        %v4349 = vld [vmem:[#allocation6 + $0xa0] sm:$0xff]
        %v4350 = vld [vmem:[#allocation6 + $0xa8] sm:$0xff]
        %v4351 = vld [vmem:[#allocation6 + $0xb0] sm:$0xff]
        %v4352 = vld [vmem:[#allocation6 + $0xb8] sm:$0xff]
        %v4353 = vld [vmem:[#allocation6 + $0xc0] sm:$0xff]
        %v4354 = vld [vmem:[#allocation6 + $0xc8] sm:$0xff]
        %v4355 = vld [vmem:[#allocation6 + $0xd0] sm:$0xff]
        %v4356 = vld [vmem:[#allocation6 + $0xd8] sm:$0xff]
        %v4357 = vld [vmem:[#allocation6 + $0xe0] sm:$0xff]
        %v4358 = vld [vmem:[#allocation6 + $0xe8] sm:$0xff]
        %v4359 = vld [vmem:[#allocation6 + $0xf0] sm:$0xff]
        %v4360 = vld [vmem:[#allocation6 + $0xf8] sm:$0xff]
        %s4361 = scalar_lea.vmem %s10, 2
        %v4362 = vld [vmem:[%s4361] sm:$0x3]
        %v4364 = vsel %vm4275, %v4362, 0
        %4366 = vmatprep.subr.bf16.mxu0 %v4284
        %4367 = vmatpush1.bf16.msra.mxu0 %v4281
        %4368 = vmatprep.subr.bf16.mxu0 0
        %4369 = vmatpush1.bf16.msra.mxu0 0
        %4370 = vmatprep.subr.bf16.mxu0 0
        %4371 = vmatpush1.bf16.msra.mxu0 0
        %4372 = vmatprep.subr.bf16.mxu0 0
        %4373 = vmatpush1.bf16.msra.mxu0 0
        %4374 = vmatprep.subr.bf16.mxu0 0
        %4375 = vmatpush1.bf16.msra.mxu0 0
        %4376 = vmatprep.subr.bf16.mxu0 0
        %4377 = vmatpush1.bf16.msra.mxu0 0
        %4378 = vmatprep.subr.bf16.mxu0 0
        %4379 = vmatpush1.bf16.msra.mxu0 0
        %4380 = vmatprep.subr.bf16.mxu0 0
        %4381 = vmatpush1.bf16.msra.mxu0 0
        %4382 = vmatprep.subr.bf16.mxu0 0
        %4383 = vmatpush1.bf16.msra.mxu0 0
        %4384 = vmatprep.subr.bf16.mxu0 0
        %4385 = vmatpush1.bf16.msra.mxu0 0
        %4386 = vmatprep.subr.bf16.mxu0 0
        %4387 = vmatpush1.bf16.msra.mxu0 0
        %4388 = vmatprep.subr.bf16.mxu0 0
        %4389 = vmatpush1.bf16.msra.mxu0 0
        %4390 = vmatprep.subr.bf16.mxu0 0
        %4391 = vmatpush1.bf16.msra.mxu0 0
        %4392 = vmatprep.subr.bf16.mxu0 0
        %4393 = vmatpush1.bf16.msra.mxu0 0
        %4394 = vmatprep.subr.bf16.mxu0 0
        %4395 = vmatpush1.bf16.msra.mxu0 0
        %4396 = vmatprep.subr.bf16.mxu0 0
        %4397 = vmatpush1.bf16.msra.mxu0 0
        %4398 = vmatprep.mubr.bf16.mxu0 0
        %4399 = vmatmul.mubr.bf16.gmra.mrb[0].mxu0 %v4364
        %v4400 = vpop.f32.mrb[0].mxu0
        %v4401 = vadd.f32 0.0, %v4400
        %v4402 = vpop.f32.mrb[0].mxu0
        %v4403 = vadd.f32 0.0, %v4402
        %v4404 = vpop.f32.mrb[0].mxu0
        %v4405 = vpop.f32.mrb[0].mxu0
        %4406 = vdwg.mxu0
        %v4407 = vpack.c.bf16 %v4401, %v4401
        %v4408 = vpack.c.bf16 %v4403, %v4403
        %s4409 = scalar_lea.vmem [#allocation6], 256
        %v4410 = vld [vmem:[%s4409] sm:$0xff]
        %v4411 = vld [vmem:[%s4409 + $0x8] sm:$0xff]
        %v4412 = vld [vmem:[%s4409 + $0x10] sm:$0xff]
        %v4413 = vld [vmem:[%s4409 + $0x18] sm:$0xff]
        %v4414 = vld [vmem:[%s4409 + $0x20] sm:$0xff]
        %v4415 = vld [vmem:[%s4409 + $0x28] sm:$0xff]
        %v4416 = vld [vmem:[%s4409 + $0x30] sm:$0xff]
        %v4417 = vld [vmem:[%s4409 + $0x38] sm:$0xff]
        %v4418 = vld [vmem:[%s4409 + $0x40] sm:$0xff]
        %v4419 = vld [vmem:[%s4409 + $0x48] sm:$0xff]
        %v4420 = vld [vmem:[%s4409 + $0x50] sm:$0xff]
        %v4421 = vld [vmem:[%s4409 + $0x58] sm:$0xff]
        %v4422 = vld [vmem:[%s4409 + $0x60] sm:$0xff]
        %v4423 = vld [vmem:[%s4409 + $0x68] sm:$0xff]
        %v4424 = vld [vmem:[%s4409 + $0x70] sm:$0xff]
        %v4425 = vld [vmem:[%s4409 + $0x78] sm:$0xff]
        %v4426 = vld [vmem:[%s4409 + $0x80] sm:$0xff]
        %v4427 = vld [vmem:[%s4409 + $0x88] sm:$0xff]
        %v4428 = vld [vmem:[%s4409 + $0x90] sm:$0xff]
        %v4429 = vld [vmem:[%s4409 + $0x98] sm:$0xff]
        %v4430 = vld [vmem:[%s4409 + $0xa0] sm:$0xff]
        %v4431 = vld [vmem:[%s4409 + $0xa8] sm:$0xff]
        %v4432 = vld [vmem:[%s4409 + $0xb0] sm:$0xff]
        %v4433 = vld [vmem:[%s4409 + $0xb8] sm:$0xff]
        %v4434 = vld [vmem:[%s4409 + $0xc0] sm:$0xff]
        %v4435 = vld [vmem:[%s4409 + $0xc8] sm:$0xff]
        %v4436 = vld [vmem:[%s4409 + $0xd0] sm:$0xff]
        %v4437 = vld [vmem:[%s4409 + $0xd8] sm:$0xff]
        %v4438 = vld [vmem:[%s4409 + $0xe0] sm:$0xff]
        %v4439 = vld [vmem:[%s4409 + $0xe8] sm:$0xff]
        %v4440 = vld [vmem:[%s4409 + $0xf0] sm:$0xff]
        %v4441 = vld [vmem:[%s4409 + $0xf8] sm:$0xff]
        %v4474 = vunpack.c.l.b16 %v4410
        %v4475 = vunpack.c.h.b16 %v4410
        %v4476 = vunpack.c.l.b16 %v4411
        %v4477 = vunpack.c.h.b16 %v4411
        %v4478 = vunpack.c.l.b16 %v4412
        %v4479 = vunpack.c.h.b16 %v4412
        %v4480 = vunpack.c.l.b16 %v4413
        %v4481 = vunpack.c.h.b16 %v4413
        %v4482 = vunpack.c.l.b16 %v4414
        %v4483 = vunpack.c.h.b16 %v4414
        %v4484 = vunpack.c.l.b16 %v4415
        %v4485 = vunpack.c.h.b16 %v4415
        %v4486 = vunpack.c.l.b16 %v4416
        %v4487 = vunpack.c.h.b16 %v4416
        %v4488 = vunpack.c.l.b16 %v4417
        %v4489 = vunpack.c.h.b16 %v4417
        %v4490 = vunpack.c.l.b16 %v4418
        %v4491 = vunpack.c.h.b16 %v4418
        %v4492 = vunpack.c.l.b16 %v4419
        %v4493 = vunpack.c.h.b16 %v4419
        %v4494 = vunpack.c.l.b16 %v4420
        %v4495 = vunpack.c.h.b16 %v4420
        %v4496 = vunpack.c.l.b16 %v4421
        %v4497 = vunpack.c.h.b16 %v4421
        %v4498 = vunpack.c.l.b16 %v4422
        %v4499 = vunpack.c.h.b16 %v4422
        %v4500 = vunpack.c.l.b16 %v4423
        %v4501 = vunpack.c.h.b16 %v4423
        %v4502 = vunpack.c.l.b16 %v4424
        %v4503 = vunpack.c.h.b16 %v4424
        %v4504 = vunpack.c.l.b16 %v4425
        %v4505 = vunpack.c.h.b16 %v4425
        %v4506 = vunpack.c.l.b16 %v4426
        %v4507 = vunpack.c.h.b16 %v4426
        %v4508 = vunpack.c.l.b16 %v4427
        %v4509 = vunpack.c.h.b16 %v4427
        %v4510 = vunpack.c.l.b16 %v4428
        %v4511 = vunpack.c.h.b16 %v4428
        %v4512 = vunpack.c.l.b16 %v4429
        %v4513 = vunpack.c.h.b16 %v4429
        %v4514 = vunpack.c.l.b16 %v4430
        %v4515 = vunpack.c.h.b16 %v4430
        %v4516 = vunpack.c.l.b16 %v4431
        %v4517 = vunpack.c.h.b16 %v4431
        %v4518 = vunpack.c.l.b16 %v4432
        %v4519 = vunpack.c.h.b16 %v4432
        %v4520 = vunpack.c.l.b16 %v4433
        %v4521 = vunpack.c.h.b16 %v4433
        %v4522 = vunpack.c.l.b16 %v4434
        %v4523 = vunpack.c.h.b16 %v4434
        %v4524 = vunpack.c.l.b16 %v4435
        %v4525 = vunpack.c.h.b16 %v4435
        %v4526 = vunpack.c.l.b16 %v4436
        %v4527 = vunpack.c.h.b16 %v4436
        %v4528 = vunpack.c.l.b16 %v4437
        %v4529 = vunpack.c.h.b16 %v4437
        %v4530 = vunpack.c.l.b16 %v4438
        %v4531 = vunpack.c.h.b16 %v4438
        %v4532 = vunpack.c.l.b16 %v4439
        %v4533 = vunpack.c.h.b16 %v4439
        %v4534 = vunpack.c.l.b16 %v4440
        %v4535 = vunpack.c.h.b16 %v4440
        %v4536 = vunpack.c.l.b16 %v4441
        %v4537 = vunpack.c.h.b16 %v4441
        %v4538 = vpack.c.b16 %v4476, %v4474
        %v4539 = vpack.c.b16 %v4477, %v4475
        %v4540 = vpack.c.b16 %v4480, %v4478
        %v4541 = vpack.c.b16 %v4481, %v4479
        %v4542 = vpack.c.b16 %v4484, %v4482
        %v4543 = vpack.c.b16 %v4485, %v4483
        %v4544 = vpack.c.b16 %v4488, %v4486
        %v4545 = vpack.c.b16 %v4489, %v4487
        %v4546 = vpack.c.b16 %v4492, %v4490
        %v4547 = vpack.c.b16 %v4493, %v4491
        %v4548 = vpack.c.b16 %v4496, %v4494
        %v4549 = vpack.c.b16 %v4497, %v4495
        %v4550 = vpack.c.b16 %v4500, %v4498
        %v4551 = vpack.c.b16 %v4501, %v4499
        %v4552 = vpack.c.b16 %v4504, %v4502
        %v4553 = vpack.c.b16 %v4505, %v4503
        %v4554 = vpack.c.b16 %v4508, %v4506
        %v4555 = vpack.c.b16 %v4509, %v4507
        %v4556 = vpack.c.b16 %v4512, %v4510
        %v4557 = vpack.c.b16 %v4513, %v4511
        %v4558 = vpack.c.b16 %v4516, %v4514
        %v4559 = vpack.c.b16 %v4517, %v4515
        %v4560 = vpack.c.b16 %v4520, %v4518
        %v4561 = vpack.c.b16 %v4521, %v4519
        %v4562 = vpack.c.b16 %v4524, %v4522
        %v4563 = vpack.c.b16 %v4525, %v4523
        %v4564 = vpack.c.b16 %v4528, %v4526
        %v4565 = vpack.c.b16 %v4529, %v4527
        %v4566 = vpack.c.b16 %v4532, %v4530
        %v4567 = vpack.c.b16 %v4533, %v4531
        %v4568 = vpack.c.b16 %v4536, %v4534
        %v4569 = vpack.c.b16 %v4537, %v4535
        %4602 = vmatprep.subr.bf16.mxu0 %v4539
        %4603 = vmatpush1.bf16.msra.mxu0 %v4538
        %4604 = vmatprep.subr.bf16.mxu0 %v4541
        %4605 = vmatpush1.bf16.msra.mxu0 %v4540
        %4606 = vmatprep.subr.bf16.mxu0 %v4543
        %4607 = vmatpush1.bf16.msra.mxu0 %v4542
        %4608 = vmatprep.subr.bf16.mxu0 %v4545
        %4609 = vmatpush1.bf16.msra.mxu0 %v4544
        %4610 = vmatprep.subr.bf16.mxu0 %v4547
        %4611 = vmatpush1.bf16.msra.mxu0 %v4546
        %4612 = vmatprep.subr.bf16.mxu0 %v4549
        %4613 = vmatpush1.bf16.msra.mxu0 %v4548
        %4614 = vmatprep.subr.bf16.mxu0 %v4551
        %4615 = vmatpush1.bf16.msra.mxu0 %v4550
        %4616 = vmatprep.subr.bf16.mxu0 %v4553
        %4617 = vmatpush1.bf16.msra.mxu0 %v4552
        %4618 = vmatprep.subr.bf16.mxu0 %v4555
        %4619 = vmatpush1.bf16.msra.mxu0 %v4554
        %4620 = vmatprep.subr.bf16.mxu0 %v4557
        %4621 = vmatpush1.bf16.msra.mxu0 %v4556
        %4622 = vmatprep.subr.bf16.mxu0 %v4559
        %4623 = vmatpush1.bf16.msra.mxu0 %v4558
        %4624 = vmatprep.subr.bf16.mxu0 %v4561
        %4625 = vmatpush1.bf16.msra.mxu0 %v4560
        %4626 = vmatprep.subr.bf16.mxu0 %v4563
        %4627 = vmatpush1.bf16.msra.mxu0 %v4562
        %4628 = vmatprep.subr.bf16.mxu0 %v4565
        %4629 = vmatpush1.bf16.msra.mxu0 %v4564
        %4630 = vmatprep.subr.bf16.mxu0 %v4567
        %4631 = vmatpush1.bf16.msra.mxu0 %v4566
        %4632 = vmatprep.subr.bf16.mxu0 %v4569
        %4633 = vmatpush1.bf16.msra.mxu0 %v4568
        %4634 = vmatprep.mubr.bf16.mxu0 %v4408
        %4635 = vmatmul.mubr.bf16.gmra.mrb[0].mxu0 %v4407
        %v4636 = vpop.f32.mrb[0].mxu0
        %v4637 = vadd.f32 0.0, %v4636
        %v4638 = vpop.f32.mrb[0].mxu0
        %v4639 = vadd.f32 0.0, %v4638
        %v4640 = vpop.f32.mrb[0].mxu0
        %v4641 = vpop.f32.mrb[0].mxu0
        %4642 = vdwg.mxu0
        %v4675 = vunpack.c.l.b16 %v4329
        %v4676 = vunpack.c.h.b16 %v4329
        %v4677 = vunpack.c.l.b16 %v4330
        %v4678 = vunpack.c.h.b16 %v4330
        %v4679 = vunpack.c.l.b16 %v4331
        %v4680 = vunpack.c.h.b16 %v4331
        %v4681 = vunpack.c.l.b16 %v4332
        %v4682 = vunpack.c.h.b16 %v4332
        %v4683 = vunpack.c.l.b16 %v4333
        %v4684 = vunpack.c.h.b16 %v4333
        %v4685 = vunpack.c.l.b16 %v4334
        %v4686 = vunpack.c.h.b16 %v4334
        %v4687 = vunpack.c.l.b16 %v4335
        %v4688 = vunpack.c.h.b16 %v4335
        %v4689 = vunpack.c.l.b16 %v4336
        %v4690 = vunpack.c.h.b16 %v4336
        %v4691 = vunpack.c.l.b16 %v4337
        %v4692 = vunpack.c.h.b16 %v4337
        %v4693 = vunpack.c.l.b16 %v4338
        %v4694 = vunpack.c.h.b16 %v4338
        %v4695 = vunpack.c.l.b16 %v4339
        %v4696 = vunpack.c.h.b16 %v4339
        %v4697 = vunpack.c.l.b16 %v4340
        %v4698 = vunpack.c.h.b16 %v4340
        %v4699 = vunpack.c.l.b16 %v4341
        %v4700 = vunpack.c.h.b16 %v4341
        %v4701 = vunpack.c.l.b16 %v4342
        %v4702 = vunpack.c.h.b16 %v4342
        %v4703 = vunpack.c.l.b16 %v4343
        %v4704 = vunpack.c.h.b16 %v4343
        %v4705 = vunpack.c.l.b16 %v4344
        %v4706 = vunpack.c.h.b16 %v4344
        %v4707 = vunpack.c.l.b16 %v4345
        %v4708 = vunpack.c.h.b16 %v4345
        %v4709 = vunpack.c.l.b16 %v4346
        %v4710 = vunpack.c.h.b16 %v4346
        %v4711 = vunpack.c.l.b16 %v4347
        %v4712 = vunpack.c.h.b16 %v4347
        %v4713 = vunpack.c.l.b16 %v4348
        %v4714 = vunpack.c.h.b16 %v4348
        %v4715 = vunpack.c.l.b16 %v4349
        %v4716 = vunpack.c.h.b16 %v4349
        %v4717 = vunpack.c.l.b16 %v4350
        %v4718 = vunpack.c.h.b16 %v4350
        %v4719 = vunpack.c.l.b16 %v4351
        %v4720 = vunpack.c.h.b16 %v4351
        %v4721 = vunpack.c.l.b16 %v4352
        %v4722 = vunpack.c.h.b16 %v4352
        %v4723 = vunpack.c.l.b16 %v4353
        %v4724 = vunpack.c.h.b16 %v4353
        %v4725 = vunpack.c.l.b16 %v4354
        %v4726 = vunpack.c.h.b16 %v4354
        %v4727 = vunpack.c.l.b16 %v4355
        %v4728 = vunpack.c.h.b16 %v4355
        %v4729 = vunpack.c.l.b16 %v4356
        %v4730 = vunpack.c.h.b16 %v4356
        %v4731 = vunpack.c.l.b16 %v4357
        %v4732 = vunpack.c.h.b16 %v4357
        %v4733 = vunpack.c.l.b16 %v4358
        %v4734 = vunpack.c.h.b16 %v4358
        %v4735 = vunpack.c.l.b16 %v4359
        %v4736 = vunpack.c.h.b16 %v4359
        %v4737 = vunpack.c.l.b16 %v4360
        %v4738 = vunpack.c.h.b16 %v4360
        %v4739 = vpack.c.b16 %v4677, %v4675
        %v4740 = vpack.c.b16 %v4678, %v4676
        %v4741 = vpack.c.b16 %v4681, %v4679
        %v4742 = vpack.c.b16 %v4682, %v4680
        %v4743 = vpack.c.b16 %v4685, %v4683
        %v4744 = vpack.c.b16 %v4686, %v4684
        %v4745 = vpack.c.b16 %v4689, %v4687
        %v4746 = vpack.c.b16 %v4690, %v4688
        %v4747 = vpack.c.b16 %v4693, %v4691
        %v4748 = vpack.c.b16 %v4694, %v4692
        %v4749 = vpack.c.b16 %v4697, %v4695
        %v4750 = vpack.c.b16 %v4698, %v4696
        %v4751 = vpack.c.b16 %v4701, %v4699
        %v4752 = vpack.c.b16 %v4702, %v4700
        %v4753 = vpack.c.b16 %v4705, %v4703
        %v4754 = vpack.c.b16 %v4706, %v4704
        %v4755 = vpack.c.b16 %v4709, %v4707
        %v4756 = vpack.c.b16 %v4710, %v4708
        %v4757 = vpack.c.b16 %v4713, %v4711
        %v4758 = vpack.c.b16 %v4714, %v4712
        %v4759 = vpack.c.b16 %v4717, %v4715
        %v4760 = vpack.c.b16 %v4718, %v4716
        %v4761 = vpack.c.b16 %v4721, %v4719
        %v4762 = vpack.c.b16 %v4722, %v4720
        %v4763 = vpack.c.b16 %v4725, %v4723
        %v4764 = vpack.c.b16 %v4726, %v4724
        %v4765 = vpack.c.b16 %v4729, %v4727
        %v4766 = vpack.c.b16 %v4730, %v4728
        %v4767 = vpack.c.b16 %v4733, %v4731
        %v4768 = vpack.c.b16 %v4734, %v4732
        %v4769 = vpack.c.b16 %v4737, %v4735
        %v4770 = vpack.c.b16 %v4738, %v4736
        %4803 = vmatprep.subr.bf16.mxu0 %v4740
        %4804 = vmatpush1.bf16.msra.mxu0 %v4739
        %4805 = vmatprep.subr.bf16.mxu0 %v4742
        %4806 = vmatpush1.bf16.msra.mxu0 %v4741
        %4807 = vmatprep.subr.bf16.mxu0 %v4744
        %4808 = vmatpush1.bf16.msra.mxu0 %v4743
        %4809 = vmatprep.subr.bf16.mxu0 %v4746
        %4810 = vmatpush1.bf16.msra.mxu0 %v4745
        %4811 = vmatprep.subr.bf16.mxu0 %v4748
        %4812 = vmatpush1.bf16.msra.mxu0 %v4747
        %4813 = vmatprep.subr.bf16.mxu0 %v4750
        %4814 = vmatpush1.bf16.msra.mxu0 %v4749
        %4815 = vmatprep.subr.bf16.mxu0 %v4752
        %4816 = vmatpush1.bf16.msra.mxu0 %v4751
        %4817 = vmatprep.subr.bf16.mxu0 %v4754
        %4818 = vmatpush1.bf16.msra.mxu0 %v4753
        %4819 = vmatprep.subr.bf16.mxu0 %v4756
        %4820 = vmatpush1.bf16.msra.mxu0 %v4755
        %4821 = vmatprep.subr.bf16.mxu0 %v4758
        %4822 = vmatpush1.bf16.msra.mxu0 %v4757
        %4823 = vmatprep.subr.bf16.mxu0 %v4760
        %4824 = vmatpush1.bf16.msra.mxu0 %v4759
        %4825 = vmatprep.subr.bf16.mxu0 %v4762
        %4826 = vmatpush1.bf16.msra.mxu0 %v4761
        %4827 = vmatprep.subr.bf16.mxu0 %v4764
        %4828 = vmatpush1.bf16.msra.mxu0 %v4763
        %4829 = vmatprep.subr.bf16.mxu0 %v4766
        %4830 = vmatpush1.bf16.msra.mxu0 %v4765
        %4831 = vmatprep.subr.bf16.mxu0 %v4768
        %4832 = vmatpush1.bf16.msra.mxu0 %v4767
        %4833 = vmatprep.subr.bf16.mxu0 %v4770
        %4834 = vmatpush1.bf16.msra.mxu0 %v4769
        %4835 = vmatprep.mubr.bf16.mxu0 %v4328
        %4836 = vmatmul.mubr.bf16.gmra.mrb[0].mxu0 %v4327
        %v4837 = vpop.f32.mrb[0].mxu0
        %v4838 = vadd.f32 %v4637, %v4837
        %v4839 = vpop.f32.mrb[0].mxu0
        %v4840 = vadd.f32 %v4639, %v4839
        %v4841 = vpop.f32.mrb[0].mxu0
        %v4842 = vpop.f32.mrb[0].mxu0
        %4843 = vdwg.mxu0
        %s4844 = scalar_lea.vmem %s10, 4
        %v4845 = vld [vmem:[%s4844] sm:$0x3]
        %v4847 = vsel %vm4275, %v4845, 0
        %4849 = vmatprep.subr.bf16.mxu0 %v4284
        %4850 = vmatpush1.bf16.msra.mxu0 %v4281
        %4851 = vmatprep.subr.bf16.mxu0 0
        %4852 = vmatpush1.bf16.msra.mxu0 0
        %4853 = vmatprep.subr.bf16.mxu0 0
        %4854 = vmatpush1.bf16.msra.mxu0 0
        %4855 = vmatprep.subr.bf16.mxu0 0
        %4856 = vmatpush1.bf16.msra.mxu0 0
        %4857 = vmatprep.subr.bf16.mxu0 0
        %4858 = vmatpush1.bf16.msra.mxu0 0
        %4859 = vmatprep.subr.bf16.mxu0 0
        %4860 = vmatpush1.bf16.msra.mxu0 0
        %4861 = vmatprep.subr.bf16.mxu0 0
        %4862 = vmatpush1.bf16.msra.mxu0 0
        %4863 = vmatprep.subr.bf16.mxu0 0
        %4864 = vmatpush1.bf16.msra.mxu0 0
        %4865 = vmatprep.subr.bf16.mxu0 0
        %4866 = vmatpush1.bf16.msra.mxu0 0
        %4867 = vmatprep.subr.bf16.mxu0 0
        %4868 = vmatpush1.bf16.msra.mxu0 0
        %4869 = vmatprep.subr.bf16.mxu0 0
        %4870 = vmatpush1.bf16.msra.mxu0 0
        %4871 = vmatprep.subr.bf16.mxu0 0
        %4872 = vmatpush1.bf16.msra.mxu0 0
        %4873 = vmatprep.subr.bf16.mxu0 0
        %4874 = vmatpush1.bf16.msra.mxu0 0
        %4875 = vmatprep.subr.bf16.mxu0 0
        %4876 = vmatpush1.bf16.msra.mxu0 0
        %4877 = vmatprep.subr.bf16.mxu0 0
        %4878 = vmatpush1.bf16.msra.mxu0 0
        %4879 = vmatprep.subr.bf16.mxu0 0
        %4880 = vmatpush1.bf16.msra.mxu0 0
        %4881 = vmatprep.mubr.bf16.mxu0 0
        %4882 = vmatmul.mubr.bf16.gmra.mrb[0].mxu0 %v4847
        %v4883 = vpop.f32.mrb[0].mxu0
        %v4884 = vadd.f32 0.0, %v4883
        %v4885 = vpop.f32.mrb[0].mxu0
        %v4886 = vadd.f32 0.0, %v4885
        %v4887 = vpop.f32.mrb[0].mxu0
        %v4888 = vpop.f32.mrb[0].mxu0
        %4889 = vdwg.mxu0
        %v4890 = vpack.c.bf16 %v4884, %v4884
        %v4891 = vpack.c.bf16 %v4886, %v4886
        %s4892 = scalar_lea.vmem [#allocation6], 512
        %v4893 = vld [vmem:[%s4892] sm:$0xff]
        %v4894 = vld [vmem:[%s4892 + $0x8] sm:$0xff]
        %v4895 = vld [vmem:[%s4892 + $0x10] sm:$0xff]
        %v4896 = vld [vmem:[%s4892 + $0x18] sm:$0xff]
        %v4897 = vld [vmem:[%s4892 + $0x20] sm:$0xff]
        %v4898 = vld [vmem:[%s4892 + $0x28] sm:$0xff]
        %v4899 = vld [vmem:[%s4892 + $0x30] sm:$0xff]
        %v4900 = vld [vmem:[%s4892 + $0x38] sm:$0xff]
        %v4901 = vld [vmem:[%s4892 + $0x40] sm:$0xff]
        %v4902 = vld [vmem:[%s4892 + $0x48] sm:$0xff]
        %v4903 = vld [vmem:[%s4892 + $0x50] sm:$0xff]
        %v4904 = vld [vmem:[%s4892 + $0x58] sm:$0xff]
        %v4905 = vld [vmem:[%s4892 + $0x60] sm:$0xff]
        %v4906 = vld [vmem:[%s4892 + $0x68] sm:$0xff]
        %v4907 = vld [vmem:[%s4892 + $0x70] sm:$0xff]
        %v4908 = vld [vmem:[%s4892 + $0x78] sm:$0xff]
        %v4909 = vld [vmem:[%s4892 + $0x80] sm:$0xff]
        %v4910 = vld [vmem:[%s4892 + $0x88] sm:$0xff]
        %v4911 = vld [vmem:[%s4892 + $0x90] sm:$0xff]
        %v4912 = vld [vmem:[%s4892 + $0x98] sm:$0xff]
        %v4913 = vld [vmem:[%s4892 + $0xa0] sm:$0xff]
        %v4914 = vld [vmem:[%s4892 + $0xa8] sm:$0xff]
        %v4915 = vld [vmem:[%s4892 + $0xb0] sm:$0xff]
        %v4916 = vld [vmem:[%s4892 + $0xb8] sm:$0xff]
        %v4917 = vld [vmem:[%s4892 + $0xc0] sm:$0xff]
        %v4918 = vld [vmem:[%s4892 + $0xc8] sm:$0xff]
        %v4919 = vld [vmem:[%s4892 + $0xd0] sm:$0xff]
        %v4920 = vld [vmem:[%s4892 + $0xd8] sm:$0xff]
        %v4921 = vld [vmem:[%s4892 + $0xe0] sm:$0xff]
        %v4922 = vld [vmem:[%s4892 + $0xe8] sm:$0xff]
        %v4923 = vld [vmem:[%s4892 + $0xf0] sm:$0xff]
        %v4924 = vld [vmem:[%s4892 + $0xf8] sm:$0xff]
        %v4957 = vunpack.c.l.b16 %v4893
        %v4958 = vunpack.c.h.b16 %v4893
        %v4959 = vunpack.c.l.b16 %v4894
        %v4960 = vunpack.c.h.b16 %v4894
        %v4961 = vunpack.c.l.b16 %v4895
        %v4962 = vunpack.c.h.b16 %v4895
        %v4963 = vunpack.c.l.b16 %v4896
        %v4964 = vunpack.c.h.b16 %v4896
        %v4965 = vunpack.c.l.b16 %v4897
        %v4966 = vunpack.c.h.b16 %v4897
        %v4967 = vunpack.c.l.b16 %v4898
        %v4968 = vunpack.c.h.b16 %v4898
        %v4969 = vunpack.c.l.b16 %v4899
        %v4970 = vunpack.c.h.b16 %v4899
        %v4971 = vunpack.c.l.b16 %v4900
        %v4972 = vunpack.c.h.b16 %v4900
        %v4973 = vunpack.c.l.b16 %v4901
        %v4974 = vunpack.c.h.b16 %v4901
        %v4975 = vunpack.c.l.b16 %v4902
        %v4976 = vunpack.c.h.b16 %v4902
        %v4977 = vunpack.c.l.b16 %v4903
        %v4978 = vunpack.c.h.b16 %v4903
        %v4979 = vunpack.c.l.b16 %v4904
        %v4980 = vunpack.c.h.b16 %v4904
        %v4981 = vunpack.c.l.b16 %v4905
        %v4982 = vunpack.c.h.b16 %v4905
        %v4983 = vunpack.c.l.b16 %v4906
        %v4984 = vunpack.c.h.b16 %v4906
        %v4985 = vunpack.c.l.b16 %v4907
        %v4986 = vunpack.c.h.b16 %v4907
        %v4987 = vunpack.c.l.b16 %v4908
        %v4988 = vunpack.c.h.b16 %v4908
        %v4989 = vunpack.c.l.b16 %v4909
        %v4990 = vunpack.c.h.b16 %v4909
        %v4991 = vunpack.c.l.b16 %v4910
        %v4992 = vunpack.c.h.b16 %v4910
        %v4993 = vunpack.c.l.b16 %v4911
        %v4994 = vunpack.c.h.b16 %v4911
        %v4995 = vunpack.c.l.b16 %v4912
        %v4996 = vunpack.c.h.b16 %v4912
        %v4997 = vunpack.c.l.b16 %v4913
        %v4998 = vunpack.c.h.b16 %v4913
        %v4999 = vunpack.c.l.b16 %v4914
        %v5000 = vunpack.c.h.b16 %v4914
        %v5001 = vunpack.c.l.b16 %v4915
        %v5002 = vunpack.c.h.b16 %v4915
        %v5003 = vunpack.c.l.b16 %v4916
        %v5004 = vunpack.c.h.b16 %v4916
        %v5005 = vunpack.c.l.b16 %v4917
        %v5006 = vunpack.c.h.b16 %v4917
        %v5007 = vunpack.c.l.b16 %v4918
        %v5008 = vunpack.c.h.b16 %v4918
        %v5009 = vunpack.c.l.b16 %v4919
        %v5010 = vunpack.c.h.b16 %v4919
        %v5011 = vunpack.c.l.b16 %v4920
        %v5012 = vunpack.c.h.b16 %v4920
        %v5013 = vunpack.c.l.b16 %v4921
        %v5014 = vunpack.c.h.b16 %v4921
        %v5015 = vunpack.c.l.b16 %v4922
        %v5016 = vunpack.c.h.b16 %v4922
        %v5017 = vunpack.c.l.b16 %v4923
        %v5018 = vunpack.c.h.b16 %v4923
        %v5019 = vunpack.c.l.b16 %v4924
        %v5020 = vunpack.c.h.b16 %v4924
        %v5021 = vpack.c.b16 %v4959, %v4957
        %v5022 = vpack.c.b16 %v4960, %v4958
        %v5023 = vpack.c.b16 %v4963, %v4961
        %v5024 = vpack.c.b16 %v4964, %v4962
        %v5025 = vpack.c.b16 %v4967, %v4965
        %v5026 = vpack.c.b16 %v4968, %v4966
        %v5027 = vpack.c.b16 %v4971, %v4969
        %v5028 = vpack.c.b16 %v4972, %v4970
        %v5029 = vpack.c.b16 %v4975, %v4973
        %v5030 = vpack.c.b16 %v4976, %v4974
        %v5031 = vpack.c.b16 %v4979, %v4977
        %v5032 = vpack.c.b16 %v4980, %v4978
        %v5033 = vpack.c.b16 %v4983, %v4981
        %v5034 = vpack.c.b16 %v4984, %v4982
        %v5035 = vpack.c.b16 %v4987, %v4985
        %v5036 = vpack.c.b16 %v4988, %v4986
        %v5037 = vpack.c.b16 %v4991, %v4989
        %v5038 = vpack.c.b16 %v4992, %v4990
        %v5039 = vpack.c.b16 %v4995, %v4993
        %v5040 = vpack.c.b16 %v4996, %v4994
        %v5041 = vpack.c.b16 %v4999, %v4997
        %v5042 = vpack.c.b16 %v5000, %v4998
        %v5043 = vpack.c.b16 %v5003, %v5001
        %v5044 = vpack.c.b16 %v5004, %v5002
        %v5045 = vpack.c.b16 %v5007, %v5005
        %v5046 = vpack.c.b16 %v5008, %v5006
        %v5047 = vpack.c.b16 %v5011, %v5009
        %v5048 = vpack.c.b16 %v5012, %v5010
        %v5049 = vpack.c.b16 %v5015, %v5013
        %v5050 = vpack.c.b16 %v5016, %v5014
        %v5051 = vpack.c.b16 %v5019, %v5017
        %v5052 = vpack.c.b16 %v5020, %v5018
        %5085 = vmatprep.subr.bf16.mxu0 %v5022
        %5086 = vmatpush1.bf16.msra.mxu0 %v5021
        %5087 = vmatprep.subr.bf16.mxu0 %v5024
        %5088 = vmatpush1.bf16.msra.mxu0 %v5023
        %5089 = vmatprep.subr.bf16.mxu0 %v5026
        %5090 = vmatpush1.bf16.msra.mxu0 %v5025
        %5091 = vmatprep.subr.bf16.mxu0 %v5028
        %5092 = vmatpush1.bf16.msra.mxu0 %v5027
        %5093 = vmatprep.subr.bf16.mxu0 %v5030
        %5094 = vmatpush1.bf16.msra.mxu0 %v5029
        %5095 = vmatprep.subr.bf16.mxu0 %v5032
        %5096 = vmatpush1.bf16.msra.mxu0 %v5031
        %5097 = vmatprep.subr.bf16.mxu0 %v5034
        %5098 = vmatpush1.bf16.msra.mxu0 %v5033
        %5099 = vmatprep.subr.bf16.mxu0 %v5036
        %5100 = vmatpush1.bf16.msra.mxu0 %v5035
        %5101 = vmatprep.subr.bf16.mxu0 %v5038
        %5102 = vmatpush1.bf16.msra.mxu0 %v5037
        %5103 = vmatprep.subr.bf16.mxu0 %v5040
        %5104 = vmatpush1.bf16.msra.mxu0 %v5039
        %5105 = vmatprep.subr.bf16.mxu0 %v5042
        %5106 = vmatpush1.bf16.msra.mxu0 %v5041
        %5107 = vmatprep.subr.bf16.mxu0 %v5044
        %5108 = vmatpush1.bf16.msra.mxu0 %v5043
        %5109 = vmatprep.subr.bf16.mxu0 %v5046
        %5110 = vmatpush1.bf16.msra.mxu0 %v5045
        %5111 = vmatprep.subr.bf16.mxu0 %v5048
        %5112 = vmatpush1.bf16.msra.mxu0 %v5047
        %5113 = vmatprep.subr.bf16.mxu0 %v5050
        %5114 = vmatpush1.bf16.msra.mxu0 %v5049
        %5115 = vmatprep.subr.bf16.mxu0 %v5052
        %5116 = vmatpush1.bf16.msra.mxu0 %v5051
        %5117 = vmatprep.mubr.bf16.mxu0 %v4891
        %5118 = vmatmul.mubr.bf16.gmra.mrb[0].mxu0 %v4890
        %v5119 = vpop.f32.mrb[0].mxu0
        %v5120 = vadd.f32 0.0, %v5119
        %v5121 = vpop.f32.mrb[0].mxu0
        %v5122 = vadd.f32 0.0, %v5121
        %v5123 = vpop.f32.mrb[0].mxu0
        %v5124 = vpop.f32.mrb[0].mxu0
        %5125 = vdwg.mxu0
        %v5126 = vadd.f32 %v4838, %v5120
        %v5127 = vadd.f32 %v4840, %v5122
        %s5128 = scalar_lea.vmem %s10, 6
        %v5129 = vld [vmem:[%s5128] sm:$0x3]
        %v5131 = vsel %vm4275, %v5129, 0
        %5133 = vmatprep.subr.bf16.mxu0 %v4284
        %5134 = vmatpush1.bf16.msra.mxu0 %v4281
        %5135 = vmatprep.subr.bf16.mxu0 0
        %5136 = vmatpush1.bf16.msra.mxu0 0
        %5137 = vmatprep.subr.bf16.mxu0 0
        %5138 = vmatpush1.bf16.msra.mxu0 0
        %5139 = vmatprep.subr.bf16.mxu0 0
        %5140 = vmatpush1.bf16.msra.mxu0 0
        %5141 = vmatprep.subr.bf16.mxu0 0
        %5142 = vmatpush1.bf16.msra.mxu0 0
        %5143 = vmatprep.subr.bf16.mxu0 0
        %5144 = vmatpush1.bf16.msra.mxu0 0
        %5145 = vmatprep.subr.bf16.mxu0 0
        %5146 = vmatpush1.bf16.msra.mxu0 0
        %5147 = vmatprep.subr.bf16.mxu0 0
        %5148 = vmatpush1.bf16.msra.mxu0 0
        %5149 = vmatprep.subr.bf16.mxu0 0
        %5150 = vmatpush1.bf16.msra.mxu0 0
        %5151 = vmatprep.subr.bf16.mxu0 0
        %5152 = vmatpush1.bf16.msra.mxu0 0
        %5153 = vmatprep.subr.bf16.mxu0 0
        %5154 = vmatpush1.bf16.msra.mxu0 0
        %5155 = vmatprep.subr.bf16.mxu0 0
        %5156 = vmatpush1.bf16.msra.mxu0 0
        %5157 = vmatprep.subr.bf16.mxu0 0
        %5158 = vmatpush1.bf16.msra.mxu0 0
        %5159 = vmatprep.subr.bf16.mxu0 0
        %5160 = vmatpush1.bf16.msra.mxu0 0
        %5161 = vmatprep.subr.bf16.mxu0 0
        %5162 = vmatpush1.bf16.msra.mxu0 0
        %5163 = vmatprep.subr.bf16.mxu0 0
        %5164 = vmatpush1.bf16.msra.mxu0 0
        %5165 = vmatprep.mubr.bf16.mxu0 0
        %5166 = vmatmul.mubr.bf16.gmra.mrb[0].mxu0 %v5131
        %v5167 = vpop.f32.mrb[0].mxu0
        %v5168 = vadd.f32 0.0, %v5167
        %v5169 = vpop.f32.mrb[0].mxu0
        %v5170 = vadd.f32 0.0, %v5169
        %v5171 = vpop.f32.mrb[0].mxu0
        %v5172 = vpop.f32.mrb[0].mxu0
        %5173 = vdwg.mxu0
        %v5174 = vpack.c.bf16 %v5168, %v5168
        %v5175 = vpack.c.bf16 %v5170, %v5170
        %s5176 = scalar_lea.vmem [#allocation6], 768
        %v5177 = vld [vmem:[%s5176] sm:$0xff]
        %v5178 = vld [vmem:[%s5176 + $0x8] sm:$0xff]
        %v5179 = vld [vmem:[%s5176 + $0x10] sm:$0xff]
        %v5180 = vld [vmem:[%s5176 + $0x18] sm:$0xff]
        %v5181 = vld [vmem:[%s5176 + $0x20] sm:$0xff]
        %v5182 = vld [vmem:[%s5176 + $0x28] sm:$0xff]
        %v5183 = vld [vmem:[%s5176 + $0x30] sm:$0xff]
        %v5184 = vld [vmem:[%s5176 + $0x38] sm:$0xff]
        %v5185 = vld [vmem:[%s5176 + $0x40] sm:$0xff]
        %v5186 = vld [vmem:[%s5176 + $0x48] sm:$0xff]
        %v5187 = vld [vmem:[%s5176 + $0x50] sm:$0xff]
        %v5188 = vld [vmem:[%s5176 + $0x58] sm:$0xff]
        %v5189 = vld [vmem:[%s5176 + $0x60] sm:$0xff]
        %v5190 = vld [vmem:[%s5176 + $0x68] sm:$0xff]
        %v5191 = vld [vmem:[%s5176 + $0x70] sm:$0xff]
        %v5192 = vld [vmem:[%s5176 + $0x78] sm:$0xff]
        %v5193 = vld [vmem:[%s5176 + $0x80] sm:$0xff]
        %v5194 = vld [vmem:[%s5176 + $0x88] sm:$0xff]
        %v5195 = vld [vmem:[%s5176 + $0x90] sm:$0xff]
        %v5196 = vld [vmem:[%s5176 + $0x98] sm:$0xff]
        %v5197 = vld [vmem:[%s5176 + $0xa0] sm:$0xff]
        %v5198 = vld [vmem:[%s5176 + $0xa8] sm:$0xff]
        %v5199 = vld [vmem:[%s5176 + $0xb0] sm:$0xff]
        %v5200 = vld [vmem:[%s5176 + $0xb8] sm:$0xff]
        %v5201 = vld [vmem:[%s5176 + $0xc0] sm:$0xff]
        %v5202 = vld [vmem:[%s5176 + $0xc8] sm:$0xff]
        %v5203 = vld [vmem:[%s5176 + $0xd0] sm:$0xff]
        %v5204 = vld [vmem:[%s5176 + $0xd8] sm:$0xff]
        %v5205 = vld [vmem:[%s5176 + $0xe0] sm:$0xff]
        %v5206 = vld [vmem:[%s5176 + $0xe8] sm:$0xff]
        %v5207 = vld [vmem:[%s5176 + $0xf0] sm:$0xff]
        %v5208 = vld [vmem:[%s5176 + $0xf8] sm:$0xff]
        %v5241 = vunpack.c.l.b16 %v5177
        %v5242 = vunpack.c.h.b16 %v5177
        %v5243 = vunpack.c.l.b16 %v5178
        %v5244 = vunpack.c.h.b16 %v5178
        %v5245 = vunpack.c.l.b16 %v5179
        %v5246 = vunpack.c.h.b16 %v5179
        %v5247 = vunpack.c.l.b16 %v5180
        %v5248 = vunpack.c.h.b16 %v5180
        %v5249 = vunpack.c.l.b16 %v5181
        %v5250 = vunpack.c.h.b16 %v5181
        %v5251 = vunpack.c.l.b16 %v5182
        %v5252 = vunpack.c.h.b16 %v5182
        %v5253 = vunpack.c.l.b16 %v5183
        %v5254 = vunpack.c.h.b16 %v5183
        %v5255 = vunpack.c.l.b16 %v5184
        %v5256 = vunpack.c.h.b16 %v5184
        %v5257 = vunpack.c.l.b16 %v5185
        %v5258 = vunpack.c.h.b16 %v5185
        %v5259 = vunpack.c.l.b16 %v5186
        %v5260 = vunpack.c.h.b16 %v5186
        %v5261 = vunpack.c.l.b16 %v5187
        %v5262 = vunpack.c.h.b16 %v5187
        %v5263 = vunpack.c.l.b16 %v5188
        %v5264 = vunpack.c.h.b16 %v5188
        %v5265 = vunpack.c.l.b16 %v5189
        %v5266 = vunpack.c.h.b16 %v5189
        %v5267 = vunpack.c.l.b16 %v5190
        %v5268 = vunpack.c.h.b16 %v5190
        %v5269 = vunpack.c.l.b16 %v5191
        %v5270 = vunpack.c.h.b16 %v5191
        %v5271 = vunpack.c.l.b16 %v5192
        %v5272 = vunpack.c.h.b16 %v5192
        %v5273 = vunpack.c.l.b16 %v5193
        %v5274 = vunpack.c.h.b16 %v5193
        %v5275 = vunpack.c.l.b16 %v5194
        %v5276 = vunpack.c.h.b16 %v5194
        %v5277 = vunpack.c.l.b16 %v5195
        %v5278 = vunpack.c.h.b16 %v5195
        %v5279 = vunpack.c.l.b16 %v5196
        %v5280 = vunpack.c.h.b16 %v5196
        %v5281 = vunpack.c.l.b16 %v5197
        %v5282 = vunpack.c.h.b16 %v5197
        %v5283 = vunpack.c.l.b16 %v5198
        %v5284 = vunpack.c.h.b16 %v5198
        %v5285 = vunpack.c.l.b16 %v5199
        %v5286 = vunpack.c.h.b16 %v5199
        %v5287 = vunpack.c.l.b16 %v5200
        %v5288 = vunpack.c.h.b16 %v5200
        %v5289 = vunpack.c.l.b16 %v5201
        %v5290 = vunpack.c.h.b16 %v5201
        %v5291 = vunpack.c.l.b16 %v5202
        %v5292 = vunpack.c.h.b16 %v5202
        %v5293 = vunpack.c.l.b16 %v5203
        %v5294 = vunpack.c.h.b16 %v5203
        %v5295 = vunpack.c.l.b16 %v5204
        %v5296 = vunpack.c.h.b16 %v5204
        %v5297 = vunpack.c.l.b16 %v5205
        %v5298 = vunpack.c.h.b16 %v5205
        %v5299 = vunpack.c.l.b16 %v5206
        %v5300 = vunpack.c.h.b16 %v5206
        %v5301 = vunpack.c.l.b16 %v5207
        %v5302 = vunpack.c.h.b16 %v5207
        %v5303 = vunpack.c.l.b16 %v5208
        %v5304 = vunpack.c.h.b16 %v5208
        %v5305 = vpack.c.b16 %v5243, %v5241
        %v5306 = vpack.c.b16 %v5244, %v5242
        %v5307 = vpack.c.b16 %v5247, %v5245
        %v5308 = vpack.c.b16 %v5248, %v5246
        %v5309 = vpack.c.b16 %v5251, %v5249
        %v5310 = vpack.c.b16 %v5252, %v5250
        %v5311 = vpack.c.b16 %v5255, %v5253
        %v5312 = vpack.c.b16 %v5256, %v5254
        %v5313 = vpack.c.b16 %v5259, %v5257
        %v5314 = vpack.c.b16 %v5260, %v5258
        %v5315 = vpack.c.b16 %v5263, %v5261
        %v5316 = vpack.c.b16 %v5264, %v5262
        %v5317 = vpack.c.b16 %v5267, %v5265
        %v5318 = vpack.c.b16 %v5268, %v5266
        %v5319 = vpack.c.b16 %v5271, %v5269
        %v5320 = vpack.c.b16 %v5272, %v5270
        %v5321 = vpack.c.b16 %v5275, %v5273
        %v5322 = vpack.c.b16 %v5276, %v5274
        %v5323 = vpack.c.b16 %v5279, %v5277
        %v5324 = vpack.c.b16 %v5280, %v5278
        %v5325 = vpack.c.b16 %v5283, %v5281
        %v5326 = vpack.c.b16 %v5284, %v5282
        %v5327 = vpack.c.b16 %v5287, %v5285
        %v5328 = vpack.c.b16 %v5288, %v5286
        %v5329 = vpack.c.b16 %v5291, %v5289
        %v5330 = vpack.c.b16 %v5292, %v5290
        %v5331 = vpack.c.b16 %v5295, %v5293
        %v5332 = vpack.c.b16 %v5296, %v5294
        %v5333 = vpack.c.b16 %v5299, %v5297
        %v5334 = vpack.c.b16 %v5300, %v5298
        %v5335 = vpack.c.b16 %v5303, %v5301
        %v5336 = vpack.c.b16 %v5304, %v5302
        %5369 = vmatprep.subr.bf16.mxu0 %v5306
        %5370 = vmatpush1.bf16.msra.mxu0 %v5305
        %5371 = vmatprep.subr.bf16.mxu0 %v5308
        %5372 = vmatpush1.bf16.msra.mxu0 %v5307
        %5373 = vmatprep.subr.bf16.mxu0 %v5310
        %5374 = vmatpush1.bf16.msra.mxu0 %v5309
        %5375 = vmatprep.subr.bf16.mxu0 %v5312
        %5376 = vmatpush1.bf16.msra.mxu0 %v5311
        %5377 = vmatprep.subr.bf16.mxu0 %v5314
        %5378 = vmatpush1.bf16.msra.mxu0 %v5313
        %5379 = vmatprep.subr.bf16.mxu0 %v5316
        %5380 = vmatpush1.bf16.msra.mxu0 %v5315
        %5381 = vmatprep.subr.bf16.mxu0 %v5318
        %5382 = vmatpush1.bf16.msra.mxu0 %v5317
        %5383 = vmatprep.subr.bf16.mxu0 %v5320
        %5384 = vmatpush1.bf16.msra.mxu0 %v5319
        %5385 = vmatprep.subr.bf16.mxu0 %v5322
        %5386 = vmatpush1.bf16.msra.mxu0 %v5321
        %5387 = vmatprep.subr.bf16.mxu0 %v5324
        %5388 = vmatpush1.bf16.msra.mxu0 %v5323
        %5389 = vmatprep.subr.bf16.mxu0 %v5326
        %5390 = vmatpush1.bf16.msra.mxu0 %v5325
        %5391 = vmatprep.subr.bf16.mxu0 %v5328
        %5392 = vmatpush1.bf16.msra.mxu0 %v5327
        %5393 = vmatprep.subr.bf16.mxu0 %v5330
        %5394 = vmatpush1.bf16.msra.mxu0 %v5329
        %5395 = vmatprep.subr.bf16.mxu0 %v5332
        %5396 = vmatpush1.bf16.msra.mxu0 %v5331
        %5397 = vmatprep.subr.bf16.mxu0 %v5334
        %5398 = vmatpush1.bf16.msra.mxu0 %v5333
        %5399 = vmatprep.subr.bf16.mxu0 %v5336
        %5400 = vmatpush1.bf16.msra.mxu0 %v5335
        %5401 = vmatprep.mubr.bf16.mxu0 %v5175
        %5402 = vmatmul.mubr.bf16.gmra.mrb[0].mxu0 %v5174
        %v5403 = vpop.f32.mrb[0].mxu0
        %v5404 = vadd.f32 0.0, %v5403
        %v5405 = vpop.f32.mrb[0].mxu0
        %v5406 = vadd.f32 0.0, %v5405
        %v5407 = vpop.f32.mrb[0].mxu0
        %v5408 = vpop.f32.mrb[0].mxu0
        %5409 = vdwg.mxu0
        %v5410 = vadd.f32 %v5126, %v5404
        %v5411 = vadd.f32 %v5127, %v5406
        %v5412 = vld [vmem:[%s12] sm:$0x3]
        %v5414 = vlaneseq
        %v5415 = vshrl.u32 %v5414, 7
        %v5416 = vsub.s32 0, %v5415
        %v5417 = vrot.slane %v5412, %v5416
        %v5418 = vlaneseq
        %v5419 = vshrl.u32 %v5418, 7
        %v5420 = vsub.s32 1, %v5419
        %v5421 = vrot.slane %v5412, %v5420
        %v5424 = vadd.f32 %v5410, %v5417
        %v5425 = vadd.f32 %v5411, %v5421
        %vm5426 = vcmp.ge.f32.partialorder %v5424, 0.0
        %vm5427 = vcmp.ge.f32.partialorder %v5425, 0.0
        %v5428 = vmul.f32 %v5424, 0.2
        %v5429 = vmul.f32 %v5425, 0.2
        %v5430 = vsel %vm5426, %v5424, %v5428
        %v5431 = vsel %vm5427, %v5425, %v5429
        %v5432 = vld [vmem:[%s13] sm:$0xff]
        %v5434 = vcombine.high %v5432, %v5432
        %v5436 = vmul.f32 %v5430, %v5432
        %v5437 = vmul.f32 %v5431, %v5434
        %v5438 = vsel %vm4279, %v5436, 0.0
        %v5439 = vsel %vm4279, %v5437, 0.0
        %v5440 = vadd.f32 %v5438, %v5439
        %5441 = vadd.xlane.f32.xlu0 %v5440
        %v5442 = vpop.xlane.xlu0 %5441
        %v5443 = vsel %vm4279, %v5442, 0.0
        %v5444 = vrot.slane %v5443, 4
        %v5445 = vadd.f32 %v5443, %v5444
        %v5446 = vrot.slane %v5445, 2
        %v5447 = vadd.f32 %v5445, %v5446
        %v5448 = vrot.slane %v5447, 1
        %v5449 = vadd.f32 %v5447, %v5448
        %v5450 = vsub.f32 0.0, %v5449
        %v5451 = vmul.f32 %v5450, 1.442695
        %v5452 = vpow.pop %v5451
        %v5453 = vadd.f32 %v5452, 1.0
        %v5454 = vrcp.pop %v5453
        %v5455 = vmul.f32 1.0, %v5454
        %vm5456 = vcmask 0
        %5457 = vst.msk [vmem:[%s507] sm:$0x1] %vm5456, %v5455
        %p5458 = scmp.lt.s32.totalorder %s27, 1
        %s5459 = scalar_select %p5458, %s27, 1
        %s5460 = scalar_lea.vmem %s14, %s5459
        // Predicated region
        $region89: #{discriminator_forward.1} parent=75 // pred_check
          %p5461 = pneg %p344
        $region90: #{discriminator_forward.1} parent=75 // pred_check_branch
          %5463 = sbr.rel (%p5461) target = $region92
        $region91: #{discriminator_forward.1} parent=75 // pred_region
          _
        $region92: #{discriminator_forward.1} parent=75 // pred_fallthru
          _
      $region76: #{discriminator_forward.1} parent=5 // pred_fallthru
        _
      %p5464 = scmp.le.s32.totalorder 2, %s22
      // Predicated region
      $region93: #{discriminator_forward.1} parent=5 // pred_check
        %p5465 = pneg %p5464
      $region94: #{discriminator_forward.1} parent=5 // pred_check_branch
        %5467 = sbr.rel (%p5465) target = $region96
      $region95: #{discriminator_forward.1} parent=5 // pred_region
        %s5468 = ssub.s32 %s22, 2
        // Predicated region
        $region97: #{discriminator_forward.1} parent=95 // pred_check
          %p5469 = pneg %p350
        $region98: #{discriminator_forward.1} parent=95 // pred_check_branch
          %5471 = sbr.rel (%p5469) target = $region100
        $region99: #{discriminator_forward.1} parent=95 // pred_region
          %p5472 = scmp.lt.s32.totalorder %s28, 1
          %s5473 = scalar_select %p5472, %s28, 1
          %s5474 = scalar_lea.vmem %s14, %s5473
        $region100: #{discriminator_forward.1} parent=95 // pred_fallthru
          _
      $region96: #{discriminator_forward.1} parent=5 // pred_fallthru
        _
    $region6: #{discriminator_forward.1} parent=1 // loop_footer
      %s26 = sadd.s32 1, %s22
    $region7: #{discriminator_forward.1} parent=1 // loop_footer_branch
      %21 = sbr.rel target = $region3
    $region8: #{discriminator_forward.1} parent=1 // loop_exit
      _
    %5475 = vsyncpa [#allocation3], 1
    %s5476 = scalar_lea.sflag [#allocation3], 1
    %5477 = vsyncpa %s5476, 1
    %5478 = vsyncpa [#allocation5], 1

</llo_original>
